<compile_context>
chip_gen: v7x
topology: tpu7x:2x2x1
jax: 0.10.0
libtpu: 0.0.40
codegen_flags: <defaults>
</compile_context>

<pallas_src>
import functools
import jax
import jax.numpy as jnp
from jax.experimental import pallas as pl
from jax.experimental.pallas import tpu as pltpu


# ------------------------------------------------------------------ helpers
def _gelu(x):
    # tanh-approx GELU (tanh runs in the EUP slot and overlaps VPU/MXU work).
    return jax.nn.gelu(x, approximate=True)


# ---------------------------------------------------------------------------
# Fused linear kernel:  out = [residual +] [gelu]( LN?(x) @ W + b )
# ---------------------------------------------------------------------------
def _make_fused_linear_kernel(has_ln, activation, has_res, eps):
    def kernel(*refs):
        i = 0
        x = refs[i][...].astype(jnp.float32); i += 1
        if has_ln:
            g = refs[i][...]; i += 1
            be = refs[i][...]; i += 1
            mu = jnp.mean(x, axis=-1, keepdims=True)
            xc = x - mu
            var = jnp.mean(xc * xc, axis=-1, keepdims=True)
            x = xc * jax.lax.rsqrt(var + eps) * g + be
        w = refs[i][...]; i += 1
        bias = refs[i][...]; i += 1
        res = None
        if has_res:
            res = refs[i][...]; i += 1
        o_ref = refs[i]
        # bf16 operands -> MXU fast path, f32 accumulation.
        acc = jnp.dot(x.astype(jnp.bfloat16), w.astype(jnp.bfloat16),
                      preferred_element_type=jnp.float32)
        acc = acc + bias
        if activation == "gelu":
            acc = _gelu(acc)
        if has_res:
            acc = acc + res.astype(jnp.float32)
        o_ref[...] = acc.astype(o_ref.dtype)
    return kernel


# Conservative single-block budget *including* in-kernel temporaries, safely
# below v5e's 16 MiB default scoped VMEM (the explicit limit is set anyway).
_SINGLE_BLOCK_VMEM_BUDGET = 8 * 1024 * 1024
_VMEM_LIMIT_BYTES = 32 * 1024 * 1024


def pallas_fused_linear(x, w, b=None, *, ln=None, activation="none",
                        residual=None, eps=1e-5, out_dtype=jnp.float32,
                        block_m=128):
    """x:(M,K) @ w:(K,N) + b with optional fused LayerNorm pre-op (ln=(g,beta)),
    fused GELU and fused residual add.  Full-dim single block when it fits
    VMEM; unpadded row-tiled fallback for large M."""
    M, K = x.shape
    K2, N = w.shape
    assert K == K2
    has_ln = ln is not None
    has_res = residual is not None
    bias = (jnp.zeros((N,), jnp.float32) if b is None
            else b.astype(jnp.float32)).reshape(1, N)
    kernel = _make_fused_linear_kernel(has_ln, activation, has_res, eps)
    out_bytes = jnp.dtype(out_dtype).itemsize

    # footprint estimate incl. temporaries (f32 LN copy, bf16 matmul copies,
    # f32 accumulator), not just the resident operands.
    est = (M * K * (x.dtype.itemsize + 4 + 2)
           + K * N * w.dtype.itemsize
           + M * N * (4 + out_bytes)
           + 8 * (K + N))
    if has_res:
        est += M * N * (residual.dtype.itemsize + 4)

    ln_ins = []
    if has_ln:
        ln_ins = [ln[0].reshape(1, K).astype(jnp.float32),
                  ln[1].reshape(1, K).astype(jnp.float32)]

    if est <= _SINGLE_BLOCK_VMEM_BUDGET:
        # Single full-dim block: no padding, no grid, one DMA per operand.
        inputs = [x] + ln_ins + [w, bias]
        if has_res:
            inputs.append(residual)
        return pl.pallas_call(
            kernel,
            out_shape=jax.ShapeDtypeStruct((M, N), out_dtype),
            in_specs=[pl.BlockSpec(memory_space=pltpu.MemorySpace.VMEM)] * len(inputs),
            out_specs=pl.BlockSpec(memory_space=pltpu.MemorySpace.VMEM),
            compiler_params=pltpu.CompilerParams(
                vmem_limit_bytes=_VMEM_LIMIT_BYTES),
        )(*inputs)

    # Row-tiled fallback for large M.  No host-side pad / slice: cdiv grid and
    # a ragged tail block.  Every op in the kernel is row-wise, so undefined
    # tail rows never leak into valid rows and their writes are dropped.
    grid_m = pl.cdiv(M, block_m)
    inputs = [x]
    in_specs = [pl.BlockSpec((block_m, K), lambda i: (i, 0))]
    if has_ln:
        inputs += ln_ins
        in_specs += [pl.BlockSpec((1, K), lambda i: (0, 0))] * 2
    inputs += [w, bias]
    in_specs += [pl.BlockSpec((K, N), lambda i: (0, 0)),
                 pl.BlockSpec((1, N), lambda i: (0, 0))]
    if has_res:
        inputs.append(residual)
        in_specs.append(pl.BlockSpec((block_m, N), lambda i: (i, 0)))
    return pl.pallas_call(
        kernel,
        out_shape=jax.ShapeDtypeStruct((M, N), out_dtype),
        grid=(grid_m,),
        in_specs=in_specs,
        out_specs=pl.BlockSpec((block_m, N), lambda i: (i, 0)),
        compiler_params=pltpu.CompilerParams(
            dimension_semantics=("parallel",),
            vmem_limit_bytes=_VMEM_LIMIT_BYTES),
    )(*inputs)


# ---------------------------------------------------------------------------
# Fused attention block:  x + Wo(softmax(QK^T * scale) V) with LN(x) inside.
# One pallas_call per layer, grid over batch; ONE lane-dense QKV GEMM and ONE
# lane-dense output-projection GEMM, per-head math only for the softmax part.
# ---------------------------------------------------------------------------
def _attn_block_kernel(x_ref, g_ref, b_ref, wqkv_ref, wo_ref, bo_ref, o_ref,
                       *, heads, dim_head, scale, eps):
    x = x_ref[0].astype(jnp.float32)                          # (seq, dim)
    mu = jnp.mean(x, axis=-1, keepdims=True)
    xc = x - mu
    var = jnp.mean(xc * xc, axis=-1, keepdims=True)
    y = (xc * jax.lax.rsqrt(var + eps) * g_ref[...] + b_ref[...]).astype(jnp.bfloat16)

    # all heads' Q,K,V in one GEMM -> (seq, 3*heads*dim_head)
    qkv = jnp.dot(y, wqkv_ref[...], preferred_element_type=jnp.float32)
    hd = heads * dim_head
    ov_heads = []
    for h in range(heads):                                    # heads small: static unroll
        q = qkv[:, h * dim_head:(h + 1) * dim_head]
        k = qkv[:, hd + h * dim_head:hd + (h + 1) * dim_head]
        v = qkv[:, 2 * hd + h * dim_head:2 * hd + (h + 1) * dim_head]
        # q @ k^T without materializing a transpose (contract on last dims).
        s = jax.lax.dot_general(q.astype(jnp.bfloat16), k.astype(jnp.bfloat16),
                                (((1,), (1,)), ((), ())),
                                preferred_element_type=jnp.float32) * scale
        s = s - jnp.max(s, axis=-1, keepdims=True)
        p = jnp.exp(s)
        p = p * pl.reciprocal(jnp.sum(p, axis=-1, keepdims=True), approx=True)
        ov_heads.append(jnp.dot(p.astype(jnp.bfloat16), v.astype(jnp.bfloat16),
                                preferred_element_type=jnp.float32))
    ov = jnp.concatenate(ov_heads, axis=-1).astype(jnp.bfloat16)   # (seq, heads*dh)
    out = jnp.dot(ov, wo_ref[...], preferred_element_type=jnp.float32)
    o_ref[0] = (x + out + bo_ref[...]).astype(o_ref.dtype)


def pallas_attention_block(x, gamma, beta, wqkv, wo, bo, *, heads, dim_head,
                           eps=1e-5):
    B, seq, dim = x.shape
    kernel = functools.partial(_attn_block_kernel, heads=heads,
                               dim_head=dim_head, scale=dim_head ** -0.5,
                               eps=eps)
    return pl.pallas_call(
        kernel,
        out_shape=jax.ShapeDtypeStruct((B, seq, dim), x.dtype),
        grid=(B,),
        in_specs=[
            pl.BlockSpec((1, seq, dim), lambda b: (b, 0, 0)),
            pl.BlockSpec((1, dim), lambda b: (0, 0)),
            pl.BlockSpec((1, dim), lambda b: (0, 0)),
            pl.BlockSpec((dim, 3 * heads * dim_head), lambda b: (0, 0)),
            pl.BlockSpec((heads * dim_head, dim), lambda b: (0, 0)),
            pl.BlockSpec((1, dim), lambda b: (0, 0)),
        ],
        out_specs=pl.BlockSpec((1, seq, dim), lambda b: (b, 0, 0)),
        compiler_params=pltpu.CompilerParams(
            dimension_semantics=("parallel",)),
    )(x, gamma.reshape(1, dim).astype(jnp.float32),
      beta.reshape(1, dim).astype(jnp.float32),
      wqkv, wo, bo.reshape(1, dim).astype(jnp.float32))


# ---------------------------------------------------------------------------
# Fused LeFF block (per batch element):
#   cls row passes through; patch tokens:
#   LN2 -> up-proj(+foldedBN)+GELU -> depthwise3x3(+foldedBN)+GELU
#       -> down-proj(+foldedBN)+GELU -> + residual
# ---------------------------------------------------------------------------
def _leff_block_kernel(x_ref, g_ref, be_ref, w1_ref, b1_ref, dw_ref, db_ref,
                       w2_ref, b2_ref, o_ref, pad_ref, *, n, hs, hidden, eps):
    x = x_ref[0].astype(jnp.float32)                          # (seq, dim), seq = n+1
    cls_row = x[0:1, :]                                       # cls token passes through
    xt = x[1:n + 1, :]                                        # (n, dim) patch tokens

    mu = jnp.mean(xt, axis=-1, keepdims=True)
    xc = xt - mu
    var = jnp.mean(xc * xc, axis=-1, keepdims=True)
    y = (xc * jax.lax.rsqrt(var + eps) * g_ref[...] + be_ref[...]).astype(jnp.bfloat16)

    # up-projection (BN folded into w1/b1) + GELU -> (n, hidden), stays in VMEM
    u = _gelu(jnp.dot(y, w1_ref[...], preferred_element_type=jnp.float32)
              + b1_ref[...])

    # depthwise 3x3 conv (pad=1, BN folded) + GELU on the (hs, hs) token grid.
    # zero-padded spatial scratch (borders provide the pad=1 halo).
    pad_ref[...] = jnp.zeros((hs + 2, hs + 2, hidden), jnp.float32)
    for i in range(hs):
        pad_ref[1 + i, 1:hs + 1, :] = u[i * hs:(i + 1) * hs, :]
    w = dw_ref[...]                                           # (9, hidden)
    db = db_ref[0]                                            # (hidden,)
    rows = []
    for i in range(hs):
        acc = jnp.zeros((hs, hidden), jnp.float32)
        for kh in range(3):
            slab = pad_ref[i + kh]                            # (hs+2, hidden)
            for kw in range(3):
                acc = acc + slab[kw:kw + hs, :] * w[kh * 3 + kw]
        rows.append(_gelu(acc + db))
    v = jnp.concatenate(rows, axis=0).astype(jnp.bfloat16)    # (n, hidden)

    # down-projection (BN folded) + GELU + residual
    d = _gelu(jnp.dot(v, w2_ref[...], preferred_element_type=jnp.float32)
              + b2_ref[...]) + xt
    o_ref[0] = jnp.concatenate([cls_row, d], axis=0).astype(o_ref.dtype)


def pallas_leff_block(x, gamma, beta, w1, b1, dw, db, w2, b2, *, hs, eps=1e-5):
    B, seq, dim = x.shape
    n = seq - 1
    assert n == hs * hs
    hidden = w1.shape[1]
    kernel = functools.partial(_leff_block_kernel, n=n, hs=hs, hidden=hidden,
                               eps=eps)
    return pl.pallas_call(
        kernel,
        out_shape=jax.ShapeDtypeStruct((B, seq, dim), x.dtype),
        grid=(B,),
        in_specs=[
            pl.BlockSpec((1, seq, dim), lambda b: (b, 0, 0)),
            pl.BlockSpec((1, dim), lambda b: (0, 0)),
            pl.BlockSpec((1, dim), lambda b: (0, 0)),
            pl.BlockSpec((dim, hidden), lambda b: (0, 0)),
            pl.BlockSpec((1, hidden), lambda b: (0, 0)),
            pl.BlockSpec((9, hidden), lambda b: (0, 0)),
            pl.BlockSpec((1, hidden), lambda b: (0, 0)),
            pl.BlockSpec((hidden, dim), lambda b: (0, 0)),
            pl.BlockSpec((1, dim), lambda b: (0, 0)),
        ],
        out_specs=pl.BlockSpec((1, seq, dim), lambda b: (b, 0, 0)),
        scratch_shapes=[pltpu.VMEM((hs + 2, hs + 2, hidden), jnp.float32)],
        compiler_params=pltpu.CompilerParams(
            dimension_semantics=("parallel",)),
    )(x, gamma.reshape(1, dim).astype(jnp.float32),
      beta.reshape(1, dim).astype(jnp.float32),
      w1, b1.reshape(1, hidden).astype(jnp.float32),
      dw, db.reshape(1, hidden).astype(jnp.float32),
      w2, b2.reshape(1, dim).astype(jnp.float32))


# ------------------------------------------------------------- MaxPool 3x3
def _maxpool_dense_kernel(x_ref, o_ref, *, KH, KW, Ho, Wo):
    x = x_ref[0]
    m = x[0:Ho, 0:Wo, :]
    for kh in range(KH):
        for kw in range(KW):
            if kh == 0 and kw == 0:
                continue
            m = jnp.maximum(m, x[kh:kh + Ho, kw:kw + Wo, :])
    o_ref[0] = m


def pallas_maxpool(x_nhwc, kernel=3, stride=2):
    B, H, W, C = x_nhwc.shape
    Hd, Wd = H - kernel + 1, W - kernel + 1
    dense = pl.pallas_call(
        functools.partial(_maxpool_dense_kernel, KH=kernel, KW=kernel,
                          Ho=Hd, Wo=Wd),
        out_shape=jax.ShapeDtypeStruct((B, Hd, Wd, C), x_nhwc.dtype),
        grid=(B,),
        in_specs=[pl.BlockSpec((1, H, W, C), lambda b: (b, 0, 0, 0))],
        out_specs=pl.BlockSpec((1, Hd, Wd, C), lambda b: (b, 0, 0, 0)),
        compiler_params=pltpu.CompilerParams(
            dimension_semantics=("parallel",)),
    )(x_nhwc)
    # TODO(synk): stride-2 subsample kept as tiny XLA glue (in-kernel strided
    #             pooling would need sublane-strided loads).
    return dense[:, ::stride, ::stride, :]


# ---------------------------------------------------------- im2col (glue)
def im2col(img_nchw, pad, kernel, stride):
    # TODO(synk): stem patch extraction kept as XLA glue; at real image sizes
    #             a direct Pallas stem conv would avoid the ~k*k expansion.
    B, Cin, H, W = img_nchw.shape
    Ho = (H + 2 * pad - kernel) // stride + 1
    Wo = (W + 2 * pad - kernel) // stride + 1
    xp = jnp.pad(img_nchw, ((0, 0), (0, 0), (pad, pad), (pad, pad)))
    cols = []
    for kh in range(kernel):
        for kw in range(kernel):
            cols.append(xp[:, :,
                           kh:kh + stride * (Ho - 1) + 1:stride,
                           kw:kw + stride * (Wo - 1) + 1:stride])
    cols = jnp.stack(cols, axis=-1)                       # (B, Cin, Ho, Wo, k*k)
    cols = cols.transpose(0, 2, 3, 1, 4).reshape(B * Ho * Wo, Cin * kernel * kernel)
    return cols, Ho, Wo


# ------------------------------------------------------------ parameters
def init_params(key, cfg):
    keys = iter(jax.random.split(key, 1024))
    eps = 1e-5

    def nrm(shape, s=0.02):
        return (s * jax.random.normal(next(keys), shape)).astype(jnp.float32)

    p = {}
    Cin, Cout, ck = cfg['in_channels'], cfg['out_channels'], cfg['conv_kernel']
    dim = cfg['dim']
    heads, dh = cfg['heads'], cfg['dim_head']

    # conv stem + BN2d (eval running stats folded once; stored pre-transposed bf16)
    w = nrm((Cout, Cin, ck, ck), 0.05)
    b = nrm((Cout,), 0.02)
    g = 1.0 + nrm((Cout,), 0.1)
    be = nrm((Cout,), 0.1)
    mn = nrm((Cout,), 0.1)
    vr = 1.0 + jnp.abs(nrm((Cout,), 0.1))
    sc = g / jnp.sqrt(vr + eps)
    p['stem_w'] = ((w.reshape(Cout, -1) * sc[:, None]).T).astype(jnp.bfloat16)
    p['stem_b'] = (b - mn) * sc + be

    patch_dim = Cout * cfg['patch_size'] ** 2
    p['patch_w'] = nrm((patch_dim, dim), 0.05).astype(jnp.bfloat16)
    p['patch_b'] = nrm((dim,), 0.02)

    num_patches = (cfg['feature_size'] // cfg['patch_size']) ** 2
    p['pos_embedding'] = nrm((1, num_patches + 1, dim), 1.0)
    p['cls_token'] = nrm((1, 1, dim), 1.0)

    hidden = dim * cfg['scale_dim']
    layers = []
    for _ in range(cfg['depth']):
        L = {}
        L['ln1_g'] = 1.0 + nrm((dim,), 0.1)
        L['ln1_b'] = nrm((dim,), 0.1)
        # lane-dense fused QKV / output-projection weights (heads concatenated)
        wq = nrm((heads, dim, dh), 0.05)
        wk = nrm((heads, dim, dh), 0.05)
        wv = nrm((heads, dim, dh), 0.05)
        L['wqkv'] = jnp.concatenate(
            [wq.transpose(1, 0, 2).reshape(dim, heads * dh),
             wk.transpose(1, 0, 2).reshape(dim, heads * dh),
             wv.transpose(1, 0, 2).reshape(dim, heads * dh)],
            axis=1).astype(jnp.bfloat16)
        L['wo'] = nrm((heads, dh, dim), 0.05).reshape(heads * dh, dim).astype(jnp.bfloat16)
        L['bo'] = nrm((dim,), 0.02)
        L['ln2_g'] = 1.0 + nrm((dim,), 0.1)
        L['ln2_b'] = nrm((dim,), 0.1)

        # LeFF up: Linear + BN1d(hidden) folded; GELU fused in the kernel
        w1 = nrm((dim, hidden), 0.05)
        b1 = nrm((hidden,), 0.02)
        g1 = 1.0 + nrm((hidden,), 0.1)
        be1 = nrm((hidden,), 0.1)
        m1 = nrm((hidden,), 0.1)
        v1 = 1.0 + jnp.abs(nrm((hidden,), 0.1))
        s1 = g1 / jnp.sqrt(v1 + eps)
        L['leff_w1'] = (w1 * s1[None, :]).astype(jnp.bfloat16)
        L['leff_b1'] = (b1 - m1) * s1 + be1

        # depthwise conv (bias=False) + BN2d folded (f32 — VPU path)
        dw = nrm((hidden, 3, 3), 0.1)
        g2 = 1.0 + nrm((hidden,), 0.1)
        be2 = nrm((hidden,), 0.1)
        m2 = nrm((hidden,), 0.1)
        v2 = 1.0 + jnp.abs(nrm((hidden,), 0.1))
        s2 = g2 / jnp.sqrt(v2 + eps)
        L['dw_w'] = (dw * s2[:, None, None]).transpose(1, 2, 0).reshape(9, hidden)
        L['dw_b'] = be2 - m2 * s2

        # LeFF down: Linear + BN1d(dim) folded; GELU fused
        w2 = nrm((hidden, dim), 0.05)
        b2 = nrm((dim,), 0.02)
        g3 = 1.0 + nrm((dim,), 0.1)
        be3 = nrm((dim,), 0.1)
        m3 = nrm((dim,), 0.1)
        v3 = 1.0 + jnp.abs(nrm((dim,), 0.1))
        s3 = g3 / jnp.sqrt(v3 + eps)
        L['leff_w2'] = (w2 * s3[None, :]).astype(jnp.bfloat16)
        L['leff_b2'] = (b2 - m3) * s3 + be3
        layers.append(L)
    p['layers'] = layers

    p['head_ln_g'] = 1.0 + nrm((dim,), 0.1)
    p['head_ln_b'] = nrm((dim,), 0.1)
    p['head_w'] = nrm((dim, cfg['num_classes']), 0.05).astype(jnp.bfloat16)
    p['head_b'] = nrm((cfg['num_classes'],), 0.02)
    return p


# --------------------------------------------------------------- forward
def ceit_forward(params, img, cfg):
    B = img.shape[0]
    dim = cfg['dim']
    heads, dh = cfg['heads'], cfg['dim_head']

    # ---- conv stem: im2col + fused linear (BN folded), NHWC bf16 output
    cols, Ho, Wo = im2col(img, pad=4, kernel=cfg['conv_kernel'], stride=cfg['stride'])
    feat = pallas_fused_linear(cols, params['stem_w'], params['stem_b'],
                               out_dtype=jnp.bfloat16)
    feat = feat.reshape(B, Ho, Wo, cfg['out_channels'])
    feat = pallas_maxpool(feat, kernel=cfg['pool_kernel'], stride=cfg['stride'])
    fs = feat.shape[1]                                   # = image_size // 4

    # ---- patch embedding: 'b c (h p1) (w p2) -> b (h w) (p1 p2 c)' (from NHWC)
    ps = cfg['patch_size']
    h = fs // ps
    n = h * h
    xp = feat.reshape(B, h, ps, h, ps, cfg['out_channels'])
    xp = xp.transpose(0, 1, 3, 2, 4, 5).reshape(B * n, ps * ps * cfg['out_channels'])
    x = pallas_fused_linear(xp, params['patch_w'], params['patch_b'],
                            out_dtype=jnp.float32)
    x = x.reshape(B, n, dim)

    cls = jnp.broadcast_to(params['cls_token'], (B, 1, dim))
    x = jnp.concatenate([cls, x], axis=1) + params['pos_embedding'][:, :n + 1]
    # bf16 token stream between kernels (mem-bound inter-kernel traffic);
    # every kernel upcasts to f32 internally for LN / softmax / accumulation.
    x = x.astype(jnp.bfloat16)

    # TODO(synk): with_lca=True branch (LCA / LCAttention) not implemented;
    #             the per-layer cls-token history is only consumed there.
    for L in params['layers']:
        # Residual(PreNorm(Attention)) : one fused pallas_call per layer
        x = pallas_attention_block(x, L['ln1_g'], L['ln1_b'], L['wqkv'],
                                   L['wo'], L['bo'], heads=heads, dim_head=dh)
        # Residual(PreNorm(LeFF)) on patch tokens, cls row passed through
        x = pallas_leff_block(x, L['ln2_g'], L['ln2_b'],
                              L['leff_w1'], L['leff_b1'],
                              L['dw_w'], L['dw_b'],
                              L['leff_w2'], L['leff_b2'], hs=h)

    final_feature_x = x.astype(jnp.float32)
    pooled = jnp.mean(x, axis=1) if cfg['pool'] == 'mean' else x[:, 0]
    logits = pallas_fused_linear(pooled, params['head_w'], params['head_b'],
                                 ln=(params['head_ln_g'], params['head_ln_b']),
                                 out_dtype=jnp.float32)
    return logits, final_feature_x


# ------------------------------------------------------------------ main
if __name__ == "__main__":
    cfg = dict(image_size=16, patch_size=2, num_classes=10, dim=32, depth=2,
               heads=2, dim_head=16, in_channels=3, out_channels=8,
               conv_kernel=7, stride=2, pool_kernel=3, scale_dim=4, pool='cls')
    cfg['feature_size'] = cfg['image_size'] // 4
    assert cfg['feature_size'] % cfg['patch_size'] == 0

    key = jax.random.PRNGKey(0)
    pkey, xkey = jax.random.split(key)
    params = init_params(pkey, cfg)
    img = jax.random.normal(
        xkey, (2, cfg['in_channels'], cfg['image_size'], cfg['image_size']),
        dtype=jnp.float32)

    fwd = jax.jit(lambda p, x: ceit_forward(p, x, cfg))
    logits, feats = fwd(params, img)
    jax.block_until_ready((logits, feats))

    num_patches = (cfg['feature_size'] // cfg['patch_size']) ** 2
    assert logits.shape == (2, cfg['num_classes'])
    assert feats.shape == (2, num_patches + 1, cfg['dim'])
    assert bool(jnp.all(jnp.isfinite(logits))) and bool(jnp.all(jnp.isfinite(feats)))
    print("KERNEL_OK")
</pallas_src>

<mosaic_0001>
module attributes {stable_mosaic.version = 11 : i64} {
  func.func @kernel(%arg0: memref<162x147xf32, #tpu.memory_space<vmem>>, %arg1: memref<147x8xbf16, #tpu.memory_space<vmem>>, %arg2: memref<1x8xf32, #tpu.memory_space<vmem>>, %arg3: memref<162x8xbf16, #tpu.memory_space<vmem>>) attributes {dimension_semantics = [], scalar_prefetch = 0 : i64, scratch_operands = 0 : i64, tpu.core_type = #tpu.core_type<tc>} {
    %c0 = arith.constant 0 : index
    %c0_0 = arith.constant 0 : index
    %0 = vector.load %arg0[%c0, %c0_0] : memref<162x147xf32, #tpu.memory_space<vmem>>, vector<162x147xf32>
    %c0_1 = arith.constant 0 : index
    %c0_2 = arith.constant 0 : index
    %1 = vector.load %arg1[%c0_1, %c0_2] : memref<147x8xbf16, #tpu.memory_space<vmem>>, vector<147x8xbf16>
    %c0_3 = arith.constant 0 : index
    %c0_4 = arith.constant 0 : index
    %2 = vector.load %arg2[%c0_3, %c0_4] : memref<1x8xf32, #tpu.memory_space<vmem>>, vector<1x8xf32>
    %3 = arith.truncf %0 : vector<162x147xf32> to vector<162x147xbf16>
    %cst = arith.constant dense<0.000000e+00> : vector<162x8xf32>
    %4 = tpu.matmul %3, %1, %cst {dimension_numbers = #tpu.dot_dimension_numbers<[1], [0], [0], [1], [0, 0, 1, 1], [], []>} : vector<162x147xbf16>, vector<147x8xbf16>, vector<162x8xf32> -> vector<162x8xf32>
    %5 = vector.broadcast %2 : vector<1x8xf32> to vector<162x8xf32>
    %6 = arith.addf %4, %5 : vector<162x8xf32>
    %7 = arith.truncf %6 : vector<162x8xf32> to vector<162x8xbf16>
    %c0_5 = arith.constant 0 : index
    %c0_6 = arith.constant 0 : index
    %8 = vector.load %arg3[%c0_5, %c0_6] : memref<162x8xbf16, #tpu.memory_space<vmem>>, vector<162x8xbf16>
    tpu.vector_store %arg3[%c0_5, %c0_6], %7 {strides = array<i32>} : memref<162x8xbf16, #tpu.memory_space<vmem>>, vector<162x8xbf16>,
    return
  }
}

module attributes {stable_mosaic.version = 11 : i64} {
  func.func @_maxpool_dense_kernel(%arg0: i32, %arg1: memref<1x9x9x8xbf16, #tpu.memory_space<vmem>>, %arg2: memref<1x7x7x8xbf16, #tpu.memory_space<vmem>>) attributes {dimension_semantics = [#tpu.dimension_semantics<parallel>], iteration_bounds = array<i64: 2>, scalar_prefetch = 0 : i64, scratch_operands = 0 : i64, tpu.core_type = #tpu.core_type<tc>, window_params = [{transform_indices = @transform_0, window_bounds = array<i64: 1, 9, 9, 8>}, {transform_indices = @transform_1, window_bounds = array<i64: 1, 7, 7, 8>}]} {
    %c0 = arith.constant 0 : index
    %c0_0 = arith.constant 0 : index
    %c0_1 = arith.constant 0 : index
    %c0_2 = arith.constant 0 : index
    %0 = vector.load %arg1[%c0, %c0_0, %c0_1, %c0_2] : memref<1x9x9x8xbf16, #tpu.memory_space<vmem>>, vector<1x9x9x8xbf16>
    %1 = vector.shape_cast %0 : vector<1x9x9x8xbf16> to vector<9x9x8xbf16>
    %2 = vector.extract_strided_slice %1 {offsets = [0, 0, 0], sizes = [7, 7, 8], strides = [1, 1, 1]} : vector<9x9x8xbf16> to vector<7x7x8xbf16>
    %3 = vector.extract_strided_slice %1 {offsets = [0, 1, 0], sizes = [7, 7, 8], strides = [1, 1, 1]} : vector<9x9x8xbf16> to vector<7x7x8xbf16>
    %4 = arith.maximumf %2, %3 : vector<7x7x8xbf16>
    %5 = vector.extract_strided_slice %1 {offsets = [0, 2, 0], sizes = [7, 7, 8], strides = [1, 1, 1]} : vector<9x9x8xbf16> to vector<7x7x8xbf16>
    %6 = arith.maximumf %4, %5 : vector<7x7x8xbf16>
    %7 = vector.extract_strided_slice %1 {offsets = [1, 0, 0], sizes = [7, 7, 8], strides = [1, 1, 1]} : vector<9x9x8xbf16> to vector<7x7x8xbf16>
    %8 = arith.maximumf %6, %7 : vector<7x7x8xbf16>
    %9 = vector.extract_strided_slice %1 {offsets = [1, 1, 0], sizes = [7, 7, 8], strides = [1, 1, 1]} : vector<9x9x8xbf16> to vector<7x7x8xbf16>
    %10 = arith.maximumf %8, %9 : vector<7x7x8xbf16>
    %11 = vector.extract_strided_slice %1 {offsets = [1, 2, 0], sizes = [7, 7, 8], strides = [1, 1, 1]} : vector<9x9x8xbf16> to vector<7x7x8xbf16>
    %12 = arith.maximumf %10, %11 : vector<7x7x8xbf16>
    %13 = vector.extract_strided_slice %1 {offsets = [2, 0, 0], sizes = [7, 7, 8], strides = [1, 1, 1]} : vector<9x9x8xbf16> to vector<7x7x8xbf16>
    %14 = arith.maximumf %12, %13 : vector<7x7x8xbf16>
    %15 = vector.extract_strided_slice %1 {offsets = [2, 1, 0], sizes = [7, 7, 8], strides = [1, 1, 1]} : vector<9x9x8xbf16> to vector<7x7x8xbf16>
    %16 = arith.maximumf %14, %15 : vector<7x7x8xbf16>
    %17 = vector.extract_strided_slice %1 {offsets = [2, 2, 0], sizes = [7, 7, 8], strides = [1, 1, 1]} : vector<9x9x8xbf16> to vector<7x7x8xbf16>
    %18 = arith.maximumf %16, %17 : vector<7x7x8xbf16>
    %c0_3 = arith.constant 0 : index
    %c0_4 = arith.constant 0 : index
    %c0_5 = arith.constant 0 : index
    %c0_6 = arith.constant 0 : index
    %19 = vector.load %arg2[%c0_3, %c0_4, %c0_5, %c0_6] : memref<1x7x7x8xbf16, #tpu.memory_space<vmem>>, vector<1x7x7x8xbf16>
    %20 = vector.shape_cast %19 : vector<1x7x7x8xbf16> to vector<7x7x8xbf16>
    %21 = vector.shape_cast %18 : vector<7x7x8xbf16> to vector<1x7x7x8xbf16>
    tpu.vector_store %arg2[%c0_3, %c0_4, %c0_5, %c0_6], %21 {strides = array<i32>} : memref<1x7x7x8xbf16, #tpu.memory_space<vmem>>, vector<1x7x7x8xbf16>,
    return
  }
  func.func @transform_0(%arg0: i32) -> (i32, i32, i32, i32) {
    %c0_i32 = arith.constant 0 : i32
    %c0_i32_0 = arith.constant 0 : i32
    %c0_i32_1 = arith.constant 0 : i32
    %c0_i32_2 = arith.constant 0 : i32
    return %arg0, %c0_i32, %c0_i32_0, %c0_i32_1 : i32, i32, i32, i32
  }
  func.func @transform_1(%arg0: i32) -> (i32, i32, i32, i32) {
    %c0_i32 = arith.constant 0 : i32
    %c0_i32_0 = arith.constant 0 : i32
    %c0_i32_1 = arith.constant 0 : i32
    %c0_i32_2 = arith.constant 0 : i32
    return %arg0, %c0_i32, %c0_i32_0, %c0_i32_1 : i32, i32, i32, i32
  }
}

module attributes {stable_mosaic.version = 11 : i64} {
  func.func @kernel(%arg0: memref<8x32xbf16, #tpu.memory_space<vmem>>, %arg1: memref<32x32xbf16, #tpu.memory_space<vmem>>, %arg2: memref<1x32xf32, #tpu.memory_space<vmem>>, %arg3: memref<8x32xf32, #tpu.memory_space<vmem>>) attributes {dimension_semantics = [], scalar_prefetch = 0 : i64, scratch_operands = 0 : i64, tpu.core_type = #tpu.core_type<tc>} {
    %c0 = arith.constant 0 : index
    %c0_0 = arith.constant 0 : index
    %0 = vector.load %arg0[%c0, %c0_0] : memref<8x32xbf16, #tpu.memory_space<vmem>>, vector<8x32xbf16>
    %1 = arith.extf %0 : vector<8x32xbf16> to vector<8x32xf32>
    %c0_1 = arith.constant 0 : index
    %c0_2 = arith.constant 0 : index
    %2 = vector.load %arg1[%c0_1, %c0_2] : memref<32x32xbf16, #tpu.memory_space<vmem>>, vector<32x32xbf16>
    %c0_3 = arith.constant 0 : index
    %c0_4 = arith.constant 0 : index
    %3 = vector.load %arg2[%c0_3, %c0_4] : memref<1x32xf32, #tpu.memory_space<vmem>>, vector<1x32xf32>
    %4 = arith.truncf %1 : vector<8x32xf32> to vector<8x32xbf16>
    %cst = arith.constant dense<0.000000e+00> : vector<8x32xf32>
    %5 = tpu.matmul %4, %2, %cst {dimension_numbers = #tpu.dot_dimension_numbers<[1], [0], [0], [1], [0, 0, 1, 1], [], []>} : vector<8x32xbf16>, vector<32x32xbf16>, vector<8x32xf32> -> vector<8x32xf32>
    %6 = vector.broadcast %3 : vector<1x32xf32> to vector<8x32xf32>
    %7 = arith.addf %5, %6 : vector<8x32xf32>
    %c0_5 = arith.constant 0 : index
    %c0_6 = arith.constant 0 : index
    %8 = vector.load %arg3[%c0_5, %c0_6] : memref<8x32xf32, #tpu.memory_space<vmem>>, vector<8x32xf32>
    tpu.vector_store %arg3[%c0_5, %c0_6], %7 {strides = array<i32>} : memref<8x32xf32, #tpu.memory_space<vmem>>, vector<8x32xf32>,
    return
  }
}

module attributes {stable_mosaic.version = 11 : i64} {
  func.func @_attn_block_kernel(%arg0: i32, %arg1: memref<1x5x32xbf16, #tpu.memory_space<vmem>>, %arg2: memref<1x32xf32, #tpu.memory_space<vmem>>, %arg3: memref<1x32xf32, #tpu.memory_space<vmem>>, %arg4: memref<32x96xbf16, #tpu.memory_space<vmem>>, %arg5: memref<32x32xbf16, #tpu.memory_space<vmem>>, %arg6: memref<1x32xf32, #tpu.memory_space<vmem>>, %arg7: memref<1x5x32xbf16, #tpu.memory_space<vmem>>) attributes {dimension_semantics = [#tpu.dimension_semantics<parallel>], iteration_bounds = array<i64: 2>, scalar_prefetch = 0 : i64, scratch_operands = 0 : i64, tpu.core_type = #tpu.core_type<tc>, window_params = [{transform_indices = @transform_0, window_bounds = array<i64: 1, 5, 32>}, {pipeline_mode = #tpu.pipeline_mode<synchronous>, transform_indices = @transform_1, window_bounds = array<i64: 1, 32>}, {pipeline_mode = #tpu.pipeline_mode<synchronous>, transform_indices = @transform_2, window_bounds = array<i64: 1, 32>}, {pipeline_mode = #tpu.pipeline_mode<synchronous>, transform_indices = @transform_3, window_bounds = array<i64: 32, 96>}, {pipeline_mode = #tpu.pipeline_mode<synchronous>, transform_indices = @transform_4, window_bounds = array<i64: 32, 32>}, {pipeline_mode = #tpu.pipeline_mode<synchronous>, transform_indices = @transform_5, window_bounds = array<i64: 1, 32>}, {transform_indices = @transform_6, window_bounds = array<i64: 1, 5, 32>}]} {
    %c0 = arith.constant 0 : index
    %c0_0 = arith.constant 0 : index
    %c0_1 = arith.constant 0 : index
    %0 = vector.load %arg1[%c0, %c0_0, %c0_1] : memref<1x5x32xbf16, #tpu.memory_space<vmem>>, vector<1x5x32xbf16>
    %1 = vector.shape_cast %0 : vector<1x5x32xbf16> to vector<5x32xbf16>
    %2 = arith.extf %1 : vector<5x32xbf16> to vector<5x32xf32>
    %cst = arith.constant dense<0.000000e+00> : vector<5xf32>
    %3 = vector.multi_reduction <add>, %2, %cst [1] : vector<5x32xf32> to vector<5xf32>
    %4 = vector.shape_cast %3 : vector<5xf32> to vector<5x1xf32>
    %cst_2 = arith.constant 3.200000e+01 : f32
    %5 = vector.broadcast %cst_2 : f32 to vector<5x1xf32>
    %6 = arith.divf %4, %5 : vector<5x1xf32>
    %7 = vector.broadcast %6 : vector<5x1xf32> to vector<5x32xf32>
    %8 = arith.subf %2, %7 : vector<5x32xf32>
    %9 = arith.mulf %8, %8 : vector<5x32xf32>
    %cst_3 = arith.constant dense<0.000000e+00> : vector<5xf32>
    %10 = vector.multi_reduction <add>, %9, %cst_3 [1] : vector<5x32xf32> to vector<5xf32>
    %11 = vector.shape_cast %10 : vector<5xf32> to vector<5x1xf32>
    %cst_4 = arith.constant 3.200000e+01 : f32
    %12 = vector.broadcast %cst_4 : f32 to vector<5x1xf32>
    %13 = arith.divf %11, %12 : vector<5x1xf32>
    %cst_5 = arith.constant 9.99999974E-6 : f32
    %14 = vector.broadcast %cst_5 : f32 to vector<5x1xf32>
    %15 = arith.addf %13, %14 : vector<5x1xf32>
    %16 = math.rsqrt %15 : vector<5x1xf32>
    %17 = vector.broadcast %16 : vector<5x1xf32> to vector<5x32xf32>
    %18 = arith.mulf %8, %17 : vector<5x32xf32>
    %c0_6 = arith.constant 0 : index
    %c0_7 = arith.constant 0 : index
    %19 = vector.load %arg2[%c0_6, %c0_7] : memref<1x32xf32, #tpu.memory_space<vmem>>, vector<1x32xf32>
    %20 = vector.broadcast %19 : vector<1x32xf32> to vector<5x32xf32>
    %21 = arith.mulf %18, %20 : vector<5x32xf32>
    %c0_8 = arith.constant 0 : index
    %c0_9 = arith.constant 0 : index
    %22 = vector.load %arg3[%c0_8, %c0_9] : memref<1x32xf32, #tpu.memory_space<vmem>>, vector<1x32xf32>
    %23 = vector.broadcast %22 : vector<1x32xf32> to vector<5x32xf32>
    %24 = arith.addf %21, %23 : vector<5x32xf32>
    %25 = arith.truncf %24 : vector<5x32xf32> to vector<5x32xbf16>
    %c0_10 = arith.constant 0 : index
    %c0_11 = arith.constant 0 : index
    %26 = vector.load %arg4[%c0_10, %c0_11] : memref<32x96xbf16, #tpu.memory_space<vmem>>, vector<32x96xbf16>
    %cst_12 = arith.constant dense<0.000000e+00> : vector<5x96xf32>
    %27 = tpu.matmul %25, %26, %cst_12 {dimension_numbers = #tpu.dot_dimension_numbers<[1], [0], [0], [1], [0, 0, 1, 1], [], []>} : vector<5x32xbf16>, vector<32x96xbf16>, vector<5x96xf32> -> vector<5x96xf32>
    %28 = vector.extract_strided_slice %27 {offsets = [0, 0], sizes = [5, 16], strides = [1, 1]} : vector<5x96xf32> to vector<5x16xf32>
    %29 = vector.extract_strided_slice %27 {offsets = [0, 32], sizes = [5, 16], strides = [1, 1]} : vector<5x96xf32> to vector<5x16xf32>
    %30 = vector.extract_strided_slice %27 {offsets = [0, 64], sizes = [5, 16], strides = [1, 1]} : vector<5x96xf32> to vector<5x16xf32>
    %31 = arith.truncf %28 : vector<5x16xf32> to vector<5x16xbf16>
    %32 = arith.truncf %29 : vector<5x16xf32> to vector<5x16xbf16>
    %cst_13 = arith.constant dense<0.000000e+00> : vector<5x5xf32>
    %33 = tpu.matmul %31, %32, %cst_13 {dimension_numbers = #tpu.dot_dimension_numbers<[1], [1], [0], [0], [0, 0, 1, 0], [], []>} : vector<5x16xbf16>, vector<5x16xbf16>, vector<5x5xf32> -> vector<5x5xf32>
    %cst_14 = arith.constant 2.500000e-01 : f32
    %34 = vector.broadcast %cst_14 : f32 to vector<5x5xf32>
    %35 = arith.mulf %33, %34 : vector<5x5xf32>
    %cst_15 = arith.constant dense<0xFF800000> : vector<5xf32>
    %36 = vector.multi_reduction <maximumf>, %35, %cst_15 [1] : vector<5x5xf32> to vector<5xf32>
    %37 = vector.shape_cast %36 : vector<5xf32> to vector<5x1xf32>
    %38 = vector.broadcast %37 : vector<5x1xf32> to vector<5x5xf32>
    %39 = arith.subf %35, %38 : vector<5x5xf32>
    %40 = math.exp %39 : vector<5x5xf32>
    %cst_16 = arith.constant dense<0.000000e+00> : vector<5xf32>
    %41 = vector.multi_reduction <add>, %40, %cst_16 [1] : vector<5x5xf32> to vector<5xf32>
    %42 = vector.shape_cast %41 : vector<5xf32> to vector<5x1xf32>
    %43 = tpu.reciprocal %42 {approx = true} : vector<5x1xf32> -> vector<5x1xf32>
    %44 = vector.broadcast %43 : vector<5x1xf32> to vector<5x5xf32>
    %45 = arith.mulf %40, %44 : vector<5x5xf32>
    %46 = arith.truncf %45 : vector<5x5xf32> to vector<5x5xbf16>
    %47 = arith.truncf %30 : vector<5x16xf32> to vector<5x16xbf16>
    %cst_17 = arith.constant dense<0.000000e+00> : vector<5x16xf32>
    %48 = tpu.matmul %46, %47, %cst_17 {dimension_numbers = #tpu.dot_dimension_numbers<[1], [0], [0], [1], [0, 0, 1, 1], [], []>} : vector<5x5xbf16>, vector<5x16xbf16>, vector<5x16xf32> -> vector<5x16xf32>
    %49 = vector.extract_strided_slice %27 {offsets = [0, 16], sizes = [5, 16], strides = [1, 1]} : vector<5x96xf32> to vector<5x16xf32>
    %50 = vector.extract_strided_slice %27 {offsets = [0, 48], sizes = [5, 16], strides = [1, 1]} : vector<5x96xf32> to vector<5x16xf32>
    %51 = vector.extract_strided_slice %27 {offsets = [0, 80], sizes = [5, 16], strides = [1, 1]} : vector<5x96xf32> to vector<5x16xf32>
    %52 = arith.truncf %49 : vector<5x16xf32> to vector<5x16xbf16>
    %53 = arith.truncf %50 : vector<5x16xf32> to vector<5x16xbf16>
    %cst_18 = arith.constant dense<0.000000e+00> : vector<5x5xf32>
    %54 = tpu.matmul %52, %53, %cst_18 {dimension_numbers = #tpu.dot_dimension_numbers<[1], [1], [0], [0], [0, 0, 1, 0], [], []>} : vector<5x16xbf16>, vector<5x16xbf16>, vector<5x5xf32> -> vector<5x5xf32>
    %cst_19 = arith.constant 2.500000e-01 : f32
    %55 = vector.broadcast %cst_19 : f32 to vector<5x5xf32>
    %56 = arith.mulf %54, %55 : vector<5x5xf32>
    %cst_20 = arith.constant dense<0xFF800000> : vector<5xf32>
    %57 = vector.multi_reduction <maximumf>, %56, %cst_20 [1] : vector<5x5xf32> to vector<5xf32>
    %58 = vector.shape_cast %57 : vector<5xf32> to vector<5x1xf32>
    %59 = vector.broadcast %58 : vector<5x1xf32> to vector<5x5xf32>
    %60 = arith.subf %56, %59 : vector<5x5xf32>
    %61 = math.exp %60 : vector<5x5xf32>
    %cst_21 = arith.constant dense<0.000000e+00> : vector<5xf32>
    %62 = vector.multi_reduction <add>, %61, %cst_21 [1] : vector<5x5xf32> to vector<5xf32>
    %63 = vector.shape_cast %62 : vector<5xf32> to vector<5x1xf32>
    %64 = tpu.reciprocal %63 {approx = true} : vector<5x1xf32> -> vector<5x1xf32>
    %65 = vector.broadcast %64 : vector<5x1xf32> to vector<5x5xf32>
    %66 = arith.mulf %61, %65 : vector<5x5xf32>
    %67 = arith.truncf %66 : vector<5x5xf32> to vector<5x5xbf16>
    %68 = arith.truncf %51 : vector<5x16xf32> to vector<5x16xbf16>
    %cst_22 = arith.constant dense<0.000000e+00> : vector<5x16xf32>
    %69 = tpu.matmul %67, %68, %cst_22 {dimension_numbers = #tpu.dot_dimension_numbers<[1], [0], [0], [1], [0, 0, 1, 1], [], []>} : vector<5x5xbf16>, vector<5x16xbf16>, vector<5x16xf32> -> vector<5x16xf32>
    %70 = tpu.concatenate %48, %69 in 1 : vector<5x16xf32>, vector<5x16xf32> -> vector<5x32xf32>
    %71 = arith.truncf %70 : vector<5x32xf32> to vector<5x32xbf16>
    %c0_23 = arith.constant 0 : index
    %c0_24 = arith.constant 0 : index
    %72 = vector.load %arg5[%c0_23, %c0_24] : memref<32x32xbf16, #tpu.memory_space<vmem>>, vector<32x32xbf16>
    %cst_25 = arith.constant dense<0.000000e+00> : vector<5x32xf32>
    %73 = tpu.matmul %71, %72, %cst_25 {dimension_numbers = #tpu.dot_dimension_numbers<[1], [0], [0], [1], [0, 0, 1, 1], [], []>} : vector<5x32xbf16>, vector<32x32xbf16>, vector<5x32xf32> -> vector<5x32xf32>
    %74 = arith.addf %2, %73 : vector<5x32xf32>
    %c0_26 = arith.constant 0 : index
    %c0_27 = arith.constant 0 : index
    %75 = vector.load %arg6[%c0_26, %c0_27] : memref<1x32xf32, #tpu.memory_space<vmem>>, vector<1x32xf32>
    %76 = vector.broadcast %75 : vector<1x32xf32> to vector<5x32xf32>
    %77 = arith.addf %74, %76 : vector<5x32xf32>
    %78 = arith.truncf %77 : vector<5x32xf32> to vector<5x32xbf16>
    %c0_28 = arith.constant 0 : index
    %c0_29 = arith.constant 0 : index
    %c0_30 = arith.constant 0 : index
    %79 = vector.load %arg7[%c0_28, %c0_29, %c0_30] : memref<1x5x32xbf16, #tpu.memory_space<vmem>>, vector<1x5x32xbf16>
    %80 = vector.shape_cast %79 : vector<1x5x32xbf16> to vector<5x32xbf16>
    %81 = vector.shape_cast %78 : vector<5x32xbf16> to vector<1x5x32xbf16>
    tpu.vector_store %arg7[%c0_28, %c0_29, %c0_30], %81 {strides = array<i32>} : memref<1x5x32xbf16, #tpu.memory_space<vmem>>, vector<1x5x32xbf16>,
    return
  }
  func.func @transform_0(%arg0: i32) -> (i32, i32, i32) {
    %c0_i32 = arith.constant 0 : i32
    %c0_i32_0 = arith.constant 0 : i32
    %c0_i32_1 = arith.constant 0 : i32
    return %arg0, %c0_i32, %c0_i32_0 : i32, i32, i32
  }
  func.func @transform_1(%arg0: i32) -> (i32, i32) {
    %c0_i32 = arith.constant 0 : i32
    %c0_i32_0 = arith.constant 0 : i32
    %c0_i32_1 = arith.constant 0 : i32
    return %c0_i32, %c0_i32_0 : i32, i32
  }
  func.func @transform_2(%arg0: i32) -> (i32, i32) {
    %c0_i32 = arith.constant 0 : i32
    %c0_i32_0 = arith.constant 0 : i32
    %c0_i32_1 = arith.constant 0 : i32
    return %c0_i32, %c0_i32_0 : i32, i32
  }
  func.func @transform_3(%arg0: i32) -> (i32, i32) {
    %c0_i32 = arith.constant 0 : i32
    %c0_i32_0 = arith.constant 0 : i32
    %c0_i32_1 = arith.constant 0 : i32
    return %c0_i32, %c0_i32_0 : i32, i32
  }
  func.func @transform_4(%arg0: i32) -> (i32, i32) {
    %c0_i32 = arith.constant 0 : i32
    %c0_i32_0 = arith.constant 0 : i32
    %c0_i32_1 = arith.constant 0 : i32
    return %c0_i32, %c0_i32_0 : i32, i32
  }
  func.func @transform_5(%arg0: i32) -> (i32, i32) {
    %c0_i32 = arith.constant 0 : i32
    %c0_i32_0 = arith.constant 0 : i32
    %c0_i32_1 = arith.constant 0 : i32
    return %c0_i32, %c0_i32_0 : i32, i32
  }
  func.func @transform_6(%arg0: i32) -> (i32, i32, i32) {
    %c0_i32 = arith.constant 0 : i32
    %c0_i32_0 = arith.constant 0 : i32
    %c0_i32_1 = arith.constant 0 : i32
    return %arg0, %c0_i32, %c0_i32_0 : i32, i32, i32
  }
}

module attributes {stable_mosaic.version = 11 : i64} {
  func.func @kernel(%arg0: memref<2x32xbf16, #tpu.memory_space<vmem>>, %arg1: memref<1x32xf32, #tpu.memory_space<vmem>>, %arg2: memref<1x32xf32, #tpu.memory_space<vmem>>, %arg3: memref<32x10xbf16, #tpu.memory_space<vmem>>, %arg4: memref<1x10xf32, #tpu.memory_space<vmem>>, %arg5: memref<2x10xf32, #tpu.memory_space<vmem>>) attributes {dimension_semantics = [], scalar_prefetch = 0 : i64, scratch_operands = 0 : i64, tpu.core_type = #tpu.core_type<tc>} {
    %c0 = arith.constant 0 : index
    %c0_0 = arith.constant 0 : index
    %0 = vector.load %arg0[%c0, %c0_0] : memref<2x32xbf16, #tpu.memory_space<vmem>>, vector<2x32xbf16>
    %1 = arith.extf %0 : vector<2x32xbf16> to vector<2x32xf32>
    %c0_1 = arith.constant 0 : index
    %c0_2 = arith.constant 0 : index
    %2 = vector.load %arg1[%c0_1, %c0_2] : memref<1x32xf32, #tpu.memory_space<vmem>>, vector<1x32xf32>
    %c0_3 = arith.constant 0 : index
    %c0_4 = arith.constant 0 : index
    %3 = vector.load %arg2[%c0_3, %c0_4] : memref<1x32xf32, #tpu.memory_space<vmem>>, vector<1x32xf32>
    %cst = arith.constant dense<0.000000e+00> : vector<2xf32>
    %4 = vector.multi_reduction <add>, %1, %cst [1] : vector<2x32xf32> to vector<2xf32>
    %5 = vector.shape_cast %4 : vector<2xf32> to vector<2x1xf32>
    %cst_5 = arith.constant 3.200000e+01 : f32
    %6 = vector.broadcast %cst_5 : f32 to vector<2x1xf32>
    %7 = arith.divf %5, %6 : vector<2x1xf32>
    %8 = vector.broadcast %7 : vector<2x1xf32> to vector<2x32xf32>
    %9 = arith.subf %1, %8 : vector<2x32xf32>
    %10 = arith.mulf %9, %9 : vector<2x32xf32>
    %cst_6 = arith.constant dense<0.000000e+00> : vector<2xf32>
    %11 = vector.multi_reduction <add>, %10, %cst_6 [1] : vector<2x32xf32> to vector<2xf32>
    %12 = vector.shape_cast %11 : vector<2xf32> to vector<2x1xf32>
    %cst_7 = arith.constant 3.200000e+01 : f32
    %13 = vector.broadcast %cst_7 : f32 to vector<2x1xf32>
    %14 = arith.divf %12, %13 : vector<2x1xf32>
    %cst_8 = arith.constant 9.99999974E-6 : f32
    %15 = vector.broadcast %cst_8 : f32 to vector<2x1xf32>
    %16 = arith.addf %14, %15 : vector<2x1xf32>
    %17 = math.rsqrt %16 : vector<2x1xf32>
    %18 = vector.broadcast %17 : vector<2x1xf32> to vector<2x32xf32>
    %19 = arith.mulf %9, %18 : vector<2x32xf32>
    %20 = vector.broadcast %2 : vector<1x32xf32> to vector<2x32xf32>
    %21 = arith.mulf %19, %20 : vector<2x32xf32>
    %22 = vector.broadcast %3 : vector<1x32xf32> to vector<2x32xf32>
    %23 = arith.addf %21, %22 : vector<2x32xf32>
    %c0_9 = arith.constant 0 : index
    %c0_10 = arith.constant 0 : index
    %24 = vector.load %arg3[%c0_9, %c0_10] : memref<32x10xbf16, #tpu.memory_space<vmem>>, vector<32x10xbf16>
    %c0_11 = arith.constant 0 : index
    %c0_12 = arith.constant 0 : index
    %25 = vector.load %arg4[%c0_11, %c0_12] : memref<1x10xf32, #tpu.memory_space<vmem>>, vector<1x10xf32>
    %26 = arith.truncf %23 : vector<2x32xf32> to vector<2x32xbf16>
    %cst_13 = arith.constant dense<0.000000e+00> : vector<2x10xf32>
    %27 = tpu.matmul %26, %24, %cst_13 {dimension_numbers = #tpu.dot_dimension_numbers<[1], [0], [0], [1], [0, 0, 1, 1], [], []>} : vector<2x32xbf16>, vector<32x10xbf16>, vector<2x10xf32> -> vector<2x10xf32>
    %28 = vector.broadcast %25 : vector<1x10xf32> to vector<2x10xf32>
    %29 = arith.addf %27, %28 : vector<2x10xf32>
    %c0_14 = arith.constant 0 : index
    %c0_15 = arith.constant 0 : index
    %30 = vector.load %arg5[%c0_14, %c0_15] : memref<2x10xf32, #tpu.memory_space<vmem>>, vector<2x10xf32>
    tpu.vector_store %arg5[%c0_14, %c0_15], %29 {strides = array<i32>} : memref<2x10xf32, #tpu.memory_space<vmem>>, vector<2x10xf32>,
    return
  }
}

module attributes {stable_mosaic.version = 11 : i64} {
  func.func @_leff_block_kernel(%arg0: i32, %arg1: memref<1x5x32xbf16, #tpu.memory_space<vmem>>, %arg2: memref<1x32xf32, #tpu.memory_space<vmem>>, %arg3: memref<1x32xf32, #tpu.memory_space<vmem>>, %arg4: memref<32x128xbf16, #tpu.memory_space<vmem>>, %arg5: memref<1x128xf32, #tpu.memory_space<vmem>>, %arg6: memref<9x128xf32, #tpu.memory_space<vmem>>, %arg7: memref<1x128xf32, #tpu.memory_space<vmem>>, %arg8: memref<128x32xbf16, #tpu.memory_space<vmem>>, %arg9: memref<1x32xf32, #tpu.memory_space<vmem>>, %arg10: memref<1x5x32xbf16, #tpu.memory_space<vmem>>, %arg11: memref<4x4x128xf32, #tpu.memory_space<vmem>>) attributes {dimension_semantics = [#tpu.dimension_semantics<parallel>], iteration_bounds = array<i64: 2>, scalar_prefetch = 0 : i64, scratch_operands = 1 : i64, tpu.core_type = #tpu.core_type<tc>, window_params = [{transform_indices = @transform_0, window_bounds = array<i64: 1, 5, 32>}, {pipeline_mode = #tpu.pipeline_mode<synchronous>, transform_indices = @transform_1, window_bounds = array<i64: 1, 32>}, {pipeline_mode = #tpu.pipeline_mode<synchronous>, transform_indices = @transform_2, window_bounds = array<i64: 1, 32>}, {pipeline_mode = #tpu.pipeline_mode<synchronous>, transform_indices = @transform_3, window_bounds = array<i64: 32, 128>}, {pipeline_mode = #tpu.pipeline_mode<synchronous>, transform_indices = @transform_4, window_bounds = array<i64: 1, 128>}, {pipeline_mode = #tpu.pipeline_mode<synchronous>, transform_indices = @transform_5, window_bounds = array<i64: 9, 128>}, {pipeline_mode = #tpu.pipeline_mode<synchronous>, transform_indices = @transform_6, window_bounds = array<i64: 1, 128>}, {pipeline_mode = #tpu.pipeline_mode<synchronous>, transform_indices = @transform_7, window_bounds = array<i64: 128, 32>}, {pipeline_mode = #tpu.pipeline_mode<synchronous>, transform_indices = @transform_8, window_bounds = array<i64: 1, 32>}, {transform_indices = @transform_9, window_bounds = array<i64: 1, 5, 32>}]} {
    %c0 = arith.constant 0 : index
    %c0_0 = arith.constant 0 : index
    %c0_1 = arith.constant 0 : index
    %0 = vector.load %arg1[%c0, %c0_0, %c0_1] : memref<1x5x32xbf16, #tpu.memory_space<vmem>>, vector<1x5x32xbf16>
    %1 = vector.shape_cast %0 : vector<1x5x32xbf16> to vector<5x32xbf16>
    %2 = arith.extf %1 : vector<5x32xbf16> to vector<5x32xf32>
    %3 = vector.extract_strided_slice %2 {offsets = [0, 0], sizes = [1, 32], strides = [1, 1]} : vector<5x32xf32> to vector<1x32xf32>
    %4 = vector.extract_strided_slice %2 {offsets = [1, 0], sizes = [4, 32], strides = [1, 1]} : vector<5x32xf32> to vector<4x32xf32>
    %cst = arith.constant dense<0.000000e+00> : vector<4xf32>
    %5 = vector.multi_reduction <add>, %4, %cst [1] : vector<4x32xf32> to vector<4xf32>
    %6 = vector.shape_cast %5 : vector<4xf32> to vector<4x1xf32>
    %cst_2 = arith.constant 3.200000e+01 : f32
    %7 = vector.broadcast %cst_2 : f32 to vector<4x1xf32>
    %8 = arith.divf %6, %7 : vector<4x1xf32>
    %9 = vector.broadcast %8 : vector<4x1xf32> to vector<4x32xf32>
    %10 = arith.subf %4, %9 : vector<4x32xf32>
    %11 = arith.mulf %10, %10 : vector<4x32xf32>
    %cst_3 = arith.constant dense<0.000000e+00> : vector<4xf32>
    %12 = vector.multi_reduction <add>, %11, %cst_3 [1] : vector<4x32xf32> to vector<4xf32>
    %13 = vector.shape_cast %12 : vector<4xf32> to vector<4x1xf32>
    %cst_4 = arith.constant 3.200000e+01 : f32
    %14 = vector.broadcast %cst_4 : f32 to vector<4x1xf32>
    %15 = arith.divf %13, %14 : vector<4x1xf32>
    %cst_5 = arith.constant 9.99999974E-6 : f32
    %16 = vector.broadcast %cst_5 : f32 to vector<4x1xf32>
    %17 = arith.addf %15, %16 : vector<4x1xf32>
    %18 = math.rsqrt %17 : vector<4x1xf32>
    %19 = vector.broadcast %18 : vector<4x1xf32> to vector<4x32xf32>
    %20 = arith.mulf %10, %19 : vector<4x32xf32>
    %c0_6 = arith.constant 0 : index
    %c0_7 = arith.constant 0 : index
    %21 = vector.load %arg2[%c0_6, %c0_7] : memref<1x32xf32, #tpu.memory_space<vmem>>, vector<1x32xf32>
    %22 = vector.broadcast %21 : vector<1x32xf32> to vector<4x32xf32>
    %23 = arith.mulf %20, %22 : vector<4x32xf32>
    %c0_8 = arith.constant 0 : index
    %c0_9 = arith.constant 0 : index
    %24 = vector.load %arg3[%c0_8, %c0_9] : memref<1x32xf32, #tpu.memory_space<vmem>>, vector<1x32xf32>
    %25 = vector.broadcast %24 : vector<1x32xf32> to vector<4x32xf32>
    %26 = arith.addf %23, %25 : vector<4x32xf32>
    %27 = arith.truncf %26 : vector<4x32xf32> to vector<4x32xbf16>
    %c0_10 = arith.constant 0 : index
    %c0_11 = arith.constant 0 : index
    %28 = vector.load %arg4[%c0_10, %c0_11] : memref<32x128xbf16, #tpu.memory_space<vmem>>, vector<32x128xbf16>
    %cst_12 = arith.constant dense<0.000000e+00> : vector<4x128xf32>
    %29 = tpu.matmul %27, %28, %cst_12 {dimension_numbers = #tpu.dot_dimension_numbers<[1], [0], [0], [1], [0, 0, 1, 1], [], []>} : vector<4x32xbf16>, vector<32x128xbf16>, vector<4x128xf32> -> vector<4x128xf32>
    %c0_13 = arith.constant 0 : index
    %c0_14 = arith.constant 0 : index
    %30 = vector.load %arg5[%c0_13, %c0_14] : memref<1x128xf32, #tpu.memory_space<vmem>>, vector<1x128xf32>
    %31 = vector.broadcast %30 : vector<1x128xf32> to vector<4x128xf32>
    %32 = arith.addf %29, %31 : vector<4x128xf32>
    %33 = arith.mulf %32, %32 : vector<4x128xf32>
    %34 = arith.mulf %32, %33 : vector<4x128xf32>
    %cst_15 = arith.constant 4.471500e-02 : f32
    %35 = vector.broadcast %cst_15 : f32 to vector<4x128xf32>
    %36 = arith.mulf %35, %34 : vector<4x128xf32>
    %37 = arith.addf %32, %36 : vector<4x128xf32>
    %cst_16 = arith.constant 0.797884583 : f32
    %38 = vector.broadcast %cst_16 : f32 to vector<4x128xf32>
    %39 = arith.mulf %38, %37 : vector<4x128xf32>
    %40 = math.tanh %39 : vector<4x128xf32>
    %cst_17 = arith.constant 1.000000e+00 : f32
    %41 = vector.broadcast %cst_17 : f32 to vector<4x128xf32>
    %42 = arith.addf %41, %40 : vector<4x128xf32>
    %cst_18 = arith.constant 5.000000e-01 : f32
    %43 = vector.broadcast %cst_18 : f32 to vector<4x128xf32>
    %44 = arith.mulf %43, %42 : vector<4x128xf32>
    %45 = arith.mulf %32, %44 : vector<4x128xf32>
    %cst_19 = arith.constant 0.000000e+00 : f32
    %46 = vector.broadcast %cst_19 : f32 to vector<4x4x128xf32>
    %c0_20 = arith.constant 0 : index
    %c0_21 = arith.constant 0 : index
    %c0_22 = arith.constant 0 : index
    %47 = vector.load %arg11[%c0_20, %c0_21, %c0_22] : memref<4x4x128xf32, #tpu.memory_space<vmem>>, vector<4x4x128xf32>
    tpu.vector_store %arg11[%c0_20, %c0_21, %c0_22], %46 {strides = array<i32>} : memref<4x4x128xf32, #tpu.memory_space<vmem>>, vector<4x4x128xf32>,
    %48 = vector.extract_strided_slice %45 {offsets = [0, 0], sizes = [2, 128], strides = [1, 1]} : vector<4x128xf32> to vector<2x128xf32>
    %c1 = arith.constant 1 : index
    %c1_23 = arith.constant 1 : index
    %c0_24 = arith.constant 0 : index
    %49 = vector.load %arg11[%c1, %c1_23, %c0_24] : memref<4x4x128xf32, #tpu.memory_space<vmem>>, vector<1x2x128xf32>
    %50 = vector.shape_cast %49 : vector<1x2x128xf32> to vector<2x128xf32>
    %51 = vector.shape_cast %48 : vector<2x128xf32> to vector<1x2x128xf32>
    tpu.vector_store %arg11[%c1, %c1_23, %c0_24], %51 {strides = array<i32>} : memref<4x4x128xf32, #tpu.memory_space<vmem>>, vector<1x2x128xf32>,
    %52 = vector.extract_strided_slice %45 {offsets = [2, 0], sizes = [2, 128], strides = [1, 1]} : vector<4x128xf32> to vector<2x128xf32>
    %c2 = arith.constant 2 : index
    %c1_25 = arith.constant 1 : index
    %c0_26 = arith.constant 0 : index
    %53 = vector.load %arg11[%c2, %c1_25, %c0_26] : memref<4x4x128xf32, #tpu.memory_space<vmem>>, vector<1x2x128xf32>
    %54 = vector.shape_cast %53 : vector<1x2x128xf32> to vector<2x128xf32>
    %55 = vector.shape_cast %52 : vector<2x128xf32> to vector<1x2x128xf32>
    tpu.vector_store %arg11[%c2, %c1_25, %c0_26], %55 {strides = array<i32>} : memref<4x4x128xf32, #tpu.memory_space<vmem>>, vector<1x2x128xf32>,
    %c0_27 = arith.constant 0 : index
    %c0_28 = arith.constant 0 : index
    %56 = vector.load %arg6[%c0_27, %c0_28] : memref<9x128xf32, #tpu.memory_space<vmem>>, vector<9x128xf32>
    %c0_29 = arith.constant 0 : index
    %c0_30 = arith.constant 0 : index
    %57 = vector.load %arg7[%c0_29, %c0_30] : memref<1x128xf32, #tpu.memory_space<vmem>>, vector<1x128xf32>
    %58 = vector.shape_cast %57 : vector<1x128xf32> to vector<128xf32>
    %cst_31 = arith.constant 0.000000e+00 : f32
    %59 = vector.broadcast %cst_31 : f32 to vector<2x128xf32>
    %c0_32 = arith.constant 0 : index
    %c0_33 = arith.constant 0 : index
    %c0_34 = arith.constant 0 : index
    %60 = vector.load %arg11[%c0_32, %c0_33, %c0_34] : memref<4x4x128xf32, #tpu.memory_space<vmem>>, vector<1x4x128xf32>
    %61 = vector.shape_cast %60 : vector<1x4x128xf32> to vector<4x128xf32>
    %62 = vector.extract_strided_slice %61 {offsets = [0, 0], sizes = [2, 128], strides = [1, 1]} : vector<4x128xf32> to vector<2x128xf32>
    %63 = vector.extract_strided_slice %56 {offsets = [0, 0], sizes = [1, 128], strides = [1, 1]} : vector<9x128xf32> to vector<1x128xf32>
    %64 = vector.shape_cast %63 : vector<1x128xf32> to vector<128xf32>
    %65 = vector.shape_cast %64 : vector<128xf32> to vector<1x128xf32>
    %66 = vector.broadcast %65 : vector<1x128xf32> to vector<2x128xf32>
    %67 = arith.mulf %62, %66 : vector<2x128xf32>
    %68 = arith.addf %59, %67 : vector<2x128xf32>
    %69 = vector.extract_strided_slice %61 {offsets = [1, 0], sizes = [2, 128], strides = [1, 1]} : vector<4x128xf32> to vector<2x128xf32>
    %70 = vector.extract_strided_slice %56 {offsets = [1, 0], sizes = [1, 128], strides = [1, 1]} : vector<9x128xf32> to vector<1x128xf32>
    %71 = vector.shape_cast %70 : vector<1x128xf32> to vector<128xf32>
    %72 = vector.shape_cast %71 : vector<128xf32> to vector<1x128xf32>
    %73 = vector.broadcast %72 : vector<1x128xf32> to vector<2x128xf32>
    %74 = arith.mulf %69, %73 : vector<2x128xf32>
    %75 = arith.addf %68, %74 : vector<2x128xf32>
    %76 = vector.extract_strided_slice %61 {offsets = [2, 0], sizes = [2, 128], strides = [1, 1]} : vector<4x128xf32> to vector<2x128xf32>
    %77 = vector.extract_strided_slice %56 {offsets = [2, 0], sizes = [1, 128], strides = [1, 1]} : vector<9x128xf32> to vector<1x128xf32>
    %78 = vector.shape_cast %77 : vector<1x128xf32> to vector<128xf32>
    %79 = vector.shape_cast %78 : vector<128xf32> to vector<1x128xf32>
    %80 = vector.broadcast %79 : vector<1x128xf32> to vector<2x128xf32>
    %81 = arith.mulf %76, %80 : vector<2x128xf32>
    %82 = arith.addf %75, %81 : vector<2x128xf32>
    %c1_35 = arith.constant 1 : index
    %c0_36 = arith.constant 0 : index
    %c0_37 = arith.constant 0 : index
    %83 = vector.load %arg11[%c1_35, %c0_36, %c0_37] : memref<4x4x128xf32, #tpu.memory_space<vmem>>, vector<1x4x128xf32>
    %84 = vector.shape_cast %83 : vector<1x4x128xf32> to vector<4x128xf32>
    %85 = vector.extract_strided_slice %84 {offsets = [0, 0], sizes = [2, 128], strides = [1, 1]} : vector<4x128xf32> to vector<2x128xf32>
    %86 = vector.extract_strided_slice %56 {offsets = [3, 0], sizes = [1, 128], strides = [1, 1]} : vector<9x128xf32> to vector<1x128xf32>
    %87 = vector.shape_cast %86 : vector<1x128xf32> to vector<128xf32>
    %88 = vector.shape_cast %87 : vector<128xf32> to vector<1x128xf32>
    %89 = vector.broadcast %88 : vector<1x128xf32> to vector<2x128xf32>
    %90 = arith.mulf %85, %89 : vector<2x128xf32>
    %91 = arith.addf %82, %90 : vector<2x128xf32>
    %92 = vector.extract_strided_slice %84 {offsets = [1, 0], sizes = [2, 128], strides = [1, 1]} : vector<4x128xf32> to vector<2x128xf32>
    %93 = vector.extract_strided_slice %56 {offsets = [4, 0], sizes = [1, 128], strides = [1, 1]} : vector<9x128xf32> to vector<1x128xf32>
    %94 = vector.shape_cast %93 : vector<1x128xf32> to vector<128xf32>
    %95 = vector.shape_cast %94 : vector<128xf32> to vector<1x128xf32>
    %96 = vector.broadcast %95 : vector<1x128xf32> to vector<2x128xf32>
    %97 = arith.mulf %92, %96 : vector<2x128xf32>
    %98 = arith.addf %91, %97 : vector<2x128xf32>
    %99 = vector.extract_strided_slice %84 {offsets = [2, 0], sizes = [2, 128], strides = [1, 1]} : vector<4x128xf32> to vector<2x128xf32>
    %100 = vector.extract_strided_slice %56 {offsets = [5, 0], sizes = [1, 128], strides = [1, 1]} : vector<9x128xf32> to vector<1x128xf32>
    %101 = vector.shape_cast %100 : vector<1x128xf32> to vector<128xf32>
    %102 = vector.shape_cast %101 : vector<128xf32> to vector<1x128xf32>
    %103 = vector.broadcast %102 : vector<1x128xf32> to vector<2x128xf32>
    %104 = arith.mulf %99, %103 : vector<2x128xf32>
    %105 = arith.addf %98, %104 : vector<2x128xf32>
    %c2_38 = arith.constant 2 : index
    %c0_39 = arith.constant 0 : index
    %c0_40 = arith.constant 0 : index
    %106 = vector.load %arg11[%c2_38, %c0_39, %c0_40] : memref<4x4x128xf32, #tpu.memory_space<vmem>>, vector<1x4x128xf32>
    %107 = vector.shape_cast %106 : vector<1x4x128xf32> to vector<4x128xf32>
    %108 = vector.extract_strided_slice %107 {offsets = [0, 0], sizes = [2, 128], strides = [1, 1]} : vector<4x128xf32> to vector<2x128xf32>
    %109 = vector.extract_strided_slice %56 {offsets = [6, 0], sizes = [1, 128], strides = [1, 1]} : vector<9x128xf32> to vector<1x128xf32>
    %110 = vector.shape_cast %109 : vector<1x128xf32> to vector<128xf32>
    %111 = vector.shape_cast %110 : vector<128xf32> to vector<1x128xf32>
    %112 = vector.broadcast %111 : vector<1x128xf32> to vector<2x128xf32>
    %113 = arith.mulf %108, %112 : vector<2x128xf32>
    %114 = arith.addf %105, %113 : vector<2x128xf32>
    %115 = vector.extract_strided_slice %107 {offsets = [1, 0], sizes = [2, 128], strides = [1, 1]} : vector<4x128xf32> to vector<2x128xf32>
    %116 = vector.extract_strided_slice %56 {offsets = [7, 0], sizes = [1, 128], strides = [1, 1]} : vector<9x128xf32> to vector<1x128xf32>
    %117 = vector.shape_cast %116 : vector<1x128xf32> to vector<128xf32>
    %118 = vector.shape_cast %117 : vector<128xf32> to vector<1x128xf32>
    %119 = vector.broadcast %118 : vector<1x128xf32> to vector<2x128xf32>
    %120 = arith.mulf %115, %119 : vector<2x128xf32>
    %121 = arith.addf %114, %120 : vector<2x128xf32>
    %122 = vector.extract_strided_slice %107 {offsets = [2, 0], sizes = [2, 128], strides = [1, 1]} : vector<4x128xf32> to vector<2x128xf32>
    %123 = vector.extract_strided_slice %56 {offsets = [8, 0], sizes = [1, 128], strides = [1, 1]} : vector<9x128xf32> to vector<1x128xf32>
    %124 = vector.shape_cast %123 : vector<1x128xf32> to vector<128xf32>
    %125 = vector.shape_cast %124 : vector<128xf32> to vector<1x128xf32>
    %126 = vector.broadcast %125 : vector<1x128xf32> to vector<2x128xf32>
    %127 = arith.mulf %122, %126 : vector<2x128xf32>
    %128 = arith.addf %121, %127 : vector<2x128xf32>
    %129 = vector.shape_cast %58 : vector<128xf32> to vector<1x128xf32>
    %130 = vector.broadcast %129 : vector<1x128xf32> to vector<2x128xf32>
    %131 = arith.addf %128, %130 : vector<2x128xf32>
    %132 = arith.mulf %131, %131 : vector<2x128xf32>
    %133 = arith.mulf %131, %132 : vector<2x128xf32>
    %cst_41 = arith.constant 4.471500e-02 : f32
    %134 = vector.broadcast %cst_41 : f32 to vector<2x128xf32>
    %135 = arith.mulf %134, %133 : vector<2x128xf32>
    %136 = arith.addf %131, %135 : vector<2x128xf32>
    %cst_42 = arith.constant 0.797884583 : f32
    %137 = vector.broadcast %cst_42 : f32 to vector<2x128xf32>
    %138 = arith.mulf %137, %136 : vector<2x128xf32>
    %139 = math.tanh %138 : vector<2x128xf32>
    %cst_43 = arith.constant 1.000000e+00 : f32
    %140 = vector.broadcast %cst_43 : f32 to vector<2x128xf32>
    %141 = arith.addf %140, %139 : vector<2x128xf32>
    %cst_44 = arith.constant 5.000000e-01 : f32
    %142 = vector.broadcast %cst_44 : f32 to vector<2x128xf32>
    %143 = arith.mulf %142, %141 : vector<2x128xf32>
    %144 = arith.mulf %131, %143 : vector<2x128xf32>
    %cst_45 = arith.constant 0.000000e+00 : f32
    %145 = vector.broadcast %cst_45 : f32 to vector<2x128xf32>
    %c1_46 = arith.constant 1 : index
    %c0_47 = arith.constant 0 : index
    %c0_48 = arith.constant 0 : index
    %146 = vector.load %arg11[%c1_46, %c0_47, %c0_48] : memref<4x4x128xf32, #tpu.memory_space<vmem>>, vector<1x4x128xf32>
    %147 = vector.shape_cast %146 : vector<1x4x128xf32> to vector<4x128xf32>
    %148 = vector.extract_strided_slice %147 {offsets = [0, 0], sizes = [2, 128], strides = [1, 1]} : vector<4x128xf32> to vector<2x128xf32>
    %149 = vector.extract_strided_slice %56 {offsets = [0, 0], sizes = [1, 128], strides = [1, 1]} : vector<9x128xf32> to vector<1x128xf32>
    %150 = vector.shape_cast %149 : vector<1x128xf32> to vector<128xf32>
    %151 = vector.shape_cast %150 : vector<128xf32> to vector<1x128xf32>
    %152 = vector.broadcast %151 : vector<1x128xf32> to vector<2x128xf32>
    %153 = arith.mulf %148, %152 : vector<2x128xf32>
    %154 = arith.addf %145, %153 : vector<2x128xf32>
    %155 = vector.extract_strided_slice %147 {offsets = [1, 0], sizes = [2, 128], strides = [1, 1]} : vector<4x128xf32> to vector<2x128xf32>
    %156 = vector.extract_strided_slice %56 {offsets = [1, 0], sizes = [1, 128], strides = [1, 1]} : vector<9x128xf32> to vector<1x128xf32>
    %157 = vector.shape_cast %156 : vector<1x128xf32> to vector<128xf32>
    %158 = vector.shape_cast %157 : vector<128xf32> to vector<1x128xf32>
    %159 = vector.broadcast %158 : vector<1x128xf32> to vector<2x128xf32>
    %160 = arith.mulf %155, %159 : vector<2x128xf32>
    %161 = arith.addf %154, %160 : vector<2x128xf32>
    %162 = vector.extract_strided_slice %147 {offsets = [2, 0], sizes = [2, 128], strides = [1, 1]} : vector<4x128xf32> to vector<2x128xf32>
    %163 = vector.extract_strided_slice %56 {offsets = [2, 0], sizes = [1, 128], strides = [1, 1]} : vector<9x128xf32> to vector<1x128xf32>
    %164 = vector.shape_cast %163 : vector<1x128xf32> to vector<128xf32>
    %165 = vector.shape_cast %164 : vector<128xf32> to vector<1x128xf32>
    %166 = vector.broadcast %165 : vector<1x128xf32> to vector<2x128xf32>
    %167 = arith.mulf %162, %166 : vector<2x128xf32>
    %168 = arith.addf %161, %167 : vector<2x128xf32>
    %c2_49 = arith.constant 2 : index
    %c0_50 = arith.constant 0 : index
    %c0_51 = arith.constant 0 : index
    %169 = vector.load %arg11[%c2_49, %c0_50, %c0_51] : memref<4x4x128xf32, #tpu.memory_space<vmem>>, vector<1x4x128xf32>
    %170 = vector.shape_cast %169 : vector<1x4x128xf32> to vector<4x128xf32>
    %171 = vector.extract_strided_slice %170 {offsets = [0, 0], sizes = [2, 128], strides = [1, 1]} : vector<4x128xf32> to vector<2x128xf32>
    %172 = vector.extract_strided_slice %56 {offsets = [3, 0], sizes = [1, 128], strides = [1, 1]} : vector<9x128xf32> to vector<1x128xf32>
    %173 = vector.shape_cast %172 : vector<1x128xf32> to vector<128xf32>
    %174 = vector.shape_cast %173 : vector<128xf32> to vector<1x128xf32>
    %175 = vector.broadcast %174 : vector<1x128xf32> to vector<2x128xf32>
    %176 = arith.mulf %171, %175 : vector<2x128xf32>
    %177 = arith.addf %168, %176 : vector<2x128xf32>
    %178 = vector.extract_strided_slice %170 {offsets = [1, 0], sizes = [2, 128], strides = [1, 1]} : vector<4x128xf32> to vector<2x128xf32>
    %179 = vector.extract_strided_slice %56 {offsets = [4, 0], sizes = [1, 128], strides = [1, 1]} : vector<9x128xf32> to vector<1x128xf32>
    %180 = vector.shape_cast %179 : vector<1x128xf32> to vector<128xf32>
    %181 = vector.shape_cast %180 : vector<128xf32> to vector<1x128xf32>
    %182 = vector.broadcast %181 : vector<1x128xf32> to vector<2x128xf32>
    %183 = arith.mulf %178, %182 : vector<2x128xf32>
    %184 = arith.addf %177, %183 : vector<2x128xf32>
    %185 = vector.extract_strided_slice %170 {offsets = [2, 0], sizes = [2, 128], strides = [1, 1]} : vector<4x128xf32> to vector<2x128xf32>
    %186 = vector.extract_strided_slice %56 {offsets = [5, 0], sizes = [1, 128], strides = [1, 1]} : vector<9x128xf32> to vector<1x128xf32>
    %187 = vector.shape_cast %186 : vector<1x128xf32> to vector<128xf32>
    %188 = vector.shape_cast %187 : vector<128xf32> to vector<1x128xf32>
    %189 = vector.broadcast %188 : vector<1x128xf32> to vector<2x128xf32>
    %190 = arith.mulf %185, %189 : vector<2x128xf32>
    %191 = arith.addf %184, %190 : vector<2x128xf32>
    %c3 = arith.constant 3 : index
    %c0_52 = arith.constant 0 : index
    %c0_53 = arith.constant 0 : index
    %192 = vector.load %arg11[%c3, %c0_52, %c0_53] : memref<4x4x128xf32, #tpu.memory_space<vmem>>, vector<1x4x128xf32>
    %193 = vector.shape_cast %192 : vector<1x4x128xf32> to vector<4x128xf32>
    %194 = vector.extract_strided_slice %193 {offsets = [0, 0], sizes = [2, 128], strides = [1, 1]} : vector<4x128xf32> to vector<2x128xf32>
    %195 = vector.extract_strided_slice %56 {offsets = [6, 0], sizes = [1, 128], strides = [1, 1]} : vector<9x128xf32> to vector<1x128xf32>
    %196 = vector.shape_cast %195 : vector<1x128xf32> to vector<128xf32>
    %197 = vector.shape_cast %196 : vector<128xf32> to vector<1x128xf32>
    %198 = vector.broadcast %197 : vector<1x128xf32> to vector<2x128xf32>
    %199 = arith.mulf %194, %198 : vector<2x128xf32>
    %200 = arith.addf %191, %199 : vector<2x128xf32>
    %201 = vector.extract_strided_slice %193 {offsets = [1, 0], sizes = [2, 128], strides = [1, 1]} : vector<4x128xf32> to vector<2x128xf32>
    %202 = vector.extract_strided_slice %56 {offsets = [7, 0], sizes = [1, 128], strides = [1, 1]} : vector<9x128xf32> to vector<1x128xf32>
    %203 = vector.shape_cast %202 : vector<1x128xf32> to vector<128xf32>
    %204 = vector.shape_cast %203 : vector<128xf32> to vector<1x128xf32>
    %205 = vector.broadcast %204 : vector<1x128xf32> to vector<2x128xf32>
    %206 = arith.mulf %201, %205 : vector<2x128xf32>
    %207 = arith.addf %200, %206 : vector<2x128xf32>
    %208 = vector.extract_strided_slice %193 {offsets = [2, 0], sizes = [2, 128], strides = [1, 1]} : vector<4x128xf32> to vector<2x128xf32>
    %209 = vector.extract_strided_slice %56 {offsets = [8, 0], sizes = [1, 128], strides = [1, 1]} : vector<9x128xf32> to vector<1x128xf32>
    %210 = vector.shape_cast %209 : vector<1x128xf32> to vector<128xf32>
    %211 = vector.shape_cast %210 : vector<128xf32> to vector<1x128xf32>
    %212 = vector.broadcast %211 : vector<1x128xf32> to vector<2x128xf32>
    %213 = arith.mulf %208, %212 : vector<2x128xf32>
    %214 = arith.addf %207, %213 : vector<2x128xf32>
    %215 = vector.shape_cast %58 : vector<128xf32> to vector<1x128xf32>
    %216 = vector.broadcast %215 : vector<1x128xf32> to vector<2x128xf32>
    %217 = arith.addf %214, %216 : vector<2x128xf32>
    %218 = arith.mulf %217, %217 : vector<2x128xf32>
    %219 = arith.mulf %217, %218 : vector<2x128xf32>
    %cst_54 = arith.constant 4.471500e-02 : f32
    %220 = vector.broadcast %cst_54 : f32 to vector<2x128xf32>
    %221 = arith.mulf %220, %219 : vector<2x128xf32>
    %222 = arith.addf %217, %221 : vector<2x128xf32>
    %cst_55 = arith.constant 0.797884583 : f32
    %223 = vector.broadcast %cst_55 : f32 to vector<2x128xf32>
    %224 = arith.mulf %223, %222 : vector<2x128xf32>
    %225 = math.tanh %224 : vector<2x128xf32>
    %cst_56 = arith.constant 1.000000e+00 : f32
    %226 = vector.broadcast %cst_56 : f32 to vector<2x128xf32>
    %227 = arith.addf %226, %225 : vector<2x128xf32>
    %cst_57 = arith.constant 5.000000e-01 : f32
    %228 = vector.broadcast %cst_57 : f32 to vector<2x128xf32>
    %229 = arith.mulf %228, %227 : vector<2x128xf32>
    %230 = arith.mulf %217, %229 : vector<2x128xf32>
    %231 = tpu.concatenate %144, %230 in 0 : vector<2x128xf32>, vector<2x128xf32> -> vector<4x128xf32>
    %232 = arith.truncf %231 : vector<4x128xf32> to vector<4x128xbf16>
    %c0_58 = arith.constant 0 : index
    %c0_59 = arith.constant 0 : index
    %233 = vector.load %arg8[%c0_58, %c0_59] : memref<128x32xbf16, #tpu.memory_space<vmem>>, vector<128x32xbf16>
    %cst_60 = arith.constant dense<0.000000e+00> : vector<4x32xf32>
    %234 = tpu.matmul %232, %233, %cst_60 {dimension_numbers = #tpu.dot_dimension_numbers<[1], [0], [0], [1], [0, 0, 1, 1], [], []>} : vector<4x128xbf16>, vector<128x32xbf16>, vector<4x32xf32> -> vector<4x32xf32>
    %c0_61 = arith.constant 0 : index
    %c0_62 = arith.constant 0 : index
    %235 = vector.load %arg9[%c0_61, %c0_62] : memref<1x32xf32, #tpu.memory_space<vmem>>, vector<1x32xf32>
    %236 = vector.broadcast %235 : vector<1x32xf32> to vector<4x32xf32>
    %237 = arith.addf %234, %236 : vector<4x32xf32>
    %238 = arith.mulf %237, %237 : vector<4x32xf32>
    %239 = arith.mulf %237, %238 : vector<4x32xf32>
    %cst_63 = arith.constant 4.471500e-02 : f32
    %240 = vector.broadcast %cst_63 : f32 to vector<4x32xf32>
    %241 = arith.mulf %240, %239 : vector<4x32xf32>
    %242 = arith.addf %237, %241 : vector<4x32xf32>
    %cst_64 = arith.constant 0.797884583 : f32
    %243 = vector.broadcast %cst_64 : f32 to vector<4x32xf32>
    %244 = arith.mulf %243, %242 : vector<4x32xf32>
    %245 = math.tanh %244 : vector<4x32xf32>
    %cst_65 = arith.constant 1.000000e+00 : f32
    %246 = vector.broadcast %cst_65 : f32 to vector<4x32xf32>
    %247 = arith.addf %246, %245 : vector<4x32xf32>
    %cst_66 = arith.constant 5.000000e-01 : f32
    %248 = vector.broadcast %cst_66 : f32 to vector<4x32xf32>
    %249 = arith.mulf %248, %247 : vector<4x32xf32>
    %250 = arith.mulf %237, %249 : vector<4x32xf32>
    %251 = arith.addf %250, %4 : vector<4x32xf32>
    %252 = tpu.concatenate %3, %251 in 0 : vector<1x32xf32>, vector<4x32xf32> -> vector<5x32xf32>
    %253 = arith.truncf %252 : vector<5x32xf32> to vector<5x32xbf16>
    %c0_67 = arith.constant 0 : index
    %c0_68 = arith.constant 0 : index
    %c0_69 = arith.constant 0 : index
    %254 = vector.load %arg10[%c0_67, %c0_68, %c0_69] : memref<1x5x32xbf16, #tpu.memory_space<vmem>>, vector<1x5x32xbf16>
    %255 = vector.shape_cast %254 : vector<1x5x32xbf16> to vector<5x32xbf16>
    %256 = vector.shape_cast %253 : vector<5x32xbf16> to vector<1x5x32xbf16>
    tpu.vector_store %arg10[%c0_67, %c0_68, %c0_69], %256 {strides = array<i32>} : memref<1x5x32xbf16, #tpu.memory_space<vmem>>, vector<1x5x32xbf16>,
    return
  }
  func.func @transform_0(%arg0: i32) -> (i32, i32, i32) {
    %c0_i32 = arith.constant 0 : i32
    %c0_i32_0 = arith.constant 0 : i32
    %c0_i32_1 = arith.constant 0 : i32
    return %arg0, %c0_i32, %c0_i32_0 : i32, i32, i32
  }
  func.func @transform_1(%arg0: i32) -> (i32, i32) {
    %c0_i32 = arith.constant 0 : i32
    %c0_i32_0 = arith.constant 0 : i32
    %c0_i32_1 = arith.constant 0 : i32
    return %c0_i32, %c0_i32_0 : i32, i32
  }
  func.func @transform_2(%arg0: i32) -> (i32, i32) {
    %c0_i32 = arith.constant 0 : i32
    %c0_i32_0 = arith.constant 0 : i32
    %c0_i32_1 = arith.constant 0 : i32
    return %c0_i32, %c0_i32_0 : i32, i32
  }
  func.func @transform_3(%arg0: i32) -> (i32, i32) {
    %c0_i32 = arith.constant 0 : i32
    %c0_i32_0 = arith.constant 0 : i32
    %c0_i32_1 = arith.constant 0 : i32
    return %c0_i32, %c0_i32_0 : i32, i32
  }
  func.func @transform_4(%arg0: i32) -> (i32, i32) {
    %c0_i32 = arith.constant 0 : i32
    %c0_i32_0 = arith.constant 0 : i32
    %c0_i32_1 = arith.constant 0 : i32
    return %c0_i32, %c0_i32_0 : i32, i32
  }
  func.func @transform_5(%arg0: i32) -> (i32, i32) {
    %c0_i32 = arith.constant 0 : i32
    %c0_i32_0 = arith.constant 0 : i32
    %c0_i32_1 = arith.constant 0 : i32
    return %c0_i32, %c0_i32_0 : i32, i32
  }
  func.func @transform_6(%arg0: i32) -> (i32, i32) {
    %c0_i32 = arith.constant 0 : i32
    %c0_i32_0 = arith.constant 0 : i32
    %c0_i32_1 = arith.constant 0 : i32
    return %c0_i32, %c0_i32_0 : i32, i32
  }
  func.func @transform_7(%arg0: i32) -> (i32, i32) {
    %c0_i32 = arith.constant 0 : i32
    %c0_i32_0 = arith.constant 0 : i32
    %c0_i32_1 = arith.constant 0 : i32
    return %c0_i32, %c0_i32_0 : i32, i32
  }
  func.func @transform_8(%arg0: i32) -> (i32, i32) {
    %c0_i32 = arith.constant 0 : i32
    %c0_i32_0 = arith.constant 0 : i32
    %c0_i32_1 = arith.constant 0 : i32
    return %c0_i32, %c0_i32_0 : i32, i32
  }
  func.func @transform_9(%arg0: i32) -> (i32, i32, i32) {
    %c0_i32 = arith.constant 0 : i32
    %c0_i32_0 = arith.constant 0 : i32
    %c0_i32_1 = arith.constant 0 : i32
    return %arg0, %c0_i32, %c0_i32_0 : i32, i32, i32
  }
}

</mosaic_0001>

<llo_original>
// kernel: _lambda_.9
$region0: #{_lambda_.9}
  #allocation0 [shape = 'u32[]', space=smem, size = 0x4, offset = 0x4, fixed_abs, tag = 'smem constant byte address 0x4 - core index']
  #allocation1 [shape = 'u32[144,128]{1,0:T(1,128)}', space=vmem, size = 0x12000, scoped, tag = 'internal scratch']
  %s0 = inlined_call_operand.vmem [shape: bf16[2,9,9,8], index: 0, kind: input, shape index: {}]
  %s1 = inlined_call_operand.vmem [shape: bf16[2,7,7,8], index: 1, kind: output, shape index: {}]
  %s2 = sld [smem:[#allocation0]]
  $region37: #{_lambda_.9} parent=0
    _
  %s4 = ssub.s32 1, %s2
  %s5 = scalar_select 0, %s4, %s2
  loop: start=0, step=1, limit=4
  $region2: #{_lambda_.9} parent=0 // loop_pre_header
    _
  $region3: #{_lambda_.9} parent=0 // loop_header
    %s7 = sphi 0, %s11
    %p8 = scmp.ge.s32.totalorder %s7, 4
    %s17 = sphi 0, %s19
    %s20 = sphi 0, %s17
    %s21 = sphi 0, %s20
    %s37 = sphi 0, %s21
    %s43 = sphi 0, %s45
    %s46 = sphi 0, %s43
    %s47 = sphi 0, %s46
    %s63 = sphi 0, %s47
  $region4: #{_lambda_.9} parent=0 // loop_header_branch
    %10 = sbr.rel (%p8) target = $region8
  $region5: #{_lambda_.9} parent=0 // loop_body
    %s12 = ssub.s32 %s7, 1
    %s13 = ssub.s32 %s7, 2
    %s14 = sadd.s32 %s7, 1
    %s15 = ssub.s32 %s7, %s14
    %p16 = scmp.eq.s32.totalorder %s15, 0
    %s18 = sadd.s32 %s17, 1
    %s19 = scalar_select %p16, %s17, %s18
    %p22 = pneg %p16
    %p23 = scmp.eq.s32.totalorder %s7, 1
    %p24 = por %p22, %p23
    %p25 = scmp.ne.s32.totalorder %s17, %s20
    %p26 = scmp.eq.s32.totalorder %s7, 0
    %p27 = por %p25, %p26
    %p28 = scmp.ne.s32.totalorder %s17, %s20
    %p29 = scmp.eq.s32.totalorder %s12, 1
    %p30 = por %p28, %p29
    %p31 = scmp.ne.s32.totalorder %s20, %s21
    %p32 = scmp.eq.s32.totalorder %s12, 0
    %p33 = por %p31, %p32
    %p34 = scmp.ne.s32.totalorder %s20, %s21
    %p35 = scmp.eq.s32.totalorder %s13, 1
    %p36 = por %p34, %p35
    %p38 = scmp.ne.s32.totalorder %s21, %s37
    %p39 = scmp.eq.s32.totalorder %s13, 0
    %p40 = por %p38, %p39
    %s41 = ssub.s32 %s7, %s14
    %p42 = scmp.eq.s32.totalorder %s41, 0
    %s44 = sadd.s32 %s43, 1
    %s45 = scalar_select %p42, %s43, %s44
    %p48 = pneg %p42
    %p49 = scmp.eq.s32.totalorder %s7, 1
    %p50 = por %p48, %p49
    %p51 = scmp.ne.s32.totalorder %s43, %s46
    %p52 = scmp.eq.s32.totalorder %s7, 0
    %p53 = por %p51, %p52
    %p54 = scmp.ne.s32.totalorder %s43, %s46
    %p55 = scmp.eq.s32.totalorder %s12, 1
    %p56 = por %p54, %p55
    %p57 = scmp.ne.s32.totalorder %s46, %s47
    %p58 = scmp.eq.s32.totalorder %s12, 0
    %p59 = por %p57, %p58
    %p60 = scmp.ne.s32.totalorder %s46, %s47
    %p61 = scmp.eq.s32.totalorder %s13, 1
    %p62 = por %p60, %p61
    %p64 = scmp.ne.s32.totalorder %s47, %s63
    %p65 = scmp.eq.s32.totalorder %s13, 0
    %p66 = por %p64, %p65
    %p67 = scmp.le.s32.totalorder 1, %s7
    %p68 = scmp.lt.s32.totalorder %s7, 3
    %p69 = pnand %p67, %p68
    %p70 = pneg %p69
    // Predicated region
    $region9: #{_lambda_.9} parent=5 // pred_check
      _
    $region10: #{_lambda_.9} parent=5 // pred_check_branch
      %72 = sbr.rel (%p69) target = $region12
    $region11: #{_lambda_.9} parent=5 // pred_region
      %s73 = ssub.s32 %s7, 1
    $region12: #{_lambda_.9} parent=5 // pred_fallthru
      _
    %p74 = scmp.lt.s32.totalorder %s7, 2
    // Predicated region
    $region13: #{_lambda_.9} parent=5 // pred_check
      %p75 = pneg %p74
    $region14: #{_lambda_.9} parent=5 // pred_check_branch
      %77 = sbr.rel (%p75) target = $region16
    $region15: #{_lambda_.9} parent=5 // pred_region
      // Predicated region
      $region17: #{_lambda_.9} parent=15 // pred_check
        %p78 = pneg %p27
      $region18: #{_lambda_.9} parent=15 // pred_check_branch
        %80 = sbr.rel (%p78) target = $region20
      $region19: #{_lambda_.9} parent=15 // pred_region
        %p81 = scmp.lt.s32.totalorder %s7, 1
        %s82 = scalar_select %p81, %s7, 1
        %s83 = smul.addr %s82, 18
        %s84 = smul.addr %s83, 4
        %s85 = scalar_lea.vmem %s0, %s84
      $region20: #{_lambda_.9} parent=15 // pred_fallthru
        _
    $region16: #{_lambda_.9} parent=5 // pred_fallthru
      _
    %p86 = scmp.le.s32.totalorder 1, %s7
    %p87 = scmp.lt.s32.totalorder %s7, 3
    %p88 = pnand %p86, %p87
    %p89 = pneg %p88
    // Predicated region
    $region21: #{_lambda_.9} parent=5 // pred_check
      _
    $region22: #{_lambda_.9} parent=5 // pred_check_branch
      %91 = sbr.rel (%p88) target = $region24
    $region23: #{_lambda_.9} parent=5 // pred_region
      %s92 = ssub.s32 %s7, 1
      %p93 = scmp.lt.s32.totalorder %s12, 1
      %s94 = scalar_select %p93, %s12, 1
      %s95 = smul.addr %s94, 18
      %s96 = smul.addr %s95, 4
      %s97 = scalar_lea.vmem %s0, %s96
      %p98 = pneg %p33
      %p99 = pneg %p30
      %p100 = pneg %p59
      %p101 = pneg %p56
      %p102 = scmp.lt.s32.totalorder %s12, 1
      %s103 = scalar_select %p102, %s12, 1
      %s104 = smul.addr %s103, 7
      %s105 = smul.addr %s104, 4
      %s106 = scalar_lea.vmem %s1, %s105
      %p107 = scmp.lt.s32.totalorder %s12, 1
      %s108 = scalar_select %p107, %s12, 1
      %s109 = smul.addr %s108, 18
      %s110 = smul.addr %s109, 4
      %s111 = scalar_lea.vmem %s0, %s110
      %p112 = scmp.lt.s32.totalorder %s12, 1
      %s113 = scalar_select %p112, %s12, 1
      %s114 = smul.addr %s113, 7
      %s115 = smul.addr %s114, 4
      %s116 = scalar_lea.vmem %s1, %s115
      %v117 = vld [vmem:[%s111] sm:$0xf]
      %v118 = vld [vmem:[%s111 + $0x4] sm:$0x1]
      %v119 = vld [vmem:[%s111 + $0x8] sm:$0xf]
      %v120 = vld [vmem:[%s111 + $0xc] sm:$0x1]
      %v121 = vld [vmem:[%s111 + $0x10] sm:$0xf]
      %v122 = vld [vmem:[%s111 + $0x14] sm:$0x1]
      %v123 = vld [vmem:[%s111 + $0x18] sm:$0xf]
      %v124 = vld [vmem:[%s111 + $0x1c] sm:$0x1]
      %v125 = vld [vmem:[%s111 + $0x20] sm:$0xf]
      %v126 = vld [vmem:[%s111 + $0x24] sm:$0x1]
      %v127 = vld [vmem:[%s111 + $0x28] sm:$0xf]
      %v128 = vld [vmem:[%s111 + $0x2c] sm:$0x1]
      %v129 = vld [vmem:[%s111 + $0x30] sm:$0xf]
      %v130 = vld [vmem:[%s111 + $0x34] sm:$0x1]
      %v131 = vld [vmem:[%s111 + $0x38] sm:$0xf]
      %v132 = vld [vmem:[%s111 + $0x3c] sm:$0x1]
      %v133 = vld [vmem:[%s111 + $0x40] sm:$0xf]
      %v134 = vld [vmem:[%s111 + $0x44] sm:$0x1]
      %v136 = vshrl.u32 %v117, 16
      %v138 = vrot.slane %v136, 4
      %v139 = vshll.u32 %v117, 16
      %v141 = vrot.slane %v139, 5
      %v142 = vor.u32 %v138, %v141
      %v143 = vrot.slane %v142, 4
      %v145 = vshrl.u32 %v119, 16
      %v147 = vrot.slane %v145, 4
      %v148 = vshll.u32 %v119, 16
      %v150 = vrot.slane %v148, 5
      %v151 = vor.u32 %v147, %v150
      %v152 = vrot.slane %v151, 4
      %v154 = vshrl.u32 %v121, 16
      %v156 = vrot.slane %v154, 4
      %v157 = vshll.u32 %v121, 16
      %v159 = vrot.slane %v157, 5
      %v160 = vor.u32 %v156, %v159
      %v161 = vrot.slane %v160, 4
      %v163 = vshrl.u32 %v123, 16
      %v165 = vrot.slane %v163, 4
      %v166 = vshll.u32 %v123, 16
      %v168 = vrot.slane %v166, 5
      %v169 = vor.u32 %v165, %v168
      %v170 = vrot.slane %v169, 4
      %v172 = vshrl.u32 %v125, 16
      %v174 = vrot.slane %v172, 4
      %v175 = vshll.u32 %v125, 16
      %v177 = vrot.slane %v175, 5
      %v178 = vor.u32 %v174, %v177
      %v179 = vrot.slane %v178, 4
      %v181 = vshrl.u32 %v127, 16
      %v183 = vrot.slane %v181, 4
      %v184 = vshll.u32 %v127, 16
      %v186 = vrot.slane %v184, 5
      %v187 = vor.u32 %v183, %v186
      %v188 = vrot.slane %v187, 4
      %v190 = vshrl.u32 %v129, 16
      %v192 = vrot.slane %v190, 4
      %v193 = vshll.u32 %v129, 16
      %v195 = vrot.slane %v193, 5
      %v196 = vor.u32 %v192, %v195
      %v197 = vrot.slane %v196, 4
      %v205 = vmax.bf16 %v117, %v143
      %v206 = vmax.bf16 %v119, %v152
      %v207 = vmax.bf16 %v121, %v161
      %v208 = vmax.bf16 %v123, %v170
      %v209 = vmax.bf16 %v125, %v179
      %v210 = vmax.bf16 %v127, %v188
      %v211 = vmax.bf16 %v129, %v197
      %vm226 = vcmask 1042432
      %vm227 = vcmask 1046532
      %vm228 = vmor %vm226, %vm227
      %v229 = vrot.slane %v117, 5
      %v230 = vrot.slane %v229, 4
      %v231 = vrot.slane %v118, 5
      %v232 = vsel %vm228, %v230, %v231
      %v233 = vrot.slane %v119, 5
      %v234 = vrot.slane %v233, 4
      %v235 = vrot.slane %v120, 5
      %v236 = vsel %vm228, %v234, %v235
      %v237 = vrot.slane %v121, 5
      %v238 = vrot.slane %v237, 4
      %v239 = vrot.slane %v122, 5
      %v240 = vsel %vm228, %v238, %v239
      %v241 = vrot.slane %v123, 5
      %v242 = vrot.slane %v241, 4
      %v243 = vrot.slane %v124, 5
      %v244 = vsel %vm228, %v242, %v243
      %v245 = vrot.slane %v125, 5
      %v246 = vrot.slane %v245, 4
      %v247 = vrot.slane %v126, 5
      %v248 = vsel %vm228, %v246, %v247
      %v249 = vrot.slane %v127, 5
      %v250 = vrot.slane %v249, 4
      %v251 = vrot.slane %v128, 5
      %v252 = vsel %vm228, %v250, %v251
      %v253 = vrot.slane %v129, 5
      %v254 = vrot.slane %v253, 4
      %v255 = vrot.slane %v130, 5
      %v256 = vsel %vm228, %v254, %v255
      %v264 = vmax.bf16 %v205, %v232
      %v265 = vmax.bf16 %v206, %v236
      %v266 = vmax.bf16 %v207, %v240
      %v267 = vmax.bf16 %v208, %v244
      %v268 = vmax.bf16 %v209, %v248
      %v269 = vmax.bf16 %v210, %v252
      %v270 = vmax.bf16 %v211, %v256
      %v271 = vmax.bf16 %v264, %v119
      %v272 = vmax.bf16 %v265, %v121
      %v273 = vmax.bf16 %v266, %v123
      %v274 = vmax.bf16 %v267, %v125
      %v275 = vmax.bf16 %v268, %v127
      %v276 = vmax.bf16 %v269, %v129
      %v277 = vmax.bf16 %v270, %v131
      %v279 = vshrl.u32 %v131, 16
      %v281 = vrot.slane %v279, 4
      %v282 = vshll.u32 %v131, 16
      %v284 = vrot.slane %v282, 5
      %v285 = vor.u32 %v281, %v284
      %v286 = vrot.slane %v285, 4
      %v288 = vmax.bf16 %v271, %v152
      %v289 = vmax.bf16 %v272, %v161
      %v290 = vmax.bf16 %v273, %v170
      %v291 = vmax.bf16 %v274, %v179
      %v292 = vmax.bf16 %v275, %v188
      %v293 = vmax.bf16 %v276, %v197
      %v294 = vmax.bf16 %v277, %v286
      %v297 = vrot.slane %v131, 5
      %v298 = vrot.slane %v297, 4
      %v299 = vrot.slane %v132, 5
      %v300 = vsel %vm228, %v298, %v299
      %v302 = vmax.bf16 %v288, %v236
      %v303 = vmax.bf16 %v289, %v240
      %v304 = vmax.bf16 %v290, %v244
      %v305 = vmax.bf16 %v291, %v248
      %v306 = vmax.bf16 %v292, %v252
      %v307 = vmax.bf16 %v293, %v256
      %v308 = vmax.bf16 %v294, %v300
      %v309 = vmax.bf16 %v302, %v121
      %v310 = vmax.bf16 %v303, %v123
      %v311 = vmax.bf16 %v304, %v125
      %v312 = vmax.bf16 %v305, %v127
      %v313 = vmax.bf16 %v306, %v129
      %v314 = vmax.bf16 %v307, %v131
      %v315 = vmax.bf16 %v308, %v133
      %v317 = vshrl.u32 %v133, 16
      %v319 = vrot.slane %v317, 4
      %v320 = vshll.u32 %v133, 16
      %v322 = vrot.slane %v320, 5
      %v323 = vor.u32 %v319, %v322
      %v324 = vrot.slane %v323, 4
      %v326 = vmax.bf16 %v309, %v161
      %v327 = vmax.bf16 %v310, %v170
      %v328 = vmax.bf16 %v311, %v179
      %v329 = vmax.bf16 %v312, %v188
      %v330 = vmax.bf16 %v313, %v197
      %v331 = vmax.bf16 %v314, %v286
      %v332 = vmax.bf16 %v315, %v324
      %v335 = vrot.slane %v133, 5
      %v336 = vrot.slane %v335, 4
      %v337 = vrot.slane %v134, 5
      %v338 = vsel %vm228, %v336, %v337
      %v340 = vmax.bf16 %v326, %v240
      %v341 = vmax.bf16 %v327, %v244
      %v342 = vmax.bf16 %v328, %v248
      %v343 = vmax.bf16 %v329, %v252
      %v344 = vmax.bf16 %v330, %v256
      %v345 = vmax.bf16 %v331, %v300
      %v346 = vmax.bf16 %v332, %v338
      %vm347 = vcmask 60416
      %vm348 = vsmask.f32 3328
      %vm349 = vmand %vm347, %vm348
      %v350 = vld [vmem:[%s116] sm:$0xf]
      %v351 = vsel %vm349, %v340, %v350
      %352 = vst [vmem:[%s116] sm:$0xf] %v351
      %v353 = vld [vmem:[%s116 + $0x4] sm:$0xf]
      %v354 = vsel %vm349, %v341, %v353
      %355 = vst [vmem:[%s116 + $0x4] sm:$0xf] %v354
      %v356 = vld [vmem:[%s116 + $0x8] sm:$0xf]
      %v357 = vsel %vm349, %v342, %v356
      %358 = vst [vmem:[%s116 + $0x8] sm:$0xf] %v357
      %v359 = vld [vmem:[%s116 + $0xc] sm:$0xf]
      %v360 = vsel %vm349, %v343, %v359
      %361 = vst [vmem:[%s116 + $0xc] sm:$0xf] %v360
      %v362 = vld [vmem:[%s116 + $0x10] sm:$0xf]
      %v363 = vsel %vm349, %v344, %v362
      %364 = vst [vmem:[%s116 + $0x10] sm:$0xf] %v363
      %v365 = vld [vmem:[%s116 + $0x14] sm:$0xf]
      %v366 = vsel %vm349, %v345, %v365
      %367 = vst [vmem:[%s116 + $0x14] sm:$0xf] %v366
      %v368 = vld [vmem:[%s116 + $0x18] sm:$0xf]
      %v369 = vsel %vm349, %v346, %v368
      %370 = vst [vmem:[%s116 + $0x18] sm:$0xf] %v369
      %p371 = scmp.lt.s32.totalorder %s12, 1
      %s372 = scalar_select %p371, %s12, 1
      %s373 = smul.addr %s372, 7
      %s374 = smul.addr %s373, 4
      %s375 = scalar_lea.vmem %s1, %s374
      // Predicated region
      $region25: #{_lambda_.9} parent=23 // pred_check
        %p376 = pneg %p56
      $region26: #{_lambda_.9} parent=23 // pred_check_branch
        %378 = sbr.rel (%p376) target = $region28
      $region27: #{_lambda_.9} parent=23 // pred_region
        _
      $region28: #{_lambda_.9} parent=23 // pred_fallthru
        _
    $region24: #{_lambda_.9} parent=5 // pred_fallthru
      _
    %p379 = scmp.le.s32.totalorder 2, %s7
    // Predicated region
    $region29: #{_lambda_.9} parent=5 // pred_check
      %p380 = pneg %p379
    $region30: #{_lambda_.9} parent=5 // pred_check_branch
      %382 = sbr.rel (%p380) target = $region32
    $region31: #{_lambda_.9} parent=5 // pred_region
      %s383 = ssub.s32 %s7, 2
      // Predicated region
      $region33: #{_lambda_.9} parent=31 // pred_check
        %p384 = pneg %p62
      $region34: #{_lambda_.9} parent=31 // pred_check_branch
        %386 = sbr.rel (%p384) target = $region36
      $region35: #{_lambda_.9} parent=31 // pred_region
        %p387 = scmp.lt.s32.totalorder %s13, 1
        %s388 = scalar_select %p387, %s13, 1
        %s389 = smul.addr %s388, 7
        %s390 = smul.addr %s389, 4
        %s391 = scalar_lea.vmem %s1, %s390
      $region36: #{_lambda_.9} parent=31 // pred_fallthru
        _
    $region32: #{_lambda_.9} parent=5 // pred_fallthru
      _
  $region6: #{_lambda_.9} parent=0 // loop_footer
    %s11 = sadd.s32 1, %s7
  $region7: #{_lambda_.9} parent=0 // loop_footer_branch
    %6 = sbr.rel target = $region3
  $region8: #{_lambda_.9} parent=0 // loop_exit
    _

// kernel: _lambda_.8
$region0: #{_lambda_.8}
  #allocation0 [shape = 'u32[]', space=smem, size = 0x4, offset = 0x4, fixed_abs, tag = 'smem constant byte address 0x4 - core index']
  #allocation1 [shape = 'u32[144,128]{1,0:T(1,128)}', space=vmem, size = 0x12000, scoped, tag = 'internal scratch']
  %s0 = inlined_call_operand.vmem [shape: f32[162,147], index: 0, kind: input, shape index: {}]
  %s1 = inlined_call_operand.vmem [shape: bf16[147,8], index: 1, kind: input, shape index: {}]
  %s2 = inlined_call_operand.vmem [shape: f32[1,8], index: 2, kind: input, shape index: {}]
  %s3 = inlined_call_operand.vmem [shape: bf16[162,8], index: 3, kind: output, shape index: {}]
  %s4 = sld [smem:[#allocation0]]
  $region22: #{_lambda_.8} parent=0
    _
  %s6 = ssub.s32 1, %s4
  %s7 = scalar_select 0, %s6, %s4
  // Predicated region
  $region2: #{_lambda_.8} parent=0 // pred_check
    _
  $region3: #{_lambda_.8} parent=0 // pred_check_branch
    %9 = sbr.rel (0) target = $region5
  $region4: #{_lambda_.8} parent=0 // pred_region
    _
  $region5: #{_lambda_.8} parent=0 // pred_fallthru
    _
  // Predicated region
  $region6: #{_lambda_.8} parent=0 // pred_check
    _
  $region7: #{_lambda_.8} parent=0 // pred_check_branch
    %11 = sbr.rel (0) target = $region9
  $region8: #{_lambda_.8} parent=0 // pred_region
    _
  $region9: #{_lambda_.8} parent=0 // pred_fallthru
    _
  // Predicated region
  $region10: #{_lambda_.8} parent=0 // pred_check
    _
  $region11: #{_lambda_.8} parent=0 // pred_check_branch
    %13 = sbr.rel (0) target = $region13
  $region12: #{_lambda_.8} parent=0 // pred_region
    _
  $region13: #{_lambda_.8} parent=0 // pred_fallthru
    _
  %v15 = vld [vmem:[%s0] sm:$0xff]
  %v16 = vld [vmem:[%s0 + $0x8] sm:$0xff]
  %v17 = vld [vmem:[%s0 + $0x10] sm:$0xff]
  %v18 = vld [vmem:[%s0 + $0x18] sm:$0xff]
  %v19 = vld [vmem:[%s0 + $0x20] sm:$0xff]
  %v20 = vld [vmem:[%s0 + $0x28] sm:$0xff]
  %v21 = vld [vmem:[%s0 + $0x30] sm:$0xff]
  %v22 = vld [vmem:[%s0 + $0x38] sm:$0xff]
  %v23 = vld [vmem:[%s0 + $0x40] sm:$0xff]
  %v24 = vld [vmem:[%s0 + $0x48] sm:$0xff]
  %v25 = vld [vmem:[%s0 + $0x50] sm:$0xff]
  %v26 = vld [vmem:[%s0 + $0x58] sm:$0xff]
  %v27 = vld [vmem:[%s0 + $0x60] sm:$0xff]
  %v28 = vld [vmem:[%s0 + $0x68] sm:$0xff]
  %v29 = vld [vmem:[%s0 + $0x70] sm:$0xff]
  %v30 = vld [vmem:[%s0 + $0x78] sm:$0xff]
  %v31 = vld [vmem:[%s0 + $0x80] sm:$0xff]
  %v32 = vld [vmem:[%s0 + $0x88] sm:$0xff]
  %v33 = vld [vmem:[%s0 + $0x90] sm:$0xff]
  %v34 = vld [vmem:[%s0 + $0x98] sm:$0xff]
  %v35 = vld [vmem:[%s0 + $0xa0] sm:$0xff]
  %v36 = vld [vmem:[%s0 + $0xa8] sm:$0xff]
  %v37 = vld [vmem:[%s0 + $0xb0] sm:$0xff]
  %v38 = vld [vmem:[%s0 + $0xb8] sm:$0xff]
  %v39 = vld [vmem:[%s0 + $0xc0] sm:$0xff]
  %v40 = vld [vmem:[%s0 + $0xc8] sm:$0xff]
  %v41 = vld [vmem:[%s0 + $0xd0] sm:$0xff]
  %v42 = vld [vmem:[%s0 + $0xd8] sm:$0xff]
  %v43 = vld [vmem:[%s0 + $0xe0] sm:$0xff]
  %v44 = vld [vmem:[%s0 + $0xe8] sm:$0xff]
  %v45 = vld [vmem:[%s0 + $0xf0] sm:$0xff]
  %v46 = vld [vmem:[%s0 + $0xf8] sm:$0xff]
  %v47 = vld [vmem:[%s0 + $0x100] sm:$0xff]
  %v48 = vld [vmem:[%s0 + $0x108] sm:$0xff]
  %v49 = vld [vmem:[%s0 + $0x110] sm:$0xff]
  %v50 = vld [vmem:[%s0 + $0x118] sm:$0xff]
  %v51 = vld [vmem:[%s0 + $0x120] sm:$0xff]
  %v52 = vld [vmem:[%s0 + $0x128] sm:$0xff]
  %v53 = vld [vmem:[%s0 + $0x130] sm:$0xff]
  %v54 = vld [vmem:[%s0 + $0x138] sm:$0xff]
  %v55 = vld [vmem:[%s0 + $0x140] sm:$0x3]
  %v56 = vld [vmem:[%s0 + $0x148] sm:$0x3]
  %v57 = vld [vmem:[%s1] sm:$0xf]
  %v58 = vld [vmem:[%s1 + $0x4] sm:$0xf]
  %v59 = vld [vmem:[%s1 + $0x8] sm:$0xf]
  %v60 = vld [vmem:[%s1 + $0xc] sm:$0xf]
  %v61 = vld [vmem:[%s1 + $0x10] sm:$0xf]
  %v62 = vld [vmem:[%s1 + $0x14] sm:$0xf]
  %v63 = vld [vmem:[%s1 + $0x18] sm:$0xf]
  %v64 = vld [vmem:[%s1 + $0x1c] sm:$0xf]
  %v65 = vld [vmem:[%s1 + $0x20] sm:$0xf]
  %v66 = vld [vmem:[%s1 + $0x24] sm:$0xf]
  %v67 = vld [vmem:[%s1 + $0x28] sm:$0xf]
  %v68 = vld [vmem:[%s1 + $0x2c] sm:$0xf]
  %v69 = vld [vmem:[%s1 + $0x30] sm:$0xf]
  %v70 = vld [vmem:[%s1 + $0x34] sm:$0xf]
  %v71 = vld [vmem:[%s1 + $0x38] sm:$0xf]
  %v72 = vld [vmem:[%s1 + $0x3c] sm:$0xf]
  %v73 = vld [vmem:[%s1 + $0x40] sm:$0xf]
  %v74 = vld [vmem:[%s1 + $0x44] sm:$0xf]
  %v75 = vld [vmem:[%s1 + $0x48] sm:$0x3]
  %v76 = vld [vmem:[%s2] sm:$0x1]
  %v77 = vpack.c.bf16 %v17, %v15
  %v78 = vpack.c.bf16 %v18, %v16
  %v79 = vpack.c.bf16 %v21, %v19
  %v80 = vpack.c.bf16 %v22, %v20
  %v81 = vpack.c.bf16 %v25, %v23
  %v82 = vpack.c.bf16 %v26, %v24
  %v83 = vpack.c.bf16 %v29, %v27
  %v84 = vpack.c.bf16 %v30, %v28
  %v85 = vpack.c.bf16 %v33, %v31
  %v86 = vpack.c.bf16 %v34, %v32
  %v87 = vpack.c.bf16 %v37, %v35
  %v88 = vpack.c.bf16 %v38, %v36
  %v89 = vpack.c.bf16 %v41, %v39
  %v90 = vpack.c.bf16 %v42, %v40
  %v91 = vpack.c.bf16 %v45, %v43
  %v92 = vpack.c.bf16 %v46, %v44
  %v93 = vpack.c.bf16 %v49, %v47
  %v94 = vpack.c.bf16 %v50, %v48
  %v95 = vpack.c.bf16 %v53, %v51
  %v96 = vpack.c.bf16 %v54, %v52
  %v97 = vpack.c.bf16 %v55, %v55
  %v98 = vpack.c.bf16 %v56, %v56
  %v100 = vlaneseq
  %v101 = vshrl.u32 %v100, 7
  %v102 = vsub.s32 0, %v101
  %v103 = vrot.slane %v76, %v102
  %v124 = vunpack.c.l.b16 %v57
  %v125 = vunpack.c.l.b16 %v58
  %v126 = vunpack.c.l.b16 %v59
  %v127 = vunpack.c.l.b16 %v60
  %v128 = vunpack.c.l.b16 %v61
  %v129 = vunpack.c.l.b16 %v62
  %v130 = vunpack.c.l.b16 %v63
  %v131 = vunpack.c.l.b16 %v64
  %v132 = vunpack.c.l.b16 %v65
  %v133 = vunpack.c.l.b16 %v66
  %v134 = vunpack.c.l.b16 %v67
  %v135 = vunpack.c.l.b16 %v68
  %v136 = vunpack.c.l.b16 %v69
  %v137 = vunpack.c.l.b16 %v70
  %v138 = vunpack.c.l.b16 %v71
  %v139 = vunpack.c.l.b16 %v72
  %v140 = vunpack.c.l.b16 %v73
  %v141 = vunpack.c.l.b16 %v74
  %v142 = vunpack.c.l.b16 %v75
  %v143 = vpack.c.b16 %v125, %v124
  %v144 = vpack.c.b16 %v127, %v126
  %v145 = vpack.c.b16 %v129, %v128
  %v146 = vpack.c.b16 %v131, %v130
  %v147 = vpack.c.b16 %v133, %v132
  %v148 = vpack.c.b16 %v135, %v134
  %v149 = vpack.c.b16 %v137, %v136
  %v150 = vpack.c.b16 %v139, %v138
  %v151 = vpack.c.b16 %v141, %v140
  %v152 = vpack.c.b16 %v142, %v142
  %vm162 = vcmask 154624
  %v164 = vsel %vm162, %v78, 0
  %v167 = vsel %vm162, %v80, 0
  %v170 = vsel %vm162, %v82, 0
  %v173 = vsel %vm162, %v84, 0
  %v176 = vsel %vm162, %v86, 0
  %v179 = vsel %vm162, %v88, 0
  %v182 = vsel %vm162, %v90, 0
  %v185 = vsel %vm162, %v92, 0
  %v188 = vsel %vm162, %v94, 0
  %v191 = vsel %vm162, %v96, 0
  %v194 = vsel %vm162, %v98, 0
  %vm196 = vcmask 1040384
  %vm197 = vcmask 1041408
  %v198 = vsel %vm196, 4294967295, 65535
  %v199 = vsel %vm197, %v198, 0
  %v201 = vand.u32 %v152, %v199
  %203 = vmatprep.subr.bf16.mxu0 0
  %204 = vmatpush1.bf16.msra.mxu0 %v143
  %205 = vmatprep.subr.bf16.mxu0 0
  %206 = vmatpush1.bf16.msra.mxu0 %v144
  %207 = vmatprep.subr.bf16.mxu0 0
  %208 = vmatpush1.bf16.msra.mxu0 %v145
  %209 = vmatprep.subr.bf16.mxu0 0
  %210 = vmatpush1.bf16.msra.mxu0 %v146
  %211 = vmatprep.subr.bf16.mxu0 0
  %212 = vmatpush1.bf16.msra.mxu0 %v147
  %213 = vmatprep.subr.bf16.mxu0 0
  %214 = vmatpush1.bf16.msra.mxu0 %v148
  %215 = vmatprep.subr.bf16.mxu0 0
  %216 = vmatpush1.bf16.msra.mxu0 %v149
  %217 = vmatprep.subr.bf16.mxu0 0
  %218 = vmatpush1.bf16.msra.mxu0 %v150
  %219 = vmatprep.subr.bf16.mxu0 0
  %220 = vmatpush1.bf16.msra.mxu0 %v151
  %221 = vmatprep.subr.bf16.mxu0 0
  %222 = vmatpush1.bf16.msra.mxu0 %v201
  %223 = vmatprep.subr.bf16.mxu0 0
  %224 = vmatpush1.bf16.msra.mxu0 0
  %225 = vmatprep.subr.bf16.mxu0 0
  %226 = vmatpush1.bf16.msra.mxu0 0
  %227 = vmatprep.subr.bf16.mxu0 0
  %228 = vmatpush1.bf16.msra.mxu0 0
  %229 = vmatprep.subr.bf16.mxu0 0
  %230 = vmatpush1.bf16.msra.mxu0 0
  %231 = vmatprep.subr.bf16.mxu0 0
  %232 = vmatpush1.bf16.msra.mxu0 0
  %233 = vmatprep.subr.bf16.mxu0 0
  %234 = vmatpush1.bf16.msra.mxu0 0
  %235 = vmatprep.mubr.bf16.mxu0 %v164
  %236 = vmatmul.mubr.bf16.gmra.mrb[0].mxu0 %v77
  %v237 = vpop.f32.mrb[0].mxu0
  %v238 = vadd.f32 %v103, %v237
  %v239 = vpop.f32.mrb[0].mxu0
  %v240 = vpop.f32.mrb[0].mxu0
  %v241 = vadd.f32 %v103, %v240
  %v242 = vpop.f32.mrb[0].mxu0
  %243 = vmatprep.mubr.bf16.mxu0 %v167
  %244 = vmatmul.mubr.bf16.gmra.mrb[0].mxu0 %v79
  %v245 = vpop.f32.mrb[0].mxu0
  %v246 = vadd.f32 %v103, %v245
  %v247 = vpop.f32.mrb[0].mxu0
  %v248 = vpop.f32.mrb[0].mxu0
  %v249 = vadd.f32 %v103, %v248
  %v250 = vpop.f32.mrb[0].mxu0
  %251 = vmatprep.mubr.bf16.mxu0 %v170
  %252 = vmatmul.mubr.bf16.gmra.mrb[0].mxu0 %v81
  %v253 = vpop.f32.mrb[0].mxu0
  %v254 = vadd.f32 %v103, %v253
  %v255 = vpop.f32.mrb[0].mxu0
  %v256 = vpop.f32.mrb[0].mxu0
  %v257 = vadd.f32 %v103, %v256
  %v258 = vpop.f32.mrb[0].mxu0
  %259 = vmatprep.mubr.bf16.mxu0 %v173
  %260 = vmatmul.mubr.bf16.gmra.mrb[0].mxu0 %v83
  %v261 = vpop.f32.mrb[0].mxu0
  %v262 = vadd.f32 %v103, %v261
  %v263 = vpop.f32.mrb[0].mxu0
  %v264 = vpop.f32.mrb[0].mxu0
  %v265 = vadd.f32 %v103, %v264
  %v266 = vpop.f32.mrb[0].mxu0
  %267 = vmatprep.mubr.bf16.mxu0 %v176
  %268 = vmatmul.mubr.bf16.gmra.mrb[0].mxu0 %v85
  %v269 = vpop.f32.mrb[0].mxu0
  %v270 = vadd.f32 %v103, %v269
  %v271 = vpop.f32.mrb[0].mxu0
  %v272 = vpop.f32.mrb[0].mxu0
  %v273 = vadd.f32 %v103, %v272
  %v274 = vpop.f32.mrb[0].mxu0
  %275 = vmatprep.mubr.bf16.mxu0 %v179
  %276 = vmatmul.mubr.bf16.gmra.mrb[0].mxu0 %v87
  %v277 = vpop.f32.mrb[0].mxu0
  %v278 = vadd.f32 %v103, %v277
  %v279 = vpop.f32.mrb[0].mxu0
  %v280 = vpop.f32.mrb[0].mxu0
  %v281 = vadd.f32 %v103, %v280
  %v282 = vpop.f32.mrb[0].mxu0
  %283 = vmatprep.mubr.bf16.mxu0 %v182
  %284 = vmatmul.mubr.bf16.gmra.mrb[0].mxu0 %v89
  %v285 = vpop.f32.mrb[0].mxu0
  %v286 = vadd.f32 %v103, %v285
  %v287 = vpop.f32.mrb[0].mxu0
  %v288 = vpop.f32.mrb[0].mxu0
  %v289 = vadd.f32 %v103, %v288
  %v290 = vpop.f32.mrb[0].mxu0
  %291 = vmatprep.mubr.bf16.mxu0 %v185
  %292 = vmatmul.mubr.bf16.gmra.mrb[0].mxu0 %v91
  %v293 = vpop.f32.mrb[0].mxu0
  %v294 = vadd.f32 %v103, %v293
  %v295 = vpop.f32.mrb[0].mxu0
  %v296 = vpop.f32.mrb[0].mxu0
  %v297 = vadd.f32 %v103, %v296
  %v298 = vpop.f32.mrb[0].mxu0
  %299 = vmatprep.mubr.bf16.mxu0 %v188
  %300 = vmatmul.mubr.bf16.gmra.mrb[0].mxu0 %v93
  %v301 = vpop.f32.mrb[0].mxu0
  %v302 = vadd.f32 %v103, %v301
  %v303 = vpop.f32.mrb[0].mxu0
  %v304 = vpop.f32.mrb[0].mxu0
  %v305 = vadd.f32 %v103, %v304
  %v306 = vpop.f32.mrb[0].mxu0
  %307 = vmatprep.mubr.bf16.mxu0 %v191
  %308 = vmatmul.mubr.bf16.gmra.mrb[0].mxu0 %v95
  %v309 = vpop.f32.mrb[0].mxu0
  %v310 = vadd.f32 %v103, %v309
  %v311 = vpop.f32.mrb[0].mxu0
  %v312 = vpop.f32.mrb[0].mxu0
  %v313 = vadd.f32 %v103, %v312
  %v314 = vpop.f32.mrb[0].mxu0
  %315 = vmatprep.mubr.bf16.mxu0 %v194
  %316 = vmatmul.mubr.bf16.gmra.mrb[0].mxu0 %v97
  %v317 = vpop.f32.mrb[0].mxu0
  %v318 = vadd.f32 %v103, %v317
  %v319 = vpop.f32.mrb[0].mxu0
  %v320 = vpop.f32.mrb[0].mxu0
  %v321 = vpop.f32.mrb[0].mxu0
  %322 = vdwg.mxu0
  %v323 = vpack.c.bf16 %v241, %v238
  %v324 = vpack.c.bf16 %v249, %v246
  %v325 = vpack.c.bf16 %v257, %v254
  %v326 = vpack.c.bf16 %v265, %v262
  %v327 = vpack.c.bf16 %v273, %v270
  %v328 = vpack.c.bf16 %v281, %v278
  %v329 = vpack.c.bf16 %v289, %v286
  %v330 = vpack.c.bf16 %v297, %v294
  %v331 = vpack.c.bf16 %v305, %v302
  %v332 = vpack.c.bf16 %v313, %v310
  %v333 = vpack.c.bf16 %v318, %v318
  %v345 = vunpack.c.l.b16 %v323
  %v346 = vunpack.c.h.b16 %v323
  %v347 = vunpack.c.l.b16 %v324
  %v348 = vunpack.c.h.b16 %v324
  %v349 = vunpack.c.l.b16 %v325
  %v350 = vunpack.c.h.b16 %v325
  %v351 = vunpack.c.l.b16 %v326
  %v352 = vunpack.c.h.b16 %v326
  %v353 = vunpack.c.l.b16 %v327
  %v354 = vunpack.c.h.b16 %v327
  %v355 = vunpack.c.l.b16 %v328
  %v356 = vunpack.c.h.b16 %v328
  %v357 = vunpack.c.l.b16 %v329
  %v358 = vunpack.c.h.b16 %v329
  %v359 = vunpack.c.l.b16 %v330
  %v360 = vunpack.c.h.b16 %v330
  %v361 = vunpack.c.l.b16 %v331
  %v362 = vunpack.c.h.b16 %v331
  %v363 = vunpack.c.l.b16 %v332
  %v364 = vunpack.c.h.b16 %v332
  %v365 = vunpack.c.l.b16 %v333
  %v366 = vpack.c.b16 %v345, %v345
  %v367 = vpack.c.b16 %v346, %v346
  %v368 = vpack.c.b16 %v347, %v347
  %v369 = vpack.c.b16 %v348, %v348
  %v370 = vpack.c.b16 %v349, %v349
  %v371 = vpack.c.b16 %v350, %v350
  %v372 = vpack.c.b16 %v351, %v351
  %v373 = vpack.c.b16 %v352, %v352
  %v374 = vpack.c.b16 %v353, %v353
  %v375 = vpack.c.b16 %v354, %v354
  %v376 = vpack.c.b16 %v355, %v355
  %v377 = vpack.c.b16 %v356, %v356
  %v378 = vpack.c.b16 %v357, %v357
  %v379 = vpack.c.b16 %v358, %v358
  %v380 = vpack.c.b16 %v359, %v359
  %v381 = vpack.c.b16 %v360, %v360
  %v382 = vpack.c.b16 %v361, %v361
  %v383 = vpack.c.b16 %v362, %v362
  %v384 = vpack.c.b16 %v363, %v363
  %v385 = vpack.c.b16 %v364, %v364
  %v386 = vpack.c.b16 %v365, %v365
  %vm408 = vcmask 60416
  %409 = vst.msk [vmem:[%s3] sm:$0xf] %vm408, %v366
  %410 = vst.msk [vmem:[%s3 + $0x4] sm:$0xf] %vm408, %v367
  %411 = vst.msk [vmem:[%s3 + $0x8] sm:$0xf] %vm408, %v368
  %412 = vst.msk [vmem:[%s3 + $0xc] sm:$0xf] %vm408, %v369
  %413 = vst.msk [vmem:[%s3 + $0x10] sm:$0xf] %vm408, %v370
  %414 = vst.msk [vmem:[%s3 + $0x14] sm:$0xf] %vm408, %v371
  %415 = vst.msk [vmem:[%s3 + $0x18] sm:$0xf] %vm408, %v372
  %416 = vst.msk [vmem:[%s3 + $0x1c] sm:$0xf] %vm408, %v373
  %417 = vst.msk [vmem:[%s3 + $0x20] sm:$0xf] %vm408, %v374
  %418 = vst.msk [vmem:[%s3 + $0x24] sm:$0xf] %vm408, %v375
  %419 = vst.msk [vmem:[%s3 + $0x28] sm:$0xf] %vm408, %v376
  %420 = vst.msk [vmem:[%s3 + $0x2c] sm:$0xf] %vm408, %v377
  %421 = vst.msk [vmem:[%s3 + $0x30] sm:$0xf] %vm408, %v378
  %422 = vst.msk [vmem:[%s3 + $0x34] sm:$0xf] %vm408, %v379
  %423 = vst.msk [vmem:[%s3 + $0x38] sm:$0xf] %vm408, %v380
  %424 = vst.msk [vmem:[%s3 + $0x3c] sm:$0xf] %vm408, %v381
  %425 = vst.msk [vmem:[%s3 + $0x40] sm:$0xf] %vm408, %v382
  %426 = vst.msk [vmem:[%s3 + $0x44] sm:$0xf] %vm408, %v383
  %427 = vst.msk [vmem:[%s3 + $0x48] sm:$0xf] %vm408, %v384
  %428 = vst.msk [vmem:[%s3 + $0x4c] sm:$0xf] %vm408, %v385
  %vm429 = vcmask 57344
  %430 = vst.msk [vmem:[%s3 + $0x50] sm:$0x1] %vm429, %v386
  // Predicated region
  $region14: #{_lambda_.8} parent=0 // pred_check
    _
  $region15: #{_lambda_.8} parent=0 // pred_check_branch
    %432 = sbr.rel (0) target = $region17
  $region16: #{_lambda_.8} parent=0 // pred_region
    _
  $region17: #{_lambda_.8} parent=0 // pred_fallthru
    _
  // Predicated region
  $region18: #{_lambda_.8} parent=0 // pred_check
    _
  $region19: #{_lambda_.8} parent=0 // pred_check_branch
    %434 = sbr.rel (0) target = $region21
  $region20: #{_lambda_.8} parent=0 // pred_region
    _
  $region21: #{_lambda_.8} parent=0 // pred_fallthru
    _

// kernel: _lambda_.10
$region0: #{_lambda_.10}
  #allocation0 [shape = 'u32[]', space=smem, size = 0x4, offset = 0x4, fixed_abs, tag = 'smem constant byte address 0x4 - core index']
  #allocation1 [shape = 'u32[144,128]{1,0:T(1,128)}', space=vmem, size = 0x12000, scoped, tag = 'internal scratch']
  %s0 = inlined_call_operand.vmem [shape: bf16[8,32], index: 0, kind: input, shape index: {}]
  %s1 = inlined_call_operand.vmem [shape: bf16[32,32], index: 1, kind: input, shape index: {}]
  %s2 = inlined_call_operand.vmem [shape: f32[1,32], index: 2, kind: input, shape index: {}]
  %s3 = inlined_call_operand.vmem [shape: f32[8,32], index: 3, kind: output, shape index: {}]
  %s4 = sld [smem:[#allocation0]]
  $region22: #{_lambda_.10} parent=0
    _
  %s6 = ssub.s32 1, %s4
  %s7 = scalar_select 0, %s6, %s4
  // Predicated region
  $region2: #{_lambda_.10} parent=0 // pred_check
    _
  $region3: #{_lambda_.10} parent=0 // pred_check_branch
    %9 = sbr.rel (0) target = $region5
  $region4: #{_lambda_.10} parent=0 // pred_region
    _
  $region5: #{_lambda_.10} parent=0 // pred_fallthru
    _
  // Predicated region
  $region6: #{_lambda_.10} parent=0 // pred_check
    _
  $region7: #{_lambda_.10} parent=0 // pred_check_branch
    %11 = sbr.rel (0) target = $region9
  $region8: #{_lambda_.10} parent=0 // pred_region
    _
  $region9: #{_lambda_.10} parent=0 // pred_fallthru
    _
  // Predicated region
  $region10: #{_lambda_.10} parent=0 // pred_check
    _
  $region11: #{_lambda_.10} parent=0 // pred_check_branch
    %13 = sbr.rel (0) target = $region13
  $region12: #{_lambda_.10} parent=0 // pred_region
    _
  $region13: #{_lambda_.10} parent=0 // pred_fallthru
    _
  %v15 = vld [vmem:[%s0] sm:$0xf]
  %v16 = vld [vmem:[%s1] sm:$0xf]
  %v17 = vld [vmem:[%s1 + $0x4] sm:$0xf]
  %v18 = vld [vmem:[%s1 + $0x8] sm:$0xf]
  %v19 = vld [vmem:[%s1 + $0xc] sm:$0xf]
  %v20 = vld [vmem:[%s2] sm:$0x1]
  %v22 = vlaneseq
  %v23 = vshrl.u32 %v22, 7
  %v24 = vsub.s32 0, %v23
  %v25 = vrot.slane %v20, %v24
  %v31 = vunpack.c.l.b16 %v16
  %v32 = vunpack.c.l.b16 %v17
  %v33 = vunpack.c.l.b16 %v18
  %v34 = vunpack.c.l.b16 %v19
  %v35 = vpack.c.b16 %v32, %v31
  %v36 = vpack.c.b16 %v34, %v33
  %vm39 = vcmask 261120
  %v41 = vsel %vm39, %v15, 0
  %43 = vmatprep.subr.bf16.mxu0 0
  %44 = vmatpush1.bf16.msra.mxu0 %v35
  %45 = vmatprep.subr.bf16.mxu0 0
  %46 = vmatpush1.bf16.msra.mxu0 %v36
  %47 = vmatprep.subr.bf16.mxu0 0
  %48 = vmatpush1.bf16.msra.mxu0 0
  %49 = vmatprep.subr.bf16.mxu0 0
  %50 = vmatpush1.bf16.msra.mxu0 0
  %51 = vmatprep.subr.bf16.mxu0 0
  %52 = vmatpush1.bf16.msra.mxu0 0
  %53 = vmatprep.subr.bf16.mxu0 0
  %54 = vmatpush1.bf16.msra.mxu0 0
  %55 = vmatprep.subr.bf16.mxu0 0
  %56 = vmatpush1.bf16.msra.mxu0 0
  %57 = vmatprep.subr.bf16.mxu0 0
  %58 = vmatpush1.bf16.msra.mxu0 0
  %59 = vmatprep.subr.bf16.mxu0 0
  %60 = vmatpush1.bf16.msra.mxu0 0
  %61 = vmatprep.subr.bf16.mxu0 0
  %62 = vmatpush1.bf16.msra.mxu0 0
  %63 = vmatprep.subr.bf16.mxu0 0
  %64 = vmatpush1.bf16.msra.mxu0 0
  %65 = vmatprep.subr.bf16.mxu0 0
  %66 = vmatpush1.bf16.msra.mxu0 0
  %67 = vmatprep.subr.bf16.mxu0 0
  %68 = vmatpush1.bf16.msra.mxu0 0
  %69 = vmatprep.subr.bf16.mxu0 0
  %70 = vmatpush1.bf16.msra.mxu0 0
  %71 = vmatprep.subr.bf16.mxu0 0
  %72 = vmatpush1.bf16.msra.mxu0 0
  %73 = vmatprep.subr.bf16.mxu0 0
  %74 = vmatpush1.bf16.msra.mxu0 0
  %75 = vmatprep.mubr.bf16.mxu0 0
  %76 = vmatmul.mubr.bf16.gmra.mrb[0].mxu0 %v41
  %v77 = vpop.f32.mrb[0].mxu0
  %v78 = vadd.f32 %v25, %v77
  %v79 = vpop.f32.mrb[0].mxu0
  %v80 = vpop.f32.mrb[0].mxu0
  %v81 = vpop.f32.mrb[0].mxu0
  %82 = vdwg.mxu0
  %83 = vst.msk [vmem:[%s3] sm:$0xff] %vm39, %v78
  // Predicated region
  $region14: #{_lambda_.10} parent=0 // pred_check
    _
  $region15: #{_lambda_.10} parent=0 // pred_check_branch
    %85 = sbr.rel (0) target = $region17
  $region16: #{_lambda_.10} parent=0 // pred_region
    _
  $region17: #{_lambda_.10} parent=0 // pred_fallthru
    _
  // Predicated region
  $region18: #{_lambda_.10} parent=0 // pred_check
    _
  $region19: #{_lambda_.10} parent=0 // pred_check_branch
    %87 = sbr.rel (0) target = $region21
  $region20: #{_lambda_.10} parent=0 // pred_region
    _
  $region21: #{_lambda_.10} parent=0 // pred_fallthru
    _

// kernel: _lambda_.11
$region0: #{_lambda_.11}
  #allocation0 [shape = 'u32[]', space=smem, size = 0x4, offset = 0x4, fixed_abs, tag = 'smem constant byte address 0x4 - core index']
  #allocation1 [shape = 'u32[144,128]{1,0:T(1,128)}', space=vmem, size = 0x12000, scoped, tag = 'internal scratch']
  %s0 = inlined_call_operand.vmem [shape: bf16[2,5,32], index: 0, kind: input, shape index: {}]
  %s1 = inlined_call_operand.vmem [shape: f32[1,32], index: 1, kind: input, shape index: {}]
  %s2 = inlined_call_operand.vmem [shape: f32[1,32], index: 2, kind: input, shape index: {}]
  %s3 = inlined_call_operand.vmem [shape: bf16[32,96], index: 3, kind: input, shape index: {}]
  %s4 = inlined_call_operand.vmem [shape: bf16[32,32], index: 4, kind: input, shape index: {}]
  %s5 = inlined_call_operand.vmem [shape: f32[1,32], index: 5, kind: input, shape index: {}]
  %s6 = inlined_call_operand.vmem [shape: bf16[2,5,32], index: 6, kind: output, shape index: {}]
  %s7 = sld [smem:[#allocation0]]
  $region57: #{_lambda_.11} parent=0
    _
  %s9 = ssub.s32 1, %s7
  %s10 = scalar_select 0, %s9, %s7
  loop: start=0, step=1, limit=4
  $region2: #{_lambda_.11} parent=0 // loop_pre_header
    _
  $region3: #{_lambda_.11} parent=0 // loop_header
    %s12 = sphi 0, %s16
    %p13 = scmp.ge.s32.totalorder %s12, 4
    %s22 = sphi 0, %s24
    %s25 = sphi 0, %s22
    %s26 = sphi 0, %s25
    %s42 = sphi 0, %s26
    %s46 = sphi 0, %s46
    %s48 = sphi 0, %s46
    %s49 = sphi 0, %s48
    %s63 = sphi 0, %s49
    %s67 = sphi 0, %s67
    %s69 = sphi 0, %s67
    %s70 = sphi 0, %s69
    %s84 = sphi 0, %s70
    %s88 = sphi 0, %s88
    %s90 = sphi 0, %s88
    %s91 = sphi 0, %s90
    %s105 = sphi 0, %s91
    %s109 = sphi 0, %s109
    %s111 = sphi 0, %s109
    %s112 = sphi 0, %s111
    %s126 = sphi 0, %s112
    %s130 = sphi 0, %s130
    %s132 = sphi 0, %s130
    %s133 = sphi 0, %s132
    %s147 = sphi 0, %s133
    %s153 = sphi 0, %s155
    %s156 = sphi 0, %s153
    %s157 = sphi 0, %s156
    %s173 = sphi 0, %s157
  $region4: #{_lambda_.11} parent=0 // loop_header_branch
    %15 = sbr.rel (%p13) target = $region8
  $region5: #{_lambda_.11} parent=0 // loop_body
    %s17 = ssub.s32 %s12, 1
    %s18 = ssub.s32 %s12, 2
    %s19 = sadd.s32 %s12, 1
    %s20 = ssub.s32 %s12, %s19
    %p21 = scmp.eq.s32.totalorder %s20, 0
    %s23 = sadd.s32 %s22, 1
    %s24 = scalar_select %p21, %s22, %s23
    %p27 = pneg %p21
    %p28 = scmp.eq.s32.totalorder %s12, 1
    %p29 = por %p27, %p28
    %p30 = scmp.ne.s32.totalorder %s22, %s25
    %p31 = scmp.eq.s32.totalorder %s12, 0
    %p32 = por %p30, %p31
    %p33 = scmp.ne.s32.totalorder %s22, %s25
    %p34 = scmp.eq.s32.totalorder %s17, 1
    %p35 = por %p33, %p34
    %p36 = scmp.ne.s32.totalorder %s25, %s26
    %p37 = scmp.eq.s32.totalorder %s17, 0
    %p38 = por %p36, %p37
    %p39 = scmp.ne.s32.totalorder %s25, %s26
    %p40 = scmp.eq.s32.totalorder %s18, 1
    %p41 = por %p39, %p40
    %p43 = scmp.ne.s32.totalorder %s26, %s42
    %p44 = scmp.eq.s32.totalorder %s18, 0
    %p45 = por %p43, %p44
    %s47 = sadd.s32 %s46, 1
    %p50 = scmp.eq.s32.totalorder %s12, 1
    %p51 = scmp.ne.s32.totalorder %s46, %s48
    %p52 = scmp.eq.s32.totalorder %s12, 0
    %p53 = por %p51, %p52
    %p54 = scmp.ne.s32.totalorder %s46, %s48
    %p55 = scmp.eq.s32.totalorder %s17, 1
    %p56 = por %p54, %p55
    %p57 = scmp.ne.s32.totalorder %s48, %s49
    %p58 = scmp.eq.s32.totalorder %s17, 0
    %p59 = por %p57, %p58
    %p60 = scmp.ne.s32.totalorder %s48, %s49
    %p61 = scmp.eq.s32.totalorder %s18, 1
    %p62 = por %p60, %p61
    %p64 = scmp.ne.s32.totalorder %s49, %s63
    %p65 = scmp.eq.s32.totalorder %s18, 0
    %p66 = por %p64, %p65
    %s68 = sadd.s32 %s67, 1
    %p71 = scmp.eq.s32.totalorder %s12, 1
    %p72 = scmp.ne.s32.totalorder %s67, %s69
    %p73 = scmp.eq.s32.totalorder %s12, 0
    %p74 = por %p72, %p73
    %p75 = scmp.ne.s32.totalorder %s67, %s69
    %p76 = scmp.eq.s32.totalorder %s17, 1
    %p77 = por %p75, %p76
    %p78 = scmp.ne.s32.totalorder %s69, %s70
    %p79 = scmp.eq.s32.totalorder %s17, 0
    %p80 = por %p78, %p79
    %p81 = scmp.ne.s32.totalorder %s69, %s70
    %p82 = scmp.eq.s32.totalorder %s18, 1
    %p83 = por %p81, %p82
    %p85 = scmp.ne.s32.totalorder %s70, %s84
    %p86 = scmp.eq.s32.totalorder %s18, 0
    %p87 = por %p85, %p86
    %s89 = sadd.s32 %s88, 1
    %p92 = scmp.eq.s32.totalorder %s12, 1
    %p93 = scmp.ne.s32.totalorder %s88, %s90
    %p94 = scmp.eq.s32.totalorder %s12, 0
    %p95 = por %p93, %p94
    %p96 = scmp.ne.s32.totalorder %s88, %s90
    %p97 = scmp.eq.s32.totalorder %s17, 1
    %p98 = por %p96, %p97
    %p99 = scmp.ne.s32.totalorder %s90, %s91
    %p100 = scmp.eq.s32.totalorder %s17, 0
    %p101 = por %p99, %p100
    %p102 = scmp.ne.s32.totalorder %s90, %s91
    %p103 = scmp.eq.s32.totalorder %s18, 1
    %p104 = por %p102, %p103
    %p106 = scmp.ne.s32.totalorder %s91, %s105
    %p107 = scmp.eq.s32.totalorder %s18, 0
    %p108 = por %p106, %p107
    %s110 = sadd.s32 %s109, 1
    %p113 = scmp.eq.s32.totalorder %s12, 1
    %p114 = scmp.ne.s32.totalorder %s109, %s111
    %p115 = scmp.eq.s32.totalorder %s12, 0
    %p116 = por %p114, %p115
    %p117 = scmp.ne.s32.totalorder %s109, %s111
    %p118 = scmp.eq.s32.totalorder %s17, 1
    %p119 = por %p117, %p118
    %p120 = scmp.ne.s32.totalorder %s111, %s112
    %p121 = scmp.eq.s32.totalorder %s17, 0
    %p122 = por %p120, %p121
    %p123 = scmp.ne.s32.totalorder %s111, %s112
    %p124 = scmp.eq.s32.totalorder %s18, 1
    %p125 = por %p123, %p124
    %p127 = scmp.ne.s32.totalorder %s112, %s126
    %p128 = scmp.eq.s32.totalorder %s18, 0
    %p129 = por %p127, %p128
    %s131 = sadd.s32 %s130, 1
    %p134 = scmp.eq.s32.totalorder %s12, 1
    %p135 = scmp.ne.s32.totalorder %s130, %s132
    %p136 = scmp.eq.s32.totalorder %s12, 0
    %p137 = por %p135, %p136
    %p138 = scmp.ne.s32.totalorder %s130, %s132
    %p139 = scmp.eq.s32.totalorder %s17, 1
    %p140 = por %p138, %p139
    %p141 = scmp.ne.s32.totalorder %s132, %s133
    %p142 = scmp.eq.s32.totalorder %s17, 0
    %p143 = por %p141, %p142
    %p144 = scmp.ne.s32.totalorder %s132, %s133
    %p145 = scmp.eq.s32.totalorder %s18, 1
    %p146 = por %p144, %p145
    %p148 = scmp.ne.s32.totalorder %s133, %s147
    %p149 = scmp.eq.s32.totalorder %s18, 0
    %p150 = por %p148, %p149
    %s151 = ssub.s32 %s12, %s19
    %p152 = scmp.eq.s32.totalorder %s151, 0
    %s154 = sadd.s32 %s153, 1
    %s155 = scalar_select %p152, %s153, %s154
    %p158 = pneg %p152
    %p159 = scmp.eq.s32.totalorder %s12, 1
    %p160 = por %p158, %p159
    %p161 = scmp.ne.s32.totalorder %s153, %s156
    %p162 = scmp.eq.s32.totalorder %s12, 0
    %p163 = por %p161, %p162
    %p164 = scmp.ne.s32.totalorder %s153, %s156
    %p165 = scmp.eq.s32.totalorder %s17, 1
    %p166 = por %p164, %p165
    %p167 = scmp.ne.s32.totalorder %s156, %s157
    %p168 = scmp.eq.s32.totalorder %s17, 0
    %p169 = por %p167, %p168
    %p170 = scmp.ne.s32.totalorder %s156, %s157
    %p171 = scmp.eq.s32.totalorder %s18, 1
    %p172 = por %p170, %p171
    %p174 = scmp.ne.s32.totalorder %s157, %s173
    %p175 = scmp.eq.s32.totalorder %s18, 0
    %p176 = por %p174, %p175
    %p177 = scmp.le.s32.totalorder 1, %s12
    %p178 = scmp.lt.s32.totalorder %s12, 3
    %p179 = pnand %p177, %p178
    %p180 = pneg %p179
    // Predicated region
    $region9: #{_lambda_.11} parent=5 // pred_check
      _
    $region10: #{_lambda_.11} parent=5 // pred_check_branch
      %182 = sbr.rel (%p179) target = $region12
    $region11: #{_lambda_.11} parent=5 // pred_region
      %s183 = ssub.s32 %s12, 1
      // Predicated region
      $region13: #{_lambda_.11} parent=11 // pred_check
        %p184 = pneg %p59
      $region14: #{_lambda_.11} parent=11 // pred_check_branch
        %186 = sbr.rel (%p184) target = $region16
      $region15: #{_lambda_.11} parent=11 // pred_region
        _
      $region16: #{_lambda_.11} parent=11 // pred_fallthru
        _
      // Predicated region
      $region17: #{_lambda_.11} parent=11 // pred_check
        %p187 = pneg %p80
      $region18: #{_lambda_.11} parent=11 // pred_check_branch
        %189 = sbr.rel (%p187) target = $region20
      $region19: #{_lambda_.11} parent=11 // pred_region
        _
      $region20: #{_lambda_.11} parent=11 // pred_fallthru
        _
      // Predicated region
      $region21: #{_lambda_.11} parent=11 // pred_check
        %p190 = pneg %p101
      $region22: #{_lambda_.11} parent=11 // pred_check_branch
        %192 = sbr.rel (%p190) target = $region24
      $region23: #{_lambda_.11} parent=11 // pred_region
        _
      $region24: #{_lambda_.11} parent=11 // pred_fallthru
        _
      // Predicated region
      $region25: #{_lambda_.11} parent=11 // pred_check
        %p193 = pneg %p122
      $region26: #{_lambda_.11} parent=11 // pred_check_branch
        %195 = sbr.rel (%p193) target = $region28
      $region27: #{_lambda_.11} parent=11 // pred_region
        _
      $region28: #{_lambda_.11} parent=11 // pred_fallthru
        _
      // Predicated region
      $region29: #{_lambda_.11} parent=11 // pred_check
        %p196 = pneg %p143
      $region30: #{_lambda_.11} parent=11 // pred_check_branch
        %198 = sbr.rel (%p196) target = $region32
      $region31: #{_lambda_.11} parent=11 // pred_region
        _
      $region32: #{_lambda_.11} parent=11 // pred_fallthru
        _
    $region12: #{_lambda_.11} parent=5 // pred_fallthru
      _
    %p199 = scmp.lt.s32.totalorder %s12, 2
    // Predicated region
    $region33: #{_lambda_.11} parent=5 // pred_check
      %p200 = pneg %p199
    $region34: #{_lambda_.11} parent=5 // pred_check_branch
      %202 = sbr.rel (%p200) target = $region36
    $region35: #{_lambda_.11} parent=5 // pred_region
      // Predicated region
      $region37: #{_lambda_.11} parent=35 // pred_check
        %p203 = pneg %p32
      $region38: #{_lambda_.11} parent=35 // pred_check_branch
        %205 = sbr.rel (%p203) target = $region40
      $region39: #{_lambda_.11} parent=35 // pred_region
        %p206 = scmp.lt.s32.totalorder %s12, 1
        %s207 = scalar_select %p206, %s12, 1
        %s208 = smul.addr %s207, 4
        %s209 = scalar_lea.vmem %s0, %s208
      $region40: #{_lambda_.11} parent=35 // pred_fallthru
        _
    $region36: #{_lambda_.11} parent=5 // pred_fallthru
      _
    %p210 = scmp.le.s32.totalorder 1, %s12
    %p211 = scmp.lt.s32.totalorder %s12, 3
    %p212 = pnand %p210, %p211
    %p213 = pneg %p212
    // Predicated region
    $region41: #{_lambda_.11} parent=5 // pred_check
      _
    $region42: #{_lambda_.11} parent=5 // pred_check_branch
      %215 = sbr.rel (%p212) target = $region44
    $region43: #{_lambda_.11} parent=5 // pred_region
      %s216 = ssub.s32 %s12, 1
      %p217 = scmp.lt.s32.totalorder %s17, 1
      %s218 = scalar_select %p217, %s17, 1
      %s219 = smul.addr %s218, 4
      %s220 = scalar_lea.vmem %s0, %s219
      %p221 = pneg %p38
      %p222 = pneg %p35
      %p223 = pneg %p59
      %p224 = pneg %p56
      %p225 = pneg %p80
      %p226 = pneg %p77
      %p227 = pneg %p101
      %p228 = pneg %p98
      %p229 = pneg %p122
      %p230 = pneg %p119
      %p231 = pneg %p143
      %p232 = pneg %p140
      %p233 = pneg %p169
      %p234 = pneg %p166
      %p235 = scmp.lt.s32.totalorder %s17, 1
      %s236 = scalar_select %p235, %s17, 1
      %s237 = smul.addr %s236, 4
      %s238 = scalar_lea.vmem %s6, %s237
      %p239 = scmp.lt.s32.totalorder %s17, 1
      %s240 = scalar_select %p239, %s17, 1
      %s241 = smul.addr %s240, 4
      %s242 = scalar_lea.vmem %s0, %s241
      %p243 = scmp.lt.s32.totalorder %s17, 1
      %s244 = scalar_select %p243, %s17, 1
      %s245 = smul.addr %s244, 4
      %s246 = scalar_lea.vmem %s6, %s245
      %v248 = vld [vmem:[%s242] sm:$0x7]
      %v249 = vunpack.c.l.bf16 %v248
      %vm250 = vcmask 258048
      %v251 = vsel %vm250, %v249, 0.0
      %252 = vadd.xlane.f32.xlu0 %v251
      %v253 = vpop.xlane.xlu0 %252
      %v254 = vrcp.pop 32.0
      %v255 = vmul.f32 %v253, %v254
      %v256 = vsub.f32 %v249, %v255
      %v257 = vmul.f32 %v256, %v256
      %v258 = vsel %vm250, %v257, 0.0
      %259 = vadd.xlane.f32.xlu0 %v258
      %v260 = vpop.xlane.xlu0 %259
      %v261 = vmul.f32 %v260, %v254
      %v262 = vadd.f32 %v261, 1e-05
      %v263 = vrsqrt.pop %v262
      %v264 = vmul.f32 %v256, %v263
      %v265 = vld [vmem:[%s1] sm:$0x1]
      %v267 = vlaneseq
      %v268 = vshrl.u32 %v267, 7
      %v269 = vsub.s32 0, %v268
      %v270 = vrot.slane %v265, %v269
      %v272 = vmul.f32 %v264, %v270
      %v273 = vld [vmem:[%s2] sm:$0x1]
      %v275 = vlaneseq
      %v276 = vshrl.u32 %v275, 7
      %v277 = vsub.s32 0, %v276
      %v278 = vrot.slane %v273, %v277
      %v280 = vadd.f32 %v272, %v278
      %v281 = vpack.c.bf16 %v280, %v280
      %v282 = vld [vmem:[%s3] sm:$0xf]
      %v283 = vld [vmem:[%s3 + $0x4] sm:$0xf]
      %v284 = vld [vmem:[%s3 + $0x8] sm:$0xf]
      %v285 = vld [vmem:[%s3 + $0xc] sm:$0xf]
      %v290 = vunpack.c.l.b16 %v282
      %v291 = vunpack.c.l.b16 %v283
      %v292 = vunpack.c.l.b16 %v284
      %v293 = vunpack.c.l.b16 %v285
      %v294 = vpack.c.b16 %v291, %v290
      %v295 = vpack.c.b16 %v293, %v292
      %vm298 = vcmask 261120
      %v300 = vsel %vm298, %v281, 0
      %302 = vmatprep.subr.bf16.mxu0 0
      %303 = vmatpush1.bf16.msra.mxu0 %v294
      %304 = vmatprep.subr.bf16.mxu0 0
      %305 = vmatpush1.bf16.msra.mxu0 %v295
      %306 = vmatprep.subr.bf16.mxu0 0
      %307 = vmatpush1.bf16.msra.mxu0 0
      %308 = vmatprep.subr.bf16.mxu0 0
      %309 = vmatpush1.bf16.msra.mxu0 0
      %310 = vmatprep.subr.bf16.mxu0 0
      %311 = vmatpush1.bf16.msra.mxu0 0
      %312 = vmatprep.subr.bf16.mxu0 0
      %313 = vmatpush1.bf16.msra.mxu0 0
      %314 = vmatprep.subr.bf16.mxu0 0
      %315 = vmatpush1.bf16.msra.mxu0 0
      %316 = vmatprep.subr.bf16.mxu0 0
      %317 = vmatpush1.bf16.msra.mxu0 0
      %318 = vmatprep.subr.bf16.mxu0 0
      %319 = vmatpush1.bf16.msra.mxu0 0
      %320 = vmatprep.subr.bf16.mxu0 0
      %321 = vmatpush1.bf16.msra.mxu0 0
      %322 = vmatprep.subr.bf16.mxu0 0
      %323 = vmatpush1.bf16.msra.mxu0 0
      %324 = vmatprep.subr.bf16.mxu0 0
      %325 = vmatpush1.bf16.msra.mxu0 0
      %326 = vmatprep.subr.bf16.mxu0 0
      %327 = vmatpush1.bf16.msra.mxu0 0
      %328 = vmatprep.subr.bf16.mxu0 0
      %329 = vmatpush1.bf16.msra.mxu0 0
      %330 = vmatprep.subr.bf16.mxu0 0
      %331 = vmatpush1.bf16.msra.mxu0 0
      %332 = vmatprep.subr.bf16.mxu0 0
      %333 = vmatpush1.bf16.msra.mxu0 0
      %334 = vmatprep.mubr.bf16.mxu0 0
      %335 = vmatmul.mubr.bf16.gmra.mrb[0].mxu0 %v300
      %v336 = vpop.f32.mrb[0].mxu0
      %v337 = vadd.f32 0.0, %v336
      %v338 = vpop.f32.mrb[0].mxu0
      %v339 = vpop.f32.mrb[0].mxu0
      %v340 = vpop.f32.mrb[0].mxu0
      %341 = vdwg.mxu0
      %v342 = vpack.c.bf16 %v337, %v337
      %344 = vrot.lane.b32.xlu0 %v342, 96
      %v345 = vpop.permute.xlu0 %344
      %vm346 = vcmask 130048
      %v348 = vsel %vm346, %v342, 0
      %v351 = vsel %vm346, %v345, 0
      %353 = vmatprep.subr.bf16.mxu0 0
      %354 = vmatpush1.bf16.xpose.msra.mxu0 %v351
      %355 = vmatprep.subr.bf16.mxu0 0
      %356 = vmatpush1.bf16.xpose.msra.mxu0 0
      %357 = vmatprep.subr.bf16.mxu0 0
      %358 = vmatpush1.bf16.xpose.msra.mxu0 0
      %359 = vmatprep.subr.bf16.mxu0 0
      %360 = vmatpush1.bf16.xpose.msra.mxu0 0
      %361 = vmatprep.subr.bf16.mxu0 0
      %362 = vmatpush1.bf16.xpose.msra.mxu0 0
      %363 = vmatprep.subr.bf16.mxu0 0
      %364 = vmatpush1.bf16.xpose.msra.mxu0 0
      %365 = vmatprep.subr.bf16.mxu0 0
      %366 = vmatpush1.bf16.xpose.msra.mxu0 0
      %367 = vmatprep.subr.bf16.mxu0 0
      %368 = vmatpush1.bf16.xpose.msra.mxu0 0
      %369 = vmatprep.subr.bf16.mxu0 0
      %370 = vmatpush1.bf16.xpose.msra.mxu0 0
      %371 = vmatprep.subr.bf16.mxu0 0
      %372 = vmatpush1.bf16.xpose.msra.mxu0 0
      %373 = vmatprep.subr.bf16.mxu0 0
      %374 = vmatpush1.bf16.xpose.msra.mxu0 0
      %375 = vmatprep.subr.bf16.mxu0 0
      %376 = vmatpush1.bf16.xpose.msra.mxu0 0
      %377 = vmatprep.subr.bf16.mxu0 0
      %378 = vmatpush1.bf16.xpose.msra.mxu0 0
      %379 = vmatprep.subr.bf16.mxu0 0
      %380 = vmatpush1.bf16.xpose.msra.mxu0 0
      %381 = vmatprep.subr.bf16.mxu0 0
      %382 = vmatpush1.bf16.xpose.msra.mxu0 0
      %383 = vmatprep.subr.bf16.mxu0 0
      %384 = vmatpush1.bf16.xpose.msra.mxu0 0
      %385 = vmatprep.mubr.bf16.mxu0 0
      %386 = vmatmul.mubr.bf16.gmra.mrb[0].mxu0 %v348
      %v387 = vpop.f32.mrb[0].mxu0
      %v388 = vadd.f32 0.0, %v387
      %v389 = vpop.f32.mrb[0].mxu0
      %v390 = vpop.f32.mrb[0].mxu0
      %v391 = vpop.f32.mrb[0].mxu0
      %392 = vdwg.mxu0
      %v393 = vmul.f32 %v388, 0.25
      %vm394 = vcmask 36864
      %v395 = vsel %vm394, %v393, -inf
      %396 = vmax.xlane.f32.xlu0 %v395
      %v397 = vpop.xlane.xlu0 %396
      %v398 = vsub.f32 %v393, %v397
      %v399 = vmul.f32 %v398, 1.442695
      %v400 = vpow.pop %v399
      %v401 = vsel %vm394, %v400, 0.0
      %402 = vadd.xlane.f32.xlu0 %v401
      %v403 = vpop.xlane.xlu0 %402
      %v404 = vrcp.pop %v403
      %v405 = vmul.f32 %v400, %v404
      %v406 = vpack.c.bf16 %v405, %v405
      %407 = vrot.lane.b32.xlu0 %v342, 64
      %v408 = vpop.permute.xlu0 %407
      %vm409 = vcmask 39936
      %v411 = vsel %vm409, %v406, 0
      %vm413 = vcmask 1041408
      %vm414 = vcmask 1042432
      %v415 = vsel %vm413, 4294967295, 65535
      %v416 = vsel %vm414, %v415, 0
      %v418 = vand.u32 %v408, %v416
      %420 = vmatprep.subr.bf16.mxu0 0
      %421 = vmatpush1.bf16.msra.mxu0 %v418
      %422 = vmatprep.subr.bf16.mxu0 0
      %423 = vmatpush1.bf16.msra.mxu0 0
      %424 = vmatprep.subr.bf16.mxu0 0
      %425 = vmatpush1.bf16.msra.mxu0 0
      %426 = vmatprep.subr.bf16.mxu0 0
      %427 = vmatpush1.bf16.msra.mxu0 0
      %428 = vmatprep.subr.bf16.mxu0 0
      %429 = vmatpush1.bf16.msra.mxu0 0
      %430 = vmatprep.subr.bf16.mxu0 0
      %431 = vmatpush1.bf16.msra.mxu0 0
      %432 = vmatprep.subr.bf16.mxu0 0
      %433 = vmatpush1.bf16.msra.mxu0 0
      %434 = vmatprep.subr.bf16.mxu0 0
      %435 = vmatpush1.bf16.msra.mxu0 0
      %436 = vmatprep.subr.bf16.mxu0 0
      %437 = vmatpush1.bf16.msra.mxu0 0
      %438 = vmatprep.subr.bf16.mxu0 0
      %439 = vmatpush1.bf16.msra.mxu0 0
      %440 = vmatprep.subr.bf16.mxu0 0
      %441 = vmatpush1.bf16.msra.mxu0 0
      %442 = vmatprep.subr.bf16.mxu0 0
      %443 = vmatpush1.bf16.msra.mxu0 0
      %444 = vmatprep.subr.bf16.mxu0 0
      %445 = vmatpush1.bf16.msra.mxu0 0
      %446 = vmatprep.subr.bf16.mxu0 0
      %447 = vmatpush1.bf16.msra.mxu0 0
      %448 = vmatprep.subr.bf16.mxu0 0
      %449 = vmatpush1.bf16.msra.mxu0 0
      %450 = vmatprep.subr.bf16.mxu0 0
      %451 = vmatpush1.bf16.msra.mxu0 0
      %452 = vmatprep.mubr.bf16.mxu0 0
      %453 = vmatmul.mubr.bf16.gmra.mrb[0].mxu0 %v411
      %v454 = vpop.f32.mrb[0].mxu0
      %v455 = vadd.f32 0.0, %v454
      %v456 = vpop.f32.mrb[0].mxu0
      %v457 = vpop.f32.mrb[0].mxu0
      %v458 = vpop.f32.mrb[0].mxu0
      %459 = vdwg.mxu0
      %460 = vrot.lane.b32.xlu0 %v342, 112
      %v461 = vpop.permute.xlu0 %460
      %462 = vrot.lane.b32.xlu0 %v342, 80
      %v463 = vpop.permute.xlu0 %462
      %v465 = vsel %vm346, %v461, 0
      %v468 = vsel %vm346, %v463, 0
      %470 = vmatprep.subr.bf16.mxu0 0
      %471 = vmatpush1.bf16.xpose.msra.mxu0 %v468
      %472 = vmatprep.subr.bf16.mxu0 0
      %473 = vmatpush1.bf16.xpose.msra.mxu0 0
      %474 = vmatprep.subr.bf16.mxu0 0
      %475 = vmatpush1.bf16.xpose.msra.mxu0 0
      %476 = vmatprep.subr.bf16.mxu0 0
      %477 = vmatpush1.bf16.xpose.msra.mxu0 0
      %478 = vmatprep.subr.bf16.mxu0 0
      %479 = vmatpush1.bf16.xpose.msra.mxu0 0
      %480 = vmatprep.subr.bf16.mxu0 0
      %481 = vmatpush1.bf16.xpose.msra.mxu0 0
      %482 = vmatprep.subr.bf16.mxu0 0
      %483 = vmatpush1.bf16.xpose.msra.mxu0 0
      %484 = vmatprep.subr.bf16.mxu0 0
      %485 = vmatpush1.bf16.xpose.msra.mxu0 0
      %486 = vmatprep.subr.bf16.mxu0 0
      %487 = vmatpush1.bf16.xpose.msra.mxu0 0
      %488 = vmatprep.subr.bf16.mxu0 0
      %489 = vmatpush1.bf16.xpose.msra.mxu0 0
      %490 = vmatprep.subr.bf16.mxu0 0
      %491 = vmatpush1.bf16.xpose.msra.mxu0 0
      %492 = vmatprep.subr.bf16.mxu0 0
      %493 = vmatpush1.bf16.xpose.msra.mxu0 0
      %494 = vmatprep.subr.bf16.mxu0 0
      %495 = vmatpush1.bf16.xpose.msra.mxu0 0
      %496 = vmatprep.subr.bf16.mxu0 0
      %497 = vmatpush1.bf16.xpose.msra.mxu0 0
      %498 = vmatprep.subr.bf16.mxu0 0
      %499 = vmatpush1.bf16.xpose.msra.mxu0 0
      %500 = vmatprep.subr.bf16.mxu0 0
      %501 = vmatpush1.bf16.xpose.msra.mxu0 0
      %502 = vmatprep.mubr.bf16.mxu0 0
      %503 = vmatmul.mubr.bf16.gmra.mrb[0].mxu0 %v465
      %v504 = vpop.f32.mrb[0].mxu0
      %v505 = vadd.f32 0.0, %v504
      %v506 = vpop.f32.mrb[0].mxu0
      %v507 = vpop.f32.mrb[0].mxu0
      %v508 = vpop.f32.mrb[0].mxu0
      %509 = vdwg.mxu0
      %v510 = vmul.f32 %v505, 0.25
      %v511 = vsel %vm394, %v510, -inf
      %512 = vmax.xlane.f32.xlu0 %v511
      %v513 = vpop.xlane.xlu0 %512
      %v514 = vsub.f32 %v510, %v513
      %v515 = vmul.f32 %v514, 1.442695
      %v516 = vpow.pop %v515
      %v517 = vsel %vm394, %v516, 0.0
      %518 = vadd.xlane.f32.xlu0 %v517
      %v519 = vpop.xlane.xlu0 %518
      %v520 = vrcp.pop %v519
      %v521 = vmul.f32 %v516, %v520
      %v522 = vpack.c.bf16 %v521, %v521
      %523 = vrot.lane.b32.xlu0 %v342, 48
      %v524 = vpop.permute.xlu0 %523
      %v526 = vsel %vm409, %v522, 0
      %v529 = vand.u32 %v524, %v416
      %531 = vmatprep.subr.bf16.mxu0 0
      %532 = vmatpush1.bf16.msra.mxu0 %v529
      %533 = vmatprep.subr.bf16.mxu0 0
      %534 = vmatpush1.bf16.msra.mxu0 0
      %535 = vmatprep.subr.bf16.mxu0 0
      %536 = vmatpush1.bf16.msra.mxu0 0
      %537 = vmatprep.subr.bf16.mxu0 0
      %538 = vmatpush1.bf16.msra.mxu0 0
      %539 = vmatprep.subr.bf16.mxu0 0
      %540 = vmatpush1.bf16.msra.mxu0 0
      %541 = vmatprep.subr.bf16.mxu0 0
      %542 = vmatpush1.bf16.msra.mxu0 0
      %543 = vmatprep.subr.bf16.mxu0 0
      %544 = vmatpush1.bf16.msra.mxu0 0
      %545 = vmatprep.subr.bf16.mxu0 0
      %546 = vmatpush1.bf16.msra.mxu0 0
      %547 = vmatprep.subr.bf16.mxu0 0
      %548 = vmatpush1.bf16.msra.mxu0 0
      %549 = vmatprep.subr.bf16.mxu0 0
      %550 = vmatpush1.bf16.msra.mxu0 0
      %551 = vmatprep.subr.bf16.mxu0 0
      %552 = vmatpush1.bf16.msra.mxu0 0
      %553 = vmatprep.subr.bf16.mxu0 0
      %554 = vmatpush1.bf16.msra.mxu0 0
      %555 = vmatprep.subr.bf16.mxu0 0
      %556 = vmatpush1.bf16.msra.mxu0 0
      %557 = vmatprep.subr.bf16.mxu0 0
      %558 = vmatpush1.bf16.msra.mxu0 0
      %559 = vmatprep.subr.bf16.mxu0 0
      %560 = vmatpush1.bf16.msra.mxu0 0
      %561 = vmatprep.subr.bf16.mxu0 0
      %562 = vmatpush1.bf16.msra.mxu0 0
      %563 = vmatprep.mubr.bf16.mxu0 0
      %564 = vmatmul.mubr.bf16.gmra.mrb[0].mxu0 %v526
      %v565 = vpop.f32.mrb[0].mxu0
      %v566 = vadd.f32 0.0, %v565
      %v567 = vpop.f32.mrb[0].mxu0
      %v568 = vpop.f32.mrb[0].mxu0
      %v569 = vpop.f32.mrb[0].mxu0
      %570 = vdwg.mxu0
      %572 = vrot.lane.b32.xlu0 %v566, 16
      %v573 = vpop.permute.xlu0 %572
      %v575 = vsel %vm346, %v455, %v573
      %v576 = vpack.c.bf16 %v575, %v575
      %v577 = vld [vmem:[%s4] sm:$0xf]
      %v578 = vld [vmem:[%s4 + $0x4] sm:$0xf]
      %v579 = vld [vmem:[%s4 + $0x8] sm:$0xf]
      %v580 = vld [vmem:[%s4 + $0xc] sm:$0xf]
      %v585 = vunpack.c.l.b16 %v577
      %v586 = vunpack.c.l.b16 %v578
      %v587 = vunpack.c.l.b16 %v579
      %v588 = vunpack.c.l.b16 %v580
      %v589 = vpack.c.b16 %v586, %v585
      %v590 = vpack.c.b16 %v588, %v587
      %v594 = vsel %vm298, %v576, 0
      %596 = vmatprep.subr.bf16.mxu0 0
      %597 = vmatpush1.bf16.msra.mxu0 %v589
      %598 = vmatprep.subr.bf16.mxu0 0
      %599 = vmatpush1.bf16.msra.mxu0 %v590
      %600 = vmatprep.subr.bf16.mxu0 0
      %601 = vmatpush1.bf16.msra.mxu0 0
      %602 = vmatprep.subr.bf16.mxu0 0
      %603 = vmatpush1.bf16.msra.mxu0 0
      %604 = vmatprep.subr.bf16.mxu0 0
      %605 = vmatpush1.bf16.msra.mxu0 0
      %606 = vmatprep.subr.bf16.mxu0 0
      %607 = vmatpush1.bf16.msra.mxu0 0
      %608 = vmatprep.subr.bf16.mxu0 0
      %609 = vmatpush1.bf16.msra.mxu0 0
      %610 = vmatprep.subr.bf16.mxu0 0
      %611 = vmatpush1.bf16.msra.mxu0 0
      %612 = vmatprep.subr.bf16.mxu0 0
      %613 = vmatpush1.bf16.msra.mxu0 0
      %614 = vmatprep.subr.bf16.mxu0 0
      %615 = vmatpush1.bf16.msra.mxu0 0
      %616 = vmatprep.subr.bf16.mxu0 0
      %617 = vmatpush1.bf16.msra.mxu0 0
      %618 = vmatprep.subr.bf16.mxu0 0
      %619 = vmatpush1.bf16.msra.mxu0 0
      %620 = vmatprep.subr.bf16.mxu0 0
      %621 = vmatpush1.bf16.msra.mxu0 0
      %622 = vmatprep.subr.bf16.mxu0 0
      %623 = vmatpush1.bf16.msra.mxu0 0
      %624 = vmatprep.subr.bf16.mxu0 0
      %625 = vmatpush1.bf16.msra.mxu0 0
      %626 = vmatprep.subr.bf16.mxu0 0
      %627 = vmatpush1.bf16.msra.mxu0 0
      %628 = vmatprep.mubr.bf16.mxu0 0
      %629 = vmatmul.mubr.bf16.gmra.mrb[0].mxu0 %v594
      %v630 = vpop.f32.mrb[0].mxu0
      %v631 = vadd.f32 0.0, %v630
      %v632 = vpop.f32.mrb[0].mxu0
      %v633 = vpop.f32.mrb[0].mxu0
      %v634 = vpop.f32.mrb[0].mxu0
      %635 = vdwg.mxu0
      %v636 = vadd.f32 %v249, %v631
      %v637 = vld [vmem:[%s5] sm:$0x1]
      %v639 = vlaneseq
      %v640 = vshrl.u32 %v639, 7
      %v641 = vsub.s32 0, %v640
      %v642 = vrot.slane %v637, %v641
      %v644 = vadd.f32 %v636, %v642
      %v645 = vpack.c.bf16 %v644, %v644
      %vm646 = vcmask 256000
      %vm647 = vsmask.f32 2304
      %vm648 = vmand %vm646, %vm647
      %v649 = vld [vmem:[%s246] sm:$0x7]
      %v650 = vsel %vm648, %v645, %v649
      %651 = vst [vmem:[%s246] sm:$0x7] %v650
      %p652 = scmp.lt.s32.totalorder %s17, 1
      %s653 = scalar_select %p652, %s17, 1
      %s654 = smul.addr %s653, 4
      %s655 = scalar_lea.vmem %s6, %s654
      // Predicated region
      $region45: #{_lambda_.11} parent=43 // pred_check
        %p656 = pneg %p166
      $region46: #{_lambda_.11} parent=43 // pred_check_branch
        %658 = sbr.rel (%p656) target = $region48
      $region47: #{_lambda_.11} parent=43 // pred_region
        _
      $region48: #{_lambda_.11} parent=43 // pred_fallthru
        _
    $region44: #{_lambda_.11} parent=5 // pred_fallthru
      _
    %p659 = scmp.le.s32.totalorder 2, %s12
    // Predicated region
    $region49: #{_lambda_.11} parent=5 // pred_check
      %p660 = pneg %p659
    $region50: #{_lambda_.11} parent=5 // pred_check_branch
      %662 = sbr.rel (%p660) target = $region52
    $region51: #{_lambda_.11} parent=5 // pred_region
      %s663 = ssub.s32 %s12, 2
      // Predicated region
      $region53: #{_lambda_.11} parent=51 // pred_check
        %p664 = pneg %p172
      $region54: #{_lambda_.11} parent=51 // pred_check_branch
        %666 = sbr.rel (%p664) target = $region56
      $region55: #{_lambda_.11} parent=51 // pred_region
        %p667 = scmp.lt.s32.totalorder %s18, 1
        %s668 = scalar_select %p667, %s18, 1
        %s669 = smul.addr %s668, 4
        %s670 = scalar_lea.vmem %s6, %s669
      $region56: #{_lambda_.11} parent=51 // pred_fallthru
        _
    $region52: #{_lambda_.11} parent=5 // pred_fallthru
      _
  $region6: #{_lambda_.11} parent=0 // loop_footer
    %s16 = sadd.s32 1, %s12
  $region7: #{_lambda_.11} parent=0 // loop_footer_branch
    %11 = sbr.rel target = $region3
  $region8: #{_lambda_.11} parent=0 // loop_exit
    _

// kernel: _lambda_.15
$region0: #{_lambda_.15}
  #allocation0 [shape = 'u32[]', space=smem, size = 0x4, offset = 0x4, fixed_abs, tag = 'smem constant byte address 0x4 - core index']
  #allocation1 [shape = 'u32[144,128]{1,0:T(1,128)}', space=vmem, size = 0x12000, scoped, tag = 'internal scratch']
  %s0 = inlined_call_operand.vmem [shape: bf16[2,32], index: 0, kind: input, shape index: {}]
  %s1 = inlined_call_operand.vmem [shape: f32[1,32], index: 1, kind: input, shape index: {}]
  %s2 = inlined_call_operand.vmem [shape: f32[1,32], index: 2, kind: input, shape index: {}]
  %s3 = inlined_call_operand.vmem [shape: bf16[32,10], index: 3, kind: input, shape index: {}]
  %s4 = inlined_call_operand.vmem [shape: f32[1,10], index: 4, kind: input, shape index: {}]
  %s5 = inlined_call_operand.hbm [shape: f32[2,10], index: 5, kind: output, shape index: {}]
  %s6 = sld [smem:[#allocation0]]
  $region30: #{_lambda_.15} parent=0
    _
  %s8 = ssub.s32 1, %s6
  %s9 = scalar_select 0, %s8, %s6
  $region1: #{_lambda_.15} parent=0
    #allocation2 [shape = 'u8[1024]{0}', space=vmem, size = 0x400, scoped, tag = 'output window, operand 0, single buffered']
    #allocation3 [shape = 's32[1]{0}', space=sflag, size = 0x4, scoped, tag = 'scoped memory for _lambda_.15']
    %10 = vsyncpa [#allocation3], 0
    // Predicated region
    $region2: #{_lambda_.15} parent=1 // pred_check
      _
    $region3: #{_lambda_.15} parent=1 // pred_check_branch
      %12 = sbr.rel (0) target = $region5
    $region4: #{_lambda_.15} parent=1 // pred_region
      _
    $region5: #{_lambda_.15} parent=1 // pred_fallthru
      _
    // Predicated region
    $region6: #{_lambda_.15} parent=1 // pred_check
      _
    $region7: #{_lambda_.15} parent=1 // pred_check_branch
      %14 = sbr.rel (0) target = $region9
    $region8: #{_lambda_.15} parent=1 // pred_region
      _
    $region9: #{_lambda_.15} parent=1 // pred_fallthru
      _
    // Predicated region
    $region10: #{_lambda_.15} parent=1 // pred_check
      _
    $region11: #{_lambda_.15} parent=1 // pred_check_branch
      %16 = sbr.rel (0) target = $region13
    $region12: #{_lambda_.15} parent=1 // pred_region
      _
    $region13: #{_lambda_.15} parent=1 // pred_fallthru
      _
    // Predicated region
    $region14: #{_lambda_.15} parent=1 // pred_check
      _
    $region15: #{_lambda_.15} parent=1 // pred_check_branch
      %18 = sbr.rel (0) target = $region17
    $region16: #{_lambda_.15} parent=1 // pred_region
      _
    $region17: #{_lambda_.15} parent=1 // pred_fallthru
      _
    // Predicated region
    $region18: #{_lambda_.15} parent=1 // pred_check
      _
    $region19: #{_lambda_.15} parent=1 // pred_check_branch
      %20 = sbr.rel (0) target = $region21
    $region20: #{_lambda_.15} parent=1 // pred_region
      _
    $region21: #{_lambda_.15} parent=1 // pred_fallthru
      _
    %v22 = vld [vmem:[%s0] sm:$0x1]
    %v23 = vunpack.c.l.bf16 %v22
    %v24 = vld [vmem:[%s1] sm:$0x1]
    %v25 = vld [vmem:[%s2] sm:$0x1]
    %vm26 = vcmask 254976
    %v27 = vsel %vm26, %v23, 0.0
    %28 = vadd.xlane.f32.xlu0 %v27
    %v29 = vpop.xlane.xlu0 %28
    %v30 = vrcp.pop 32.0
    %v31 = vmul.f32 %v29, %v30
    %v32 = vsub.f32 %v23, %v31
    %v33 = vmul.f32 %v32, %v32
    %v34 = vsel %vm26, %v33, 0.0
    %35 = vadd.xlane.f32.xlu0 %v34
    %v36 = vpop.xlane.xlu0 %35
    %v37 = vmul.f32 %v36, %v30
    %v38 = vadd.f32 %v37, 1e-05
    %v39 = vrsqrt.pop %v38
    %v40 = vmul.f32 %v32, %v39
    %v42 = vlaneseq
    %v43 = vshrl.u32 %v42, 7
    %v44 = vsub.s32 0, %v43
    %v45 = vrot.slane %v24, %v44
    %v47 = vmul.f32 %v40, %v45
    %v49 = vlaneseq
    %v50 = vshrl.u32 %v49, 7
    %v51 = vsub.s32 0, %v50
    %v52 = vrot.slane %v25, %v51
    %v54 = vadd.f32 %v47, %v52
    %v55 = vld [vmem:[%s3] sm:$0xf]
    %v56 = vld [vmem:[%s3 + $0x4] sm:$0xf]
    %v57 = vld [vmem:[%s3 + $0x8] sm:$0xf]
    %v58 = vld [vmem:[%s3 + $0xc] sm:$0xf]
    %v59 = vld [vmem:[%s4] sm:$0x1]
    %v60 = vpack.c.bf16 %v54, %v54
    %v62 = vlaneseq
    %v63 = vshrl.u32 %v62, 7
    %v64 = vsub.s32 0, %v63
    %v65 = vrot.slane %v59, %v64
    %v71 = vunpack.c.l.b16 %v55
    %v72 = vunpack.c.l.b16 %v56
    %v73 = vunpack.c.l.b16 %v57
    %v74 = vunpack.c.l.b16 %v58
    %v75 = vpack.c.b16 %v72, %v71
    %v76 = vpack.c.b16 %v74, %v73
    %vm79 = vcmask 261120
    %v81 = vsel %vm79, %v60, 0
    %83 = vmatprep.subr.bf16.mxu0 0
    %84 = vmatpush1.bf16.msra.mxu0 %v75
    %85 = vmatprep.subr.bf16.mxu0 0
    %86 = vmatpush1.bf16.msra.mxu0 %v76
    %87 = vmatprep.subr.bf16.mxu0 0
    %88 = vmatpush1.bf16.msra.mxu0 0
    %89 = vmatprep.subr.bf16.mxu0 0
    %90 = vmatpush1.bf16.msra.mxu0 0
    %91 = vmatprep.subr.bf16.mxu0 0
    %92 = vmatpush1.bf16.msra.mxu0 0
    %93 = vmatprep.subr.bf16.mxu0 0
    %94 = vmatpush1.bf16.msra.mxu0 0
    %95 = vmatprep.subr.bf16.mxu0 0
    %96 = vmatpush1.bf16.msra.mxu0 0
    %97 = vmatprep.subr.bf16.mxu0 0
    %98 = vmatpush1.bf16.msra.mxu0 0
    %99 = vmatprep.subr.bf16.mxu0 0
    %100 = vmatpush1.bf16.msra.mxu0 0
    %101 = vmatprep.subr.bf16.mxu0 0
    %102 = vmatpush1.bf16.msra.mxu0 0
    %103 = vmatprep.subr.bf16.mxu0 0
    %104 = vmatpush1.bf16.msra.mxu0 0
    %105 = vmatprep.subr.bf16.mxu0 0
    %106 = vmatpush1.bf16.msra.mxu0 0
    %107 = vmatprep.subr.bf16.mxu0 0
    %108 = vmatpush1.bf16.msra.mxu0 0
    %109 = vmatprep.subr.bf16.mxu0 0
    %110 = vmatpush1.bf16.msra.mxu0 0
    %111 = vmatprep.subr.bf16.mxu0 0
    %112 = vmatpush1.bf16.msra.mxu0 0
    %113 = vmatprep.subr.bf16.mxu0 0
    %114 = vmatpush1.bf16.msra.mxu0 0
    %115 = vmatprep.mubr.bf16.mxu0 0
    %116 = vmatmul.mubr.bf16.gmra.mrb[0].mxu0 %v81
    %v117 = vpop.f32.mrb[0].mxu0
    %v118 = vadd.f32 %v65, %v117
    %v119 = vpop.f32.mrb[0].mxu0
    %v120 = vpop.f32.mrb[0].mxu0
    %v121 = vpop.f32.mrb[0].mxu0
    %122 = vdwg.mxu0
    %vm123 = vcmask 74752
    %124 = vst.msk [vmem:[#allocation2] sm:$0x3] %vm123, %v118
    // Predicated region
    $region22: #{_lambda_.15} parent=1 // pred_check
      _
    $region23: #{_lambda_.15} parent=1 // pred_check_branch
      %126 = sbr.rel (0) target = $region25
    $region24: #{_lambda_.15} parent=1 // pred_region
      %s128 = ssub.s32 32, 32
      %129 = vsyncadd [#allocation3], %s128
      %s131 = sshll.u32 [#allocation2], 4
      %s132 = int_to_ptr.vmem [resolvable:$true] %s131
      %134 = dma.vmem_to_hbm [thread:$0]  %s132, 32, %s5, [#allocation3]
    $region25: #{_lambda_.15} parent=1 // pred_fallthru
      _
    // Predicated region
    $region26: #{_lambda_.15} parent=1 // pred_check
      _
    $region27: #{_lambda_.15} parent=1 // pred_check_branch
      %136 = sbr.rel (0) target = $region29
    $region28: #{_lambda_.15} parent=1 // pred_region
      %137 = dma.done [#allocation3], 32
    $region29: #{_lambda_.15} parent=1 // pred_fallthru
      _
    %138 = vsyncpa [#allocation3], 1

// kernel: _lambda_.12
$region0: #{_lambda_.12}
  #allocation0 [shape = 'u32[]', space=smem, size = 0x4, offset = 0x4, fixed_abs, tag = 'smem constant byte address 0x4 - core index']
  #allocation1 [shape = 'u32[144,128]{1,0:T(1,128)}', space=vmem, size = 0x12000, scoped, tag = 'internal scratch']
  #allocation2 [shape = 'f32[4,4,128]{2,1,0:T(4,128)}', space=vmem, size = 0x2000, scoped, tag = 'scratch operand']
  %s0 = inlined_call_operand.vmem [shape: bf16[2,5,32], index: 0, kind: input, shape index: {}]
  %s1 = inlined_call_operand.vmem [shape: f32[1,32], index: 1, kind: input, shape index: {}]
  %s2 = inlined_call_operand.vmem [shape: f32[1,32], index: 2, kind: input, shape index: {}]
  %s3 = inlined_call_operand.vmem [shape: bf16[32,128], index: 3, kind: input, shape index: {}]
  %s4 = inlined_call_operand.vmem [shape: f32[1,128], index: 4, kind: input, shape index: {}]
  %s5 = inlined_call_operand.vmem [shape: f32[9,128], index: 5, kind: input, shape index: {}]
  %s6 = inlined_call_operand.vmem [shape: f32[1,128], index: 6, kind: input, shape index: {}]
  %s7 = inlined_call_operand.vmem [shape: bf16[128,32], index: 7, kind: input, shape index: {}]
  %s8 = inlined_call_operand.vmem [shape: f32[1,32], index: 8, kind: input, shape index: {}]
  %s9 = inlined_call_operand.vmem [shape: bf16[2,5,32], index: 9, kind: output, shape index: {}]
  %s10 = sld [smem:[#allocation0]]
  $region69: #{_lambda_.12} parent=0
    _
  %s12 = ssub.s32 1, %s10
  %s13 = scalar_select 0, %s12, %s10
  loop: start=0, step=1, limit=4
  $region2: #{_lambda_.12} parent=0 // loop_pre_header
    _
  $region3: #{_lambda_.12} parent=0 // loop_header
    %s15 = sphi 0, %s19
    %p16 = scmp.ge.s32.totalorder %s15, 4
    %s25 = sphi 0, %s27
    %s28 = sphi 0, %s25
    %s29 = sphi 0, %s28
    %s45 = sphi 0, %s29
    %s49 = sphi 0, %s49
    %s51 = sphi 0, %s49
    %s52 = sphi 0, %s51
    %s66 = sphi 0, %s52
    %s70 = sphi 0, %s70
    %s72 = sphi 0, %s70
    %s73 = sphi 0, %s72
    %s87 = sphi 0, %s73
    %s91 = sphi 0, %s91
    %s93 = sphi 0, %s91
    %s94 = sphi 0, %s93
    %s108 = sphi 0, %s94
    %s112 = sphi 0, %s112
    %s114 = sphi 0, %s112
    %s115 = sphi 0, %s114
    %s129 = sphi 0, %s115
    %s133 = sphi 0, %s133
    %s135 = sphi 0, %s133
    %s136 = sphi 0, %s135
    %s150 = sphi 0, %s136
    %s154 = sphi 0, %s154
    %s156 = sphi 0, %s154
    %s157 = sphi 0, %s156
    %s171 = sphi 0, %s157
    %s175 = sphi 0, %s175
    %s177 = sphi 0, %s175
    %s178 = sphi 0, %s177
    %s192 = sphi 0, %s178
    %s196 = sphi 0, %s196
    %s198 = sphi 0, %s196
    %s199 = sphi 0, %s198
    %s213 = sphi 0, %s199
    %s219 = sphi 0, %s221
    %s222 = sphi 0, %s219
    %s223 = sphi 0, %s222
    %s239 = sphi 0, %s223
  $region4: #{_lambda_.12} parent=0 // loop_header_branch
    %18 = sbr.rel (%p16) target = $region8
  $region5: #{_lambda_.12} parent=0 // loop_body
    %s20 = ssub.s32 %s15, 1
    %s21 = ssub.s32 %s15, 2
    %s22 = sadd.s32 %s15, 1
    %s23 = ssub.s32 %s15, %s22
    %p24 = scmp.eq.s32.totalorder %s23, 0
    %s26 = sadd.s32 %s25, 1
    %s27 = scalar_select %p24, %s25, %s26
    %p30 = pneg %p24
    %p31 = scmp.eq.s32.totalorder %s15, 1
    %p32 = por %p30, %p31
    %p33 = scmp.ne.s32.totalorder %s25, %s28
    %p34 = scmp.eq.s32.totalorder %s15, 0
    %p35 = por %p33, %p34
    %p36 = scmp.ne.s32.totalorder %s25, %s28
    %p37 = scmp.eq.s32.totalorder %s20, 1
    %p38 = por %p36, %p37
    %p39 = scmp.ne.s32.totalorder %s28, %s29
    %p40 = scmp.eq.s32.totalorder %s20, 0
    %p41 = por %p39, %p40
    %p42 = scmp.ne.s32.totalorder %s28, %s29
    %p43 = scmp.eq.s32.totalorder %s21, 1
    %p44 = por %p42, %p43
    %p46 = scmp.ne.s32.totalorder %s29, %s45
    %p47 = scmp.eq.s32.totalorder %s21, 0
    %p48 = por %p46, %p47
    %s50 = sadd.s32 %s49, 1
    %p53 = scmp.eq.s32.totalorder %s15, 1
    %p54 = scmp.ne.s32.totalorder %s49, %s51
    %p55 = scmp.eq.s32.totalorder %s15, 0
    %p56 = por %p54, %p55
    %p57 = scmp.ne.s32.totalorder %s49, %s51
    %p58 = scmp.eq.s32.totalorder %s20, 1
    %p59 = por %p57, %p58
    %p60 = scmp.ne.s32.totalorder %s51, %s52
    %p61 = scmp.eq.s32.totalorder %s20, 0
    %p62 = por %p60, %p61
    %p63 = scmp.ne.s32.totalorder %s51, %s52
    %p64 = scmp.eq.s32.totalorder %s21, 1
    %p65 = por %p63, %p64
    %p67 = scmp.ne.s32.totalorder %s52, %s66
    %p68 = scmp.eq.s32.totalorder %s21, 0
    %p69 = por %p67, %p68
    %s71 = sadd.s32 %s70, 1
    %p74 = scmp.eq.s32.totalorder %s15, 1
    %p75 = scmp.ne.s32.totalorder %s70, %s72
    %p76 = scmp.eq.s32.totalorder %s15, 0
    %p77 = por %p75, %p76
    %p78 = scmp.ne.s32.totalorder %s70, %s72
    %p79 = scmp.eq.s32.totalorder %s20, 1
    %p80 = por %p78, %p79
    %p81 = scmp.ne.s32.totalorder %s72, %s73
    %p82 = scmp.eq.s32.totalorder %s20, 0
    %p83 = por %p81, %p82
    %p84 = scmp.ne.s32.totalorder %s72, %s73
    %p85 = scmp.eq.s32.totalorder %s21, 1
    %p86 = por %p84, %p85
    %p88 = scmp.ne.s32.totalorder %s73, %s87
    %p89 = scmp.eq.s32.totalorder %s21, 0
    %p90 = por %p88, %p89
    %s92 = sadd.s32 %s91, 1
    %p95 = scmp.eq.s32.totalorder %s15, 1
    %p96 = scmp.ne.s32.totalorder %s91, %s93
    %p97 = scmp.eq.s32.totalorder %s15, 0
    %p98 = por %p96, %p97
    %p99 = scmp.ne.s32.totalorder %s91, %s93
    %p100 = scmp.eq.s32.totalorder %s20, 1
    %p101 = por %p99, %p100
    %p102 = scmp.ne.s32.totalorder %s93, %s94
    %p103 = scmp.eq.s32.totalorder %s20, 0
    %p104 = por %p102, %p103
    %p105 = scmp.ne.s32.totalorder %s93, %s94
    %p106 = scmp.eq.s32.totalorder %s21, 1
    %p107 = por %p105, %p106
    %p109 = scmp.ne.s32.totalorder %s94, %s108
    %p110 = scmp.eq.s32.totalorder %s21, 0
    %p111 = por %p109, %p110
    %s113 = sadd.s32 %s112, 1
    %p116 = scmp.eq.s32.totalorder %s15, 1
    %p117 = scmp.ne.s32.totalorder %s112, %s114
    %p118 = scmp.eq.s32.totalorder %s15, 0
    %p119 = por %p117, %p118
    %p120 = scmp.ne.s32.totalorder %s112, %s114
    %p121 = scmp.eq.s32.totalorder %s20, 1
    %p122 = por %p120, %p121
    %p123 = scmp.ne.s32.totalorder %s114, %s115
    %p124 = scmp.eq.s32.totalorder %s20, 0
    %p125 = por %p123, %p124
    %p126 = scmp.ne.s32.totalorder %s114, %s115
    %p127 = scmp.eq.s32.totalorder %s21, 1
    %p128 = por %p126, %p127
    %p130 = scmp.ne.s32.totalorder %s115, %s129
    %p131 = scmp.eq.s32.totalorder %s21, 0
    %p132 = por %p130, %p131
    %s134 = sadd.s32 %s133, 1
    %p137 = scmp.eq.s32.totalorder %s15, 1
    %p138 = scmp.ne.s32.totalorder %s133, %s135
    %p139 = scmp.eq.s32.totalorder %s15, 0
    %p140 = por %p138, %p139
    %p141 = scmp.ne.s32.totalorder %s133, %s135
    %p142 = scmp.eq.s32.totalorder %s20, 1
    %p143 = por %p141, %p142
    %p144 = scmp.ne.s32.totalorder %s135, %s136
    %p145 = scmp.eq.s32.totalorder %s20, 0
    %p146 = por %p144, %p145
    %p147 = scmp.ne.s32.totalorder %s135, %s136
    %p148 = scmp.eq.s32.totalorder %s21, 1
    %p149 = por %p147, %p148
    %p151 = scmp.ne.s32.totalorder %s136, %s150
    %p152 = scmp.eq.s32.totalorder %s21, 0
    %p153 = por %p151, %p152
    %s155 = sadd.s32 %s154, 1
    %p158 = scmp.eq.s32.totalorder %s15, 1
    %p159 = scmp.ne.s32.totalorder %s154, %s156
    %p160 = scmp.eq.s32.totalorder %s15, 0
    %p161 = por %p159, %p160
    %p162 = scmp.ne.s32.totalorder %s154, %s156
    %p163 = scmp.eq.s32.totalorder %s20, 1
    %p164 = por %p162, %p163
    %p165 = scmp.ne.s32.totalorder %s156, %s157
    %p166 = scmp.eq.s32.totalorder %s20, 0
    %p167 = por %p165, %p166
    %p168 = scmp.ne.s32.totalorder %s156, %s157
    %p169 = scmp.eq.s32.totalorder %s21, 1
    %p170 = por %p168, %p169
    %p172 = scmp.ne.s32.totalorder %s157, %s171
    %p173 = scmp.eq.s32.totalorder %s21, 0
    %p174 = por %p172, %p173
    %s176 = sadd.s32 %s175, 1
    %p179 = scmp.eq.s32.totalorder %s15, 1
    %p180 = scmp.ne.s32.totalorder %s175, %s177
    %p181 = scmp.eq.s32.totalorder %s15, 0
    %p182 = por %p180, %p181
    %p183 = scmp.ne.s32.totalorder %s175, %s177
    %p184 = scmp.eq.s32.totalorder %s20, 1
    %p185 = por %p183, %p184
    %p186 = scmp.ne.s32.totalorder %s177, %s178
    %p187 = scmp.eq.s32.totalorder %s20, 0
    %p188 = por %p186, %p187
    %p189 = scmp.ne.s32.totalorder %s177, %s178
    %p190 = scmp.eq.s32.totalorder %s21, 1
    %p191 = por %p189, %p190
    %p193 = scmp.ne.s32.totalorder %s178, %s192
    %p194 = scmp.eq.s32.totalorder %s21, 0
    %p195 = por %p193, %p194
    %s197 = sadd.s32 %s196, 1
    %p200 = scmp.eq.s32.totalorder %s15, 1
    %p201 = scmp.ne.s32.totalorder %s196, %s198
    %p202 = scmp.eq.s32.totalorder %s15, 0
    %p203 = por %p201, %p202
    %p204 = scmp.ne.s32.totalorder %s196, %s198
    %p205 = scmp.eq.s32.totalorder %s20, 1
    %p206 = por %p204, %p205
    %p207 = scmp.ne.s32.totalorder %s198, %s199
    %p208 = scmp.eq.s32.totalorder %s20, 0
    %p209 = por %p207, %p208
    %p210 = scmp.ne.s32.totalorder %s198, %s199
    %p211 = scmp.eq.s32.totalorder %s21, 1
    %p212 = por %p210, %p211
    %p214 = scmp.ne.s32.totalorder %s199, %s213
    %p215 = scmp.eq.s32.totalorder %s21, 0
    %p216 = por %p214, %p215
    %s217 = ssub.s32 %s15, %s22
    %p218 = scmp.eq.s32.totalorder %s217, 0
    %s220 = sadd.s32 %s219, 1
    %s221 = scalar_select %p218, %s219, %s220
    %p224 = pneg %p218
    %p225 = scmp.eq.s32.totalorder %s15, 1
    %p226 = por %p224, %p225
    %p227 = scmp.ne.s32.totalorder %s219, %s222
    %p228 = scmp.eq.s32.totalorder %s15, 0
    %p229 = por %p227, %p228
    %p230 = scmp.ne.s32.totalorder %s219, %s222
    %p231 = scmp.eq.s32.totalorder %s20, 1
    %p232 = por %p230, %p231
    %p233 = scmp.ne.s32.totalorder %s222, %s223
    %p234 = scmp.eq.s32.totalorder %s20, 0
    %p235 = por %p233, %p234
    %p236 = scmp.ne.s32.totalorder %s222, %s223
    %p237 = scmp.eq.s32.totalorder %s21, 1
    %p238 = por %p236, %p237
    %p240 = scmp.ne.s32.totalorder %s223, %s239
    %p241 = scmp.eq.s32.totalorder %s21, 0
    %p242 = por %p240, %p241
    %p243 = scmp.le.s32.totalorder 1, %s15
    %p244 = scmp.lt.s32.totalorder %s15, 3
    %p245 = pnand %p243, %p244
    %p246 = pneg %p245
    // Predicated region
    $region9: #{_lambda_.12} parent=5 // pred_check
      _
    $region10: #{_lambda_.12} parent=5 // pred_check_branch
      %248 = sbr.rel (%p245) target = $region12
    $region11: #{_lambda_.12} parent=5 // pred_region
      %s249 = ssub.s32 %s15, 1
      // Predicated region
      $region13: #{_lambda_.12} parent=11 // pred_check
        %p250 = pneg %p62
      $region14: #{_lambda_.12} parent=11 // pred_check_branch
        %252 = sbr.rel (%p250) target = $region16
      $region15: #{_lambda_.12} parent=11 // pred_region
        _
      $region16: #{_lambda_.12} parent=11 // pred_fallthru
        _
      // Predicated region
      $region17: #{_lambda_.12} parent=11 // pred_check
        %p253 = pneg %p83
      $region18: #{_lambda_.12} parent=11 // pred_check_branch
        %255 = sbr.rel (%p253) target = $region20
      $region19: #{_lambda_.12} parent=11 // pred_region
        _
      $region20: #{_lambda_.12} parent=11 // pred_fallthru
        _
      // Predicated region
      $region21: #{_lambda_.12} parent=11 // pred_check
        %p256 = pneg %p104
      $region22: #{_lambda_.12} parent=11 // pred_check_branch
        %258 = sbr.rel (%p256) target = $region24
      $region23: #{_lambda_.12} parent=11 // pred_region
        _
      $region24: #{_lambda_.12} parent=11 // pred_fallthru
        _
      // Predicated region
      $region25: #{_lambda_.12} parent=11 // pred_check
        %p259 = pneg %p125
      $region26: #{_lambda_.12} parent=11 // pred_check_branch
        %261 = sbr.rel (%p259) target = $region28
      $region27: #{_lambda_.12} parent=11 // pred_region
        _
      $region28: #{_lambda_.12} parent=11 // pred_fallthru
        _
      // Predicated region
      $region29: #{_lambda_.12} parent=11 // pred_check
        %p262 = pneg %p146
      $region30: #{_lambda_.12} parent=11 // pred_check_branch
        %264 = sbr.rel (%p262) target = $region32
      $region31: #{_lambda_.12} parent=11 // pred_region
        _
      $region32: #{_lambda_.12} parent=11 // pred_fallthru
        _
      // Predicated region
      $region33: #{_lambda_.12} parent=11 // pred_check
        %p265 = pneg %p167
      $region34: #{_lambda_.12} parent=11 // pred_check_branch
        %267 = sbr.rel (%p265) target = $region36
      $region35: #{_lambda_.12} parent=11 // pred_region
        _
      $region36: #{_lambda_.12} parent=11 // pred_fallthru
        _
      // Predicated region
      $region37: #{_lambda_.12} parent=11 // pred_check
        %p268 = pneg %p188
      $region38: #{_lambda_.12} parent=11 // pred_check_branch
        %270 = sbr.rel (%p268) target = $region40
      $region39: #{_lambda_.12} parent=11 // pred_region
        _
      $region40: #{_lambda_.12} parent=11 // pred_fallthru
        _
      // Predicated region
      $region41: #{_lambda_.12} parent=11 // pred_check
        %p271 = pneg %p209
      $region42: #{_lambda_.12} parent=11 // pred_check_branch
        %273 = sbr.rel (%p271) target = $region44
      $region43: #{_lambda_.12} parent=11 // pred_region
        _
      $region44: #{_lambda_.12} parent=11 // pred_fallthru
        _
    $region12: #{_lambda_.12} parent=5 // pred_fallthru
      _
    %p274 = scmp.lt.s32.totalorder %s15, 2
    // Predicated region
    $region45: #{_lambda_.12} parent=5 // pred_check
      %p275 = pneg %p274
    $region46: #{_lambda_.12} parent=5 // pred_check_branch
      %277 = sbr.rel (%p275) target = $region48
    $region47: #{_lambda_.12} parent=5 // pred_region
      // Predicated region
      $region49: #{_lambda_.12} parent=47 // pred_check
        %p278 = pneg %p35
      $region50: #{_lambda_.12} parent=47 // pred_check_branch
        %280 = sbr.rel (%p278) target = $region52
      $region51: #{_lambda_.12} parent=47 // pred_region
        %p281 = scmp.lt.s32.totalorder %s15, 1
        %s282 = scalar_select %p281, %s15, 1
        %s283 = smul.addr %s282, 4
        %s284 = scalar_lea.vmem %s0, %s283
      $region52: #{_lambda_.12} parent=47 // pred_fallthru
        _
    $region48: #{_lambda_.12} parent=5 // pred_fallthru
      _
    %p285 = scmp.le.s32.totalorder 1, %s15
    %p286 = scmp.lt.s32.totalorder %s15, 3
    %p287 = pnand %p285, %p286
    %p288 = pneg %p287
    // Predicated region
    $region53: #{_lambda_.12} parent=5 // pred_check
      _
    $region54: #{_lambda_.12} parent=5 // pred_check_branch
      %290 = sbr.rel (%p287) target = $region56
    $region55: #{_lambda_.12} parent=5 // pred_region
      %s291 = ssub.s32 %s15, 1
      %p292 = scmp.lt.s32.totalorder %s20, 1
      %s293 = scalar_select %p292, %s20, 1
      %s294 = smul.addr %s293, 4
      %s295 = scalar_lea.vmem %s0, %s294
      %p296 = pneg %p41
      %p297 = pneg %p38
      %p298 = pneg %p62
      %p299 = pneg %p59
      %p300 = pneg %p83
      %p301 = pneg %p80
      %p302 = pneg %p104
      %p303 = pneg %p101
      %p304 = pneg %p125
      %p305 = pneg %p122
      %p306 = pneg %p146
      %p307 = pneg %p143
      %p308 = pneg %p167
      %p309 = pneg %p164
      %p310 = pneg %p188
      %p311 = pneg %p185
      %p312 = pneg %p209
      %p313 = pneg %p206
      %p314 = pneg %p235
      %p315 = pneg %p232
      %p316 = scmp.lt.s32.totalorder %s20, 1
      %s317 = scalar_select %p316, %s20, 1
      %s318 = smul.addr %s317, 4
      %s319 = scalar_lea.vmem %s9, %s318
      %p320 = scmp.lt.s32.totalorder %s20, 1
      %s321 = scalar_select %p320, %s20, 1
      %s322 = smul.addr %s321, 4
      %s323 = scalar_lea.vmem %s0, %s322
      %p324 = scmp.lt.s32.totalorder %s20, 1
      %s325 = scalar_select %p324, %s20, 1
      %s326 = smul.addr %s325, 4
      %s327 = scalar_lea.vmem %s9, %s326
      %v329 = vld [vmem:[%s323] sm:$0x7]
      %v330 = vunpack.c.l.bf16 %v329
      %vm331 = vcmask 258049
      %v332 = vsel %vm331, %v330, 0.0
      %333 = vadd.xlane.f32.xlu0 %v332
      %v334 = vpop.xlane.xlu0 %333
      %v335 = vrcp.pop 32.0
      %v336 = vmul.f32 %v334, %v335
      %v337 = vsub.f32 %v330, %v336
      %v338 = vmul.f32 %v337, %v337
      %v339 = vsel %vm331, %v338, 0.0
      %340 = vadd.xlane.f32.xlu0 %v339
      %v341 = vpop.xlane.xlu0 %340
      %v342 = vmul.f32 %v341, %v335
      %v343 = vadd.f32 %v342, 1e-05
      %v344 = vrsqrt.pop %v343
      %v345 = vmul.f32 %v337, %v344
      %v346 = vld [vmem:[%s1] sm:$0x1]
      %v348 = vlaneseq
      %v349 = vshrl.u32 %v348, 7
      %v350 = vsub.s32 0, %v349
      %v351 = vrot.slane %v346, %v350
      %v353 = vmul.f32 %v345, %v351
      %v354 = vld [vmem:[%s2] sm:$0x1]
      %v356 = vlaneseq
      %v357 = vshrl.u32 %v356, 7
      %v358 = vsub.s32 0, %v357
      %v359 = vrot.slane %v354, %v358
      %v361 = vadd.f32 %v353, %v359
      %v362 = vpack.c.bf16 %v361, %v361
      %v363 = vld [vmem:[%s3] sm:$0xf]
      %v364 = vld [vmem:[%s3 + $0x4] sm:$0xf]
      %v365 = vld [vmem:[%s3 + $0x8] sm:$0xf]
      %v366 = vld [vmem:[%s3 + $0xc] sm:$0xf]
      %v367 = vld [vmem:[%s4] sm:$0x1]
      %v369 = vlaneseq
      %v370 = vshrl.u32 %v369, 7
      %v371 = vsub.s32 0, %v370
      %v372 = vrot.slane %v367, %v371
      %v375 = vshrl.u32 %v362, 16
      %v377 = vshll.u32 %v362, 16
      %v379 = vrot.slane %v377, 1
      %v380 = vor.u32 %v375, %v379
      %v385 = vunpack.c.l.b16 %v363
      %v386 = vunpack.c.l.b16 %v364
      %v387 = vunpack.c.l.b16 %v365
      %v388 = vunpack.c.l.b16 %v366
      %v389 = vpack.c.b16 %v386, %v385
      %v390 = vpack.c.b16 %v388, %v387
      %vm393 = vcmask 261120
      %v395 = vsel %vm393, %v380, 0
      %397 = vmatprep.subr.bf16.mxu0 0
      %398 = vmatpush1.bf16.msra.mxu0 %v389
      %399 = vmatprep.subr.bf16.mxu0 0
      %400 = vmatpush1.bf16.msra.mxu0 %v390
      %401 = vmatprep.subr.bf16.mxu0 0
      %402 = vmatpush1.bf16.msra.mxu0 0
      %403 = vmatprep.subr.bf16.mxu0 0
      %404 = vmatpush1.bf16.msra.mxu0 0
      %405 = vmatprep.subr.bf16.mxu0 0
      %406 = vmatpush1.bf16.msra.mxu0 0
      %407 = vmatprep.subr.bf16.mxu0 0
      %408 = vmatpush1.bf16.msra.mxu0 0
      %409 = vmatprep.subr.bf16.mxu0 0
      %410 = vmatpush1.bf16.msra.mxu0 0
      %411 = vmatprep.subr.bf16.mxu0 0
      %412 = vmatpush1.bf16.msra.mxu0 0
      %413 = vmatprep.subr.bf16.mxu0 0
      %414 = vmatpush1.bf16.msra.mxu0 0
      %415 = vmatprep.subr.bf16.mxu0 0
      %416 = vmatpush1.bf16.msra.mxu0 0
      %417 = vmatprep.subr.bf16.mxu0 0
      %418 = vmatpush1.bf16.msra.mxu0 0
      %419 = vmatprep.subr.bf16.mxu0 0
      %420 = vmatpush1.bf16.msra.mxu0 0
      %421 = vmatprep.subr.bf16.mxu0 0
      %422 = vmatpush1.bf16.msra.mxu0 0
      %423 = vmatprep.subr.bf16.mxu0 0
      %424 = vmatpush1.bf16.msra.mxu0 0
      %425 = vmatprep.subr.bf16.mxu0 0
      %426 = vmatpush1.bf16.msra.mxu0 0
      %427 = vmatprep.subr.bf16.mxu0 0
      %428 = vmatpush1.bf16.msra.mxu0 0
      %429 = vmatprep.mubr.bf16.mxu0 0
      %430 = vmatmul.mubr.bf16.gmra.mrb[0].mxu0 %v395
      %v431 = vpop.f32.mrb[0].mxu0
      %v432 = vadd.f32 %v372, %v431
      %v433 = vpop.f32.mrb[0].mxu0
      %v434 = vpop.f32.mrb[0].mxu0
      %v435 = vpop.f32.mrb[0].mxu0
      %436 = vdwg.mxu0
      %v437 = vmul.f32 %v432, %v432
      %v438 = vmul.f32 %v432, %v437
      %v439 = vmul.f32 %v438, 0.044715
      %v440 = vadd.f32 %v432, %v439
      %v441 = vmul.f32 %v440, 0.7978846
      %v442 = vtanh.pop %v441
      %v443 = vadd.f32 %v442, 1.0
      %v444 = vmul.f32 %v443, 0.5
      %v445 = vmul.f32 %v432, %v444
      %446 = vst [vmem:[#allocation2] sm:$0xf] 0.0
      %447 = vst [vmem:[#allocation2 + $0x4] sm:$0xf] 0.0
      %448 = vst [vmem:[#allocation2 + $0x8] sm:$0xf] 0.0
      %449 = vst [vmem:[#allocation2 + $0xc] sm:$0xf] 0.0
      %s450 = scalar_lea.vmem [#allocation2], 4
      %451 = vst [vmem:[%s450 + $0x1] sm:$0x3] %v445
      %s452 = scalar_lea.vmem [#allocation2], 8
      %453 = vst [vmem:[%s452 - $0x1] sm:$0xc] %v445
      %v454 = vld [vmem:[%s5] sm:$0xff]
      %v455 = vld [vmem:[%s5 + $0x8] sm:$0x1]
      %v456 = vld [vmem:[%s6] sm:$0x1]
      %v457 = vld [vmem:[#allocation2] sm:$0xf]
      %v458 = vlaneseq
      %v459 = vshrl.u32 %v458, 7
      %v460 = vsub.s32 0, %v459
      %v461 = vrot.slane %v454, %v460
      %v462 = vmul.f32 %v457, %v461
      %v463 = vadd.f32 %v462, 0.0
      %v464 = vlaneseq
      %v465 = vshrl.u32 %v464, 7
      %v466 = vsub.s32 1, %v465
      %v467 = vrot.slane %v454, %v466
      %v468 = vmul.f32 %v457, %v467
      %v470 = vrot.slane %v468, 1
      %v472 = vadd.f32 %v463, %v470
      %v473 = vlaneseq
      %v474 = vshrl.u32 %v473, 7
      %v475 = vsub.s32 2, %v474
      %v476 = vrot.slane %v454, %v475
      %v477 = vmul.f32 %v457, %v476
      %v479 = vrot.slane %v477, 2
      %v481 = vadd.f32 %v472, %v479
      %v482 = vld [vmem:[%s450] sm:$0xf]
      %v483 = vlaneseq
      %v484 = vshrl.u32 %v483, 7
      %v485 = vsub.s32 3, %v484
      %v486 = vrot.slane %v454, %v485
      %v487 = vmul.f32 %v482, %v486
      %v488 = vadd.f32 %v481, %v487
      %v489 = vlaneseq
      %v490 = vshrl.u32 %v489, 7
      %v491 = vsub.s32 4, %v490
      %v492 = vrot.slane %v454, %v491
      %v493 = vmul.f32 %v482, %v492
      %v495 = vrot.slane %v493, 1
      %v497 = vadd.f32 %v488, %v495
      %v498 = vlaneseq
      %v499 = vshrl.u32 %v498, 7
      %v500 = vsub.s32 5, %v499
      %v501 = vrot.slane %v454, %v500
      %v502 = vmul.f32 %v482, %v501
      %v504 = vrot.slane %v502, 2
      %v506 = vadd.f32 %v497, %v504
      %v507 = vld [vmem:[%s452] sm:$0xf]
      %v508 = vlaneseq
      %v509 = vshrl.u32 %v508, 7
      %v510 = vsub.s32 6, %v509
      %v511 = vrot.slane %v454, %v510
      %v512 = vmul.f32 %v507, %v511
      %v513 = vadd.f32 %v506, %v512
      %v514 = vlaneseq
      %v515 = vshrl.u32 %v514, 7
      %v516 = vsub.s32 7, %v515
      %v517 = vrot.slane %v454, %v516
      %v518 = vmul.f32 %v507, %v517
      %v520 = vrot.slane %v518, 1
      %v522 = vadd.f32 %v513, %v520
      %v523 = vlaneseq
      %v524 = vshrl.u32 %v523, 7
      %v525 = vsub.s32 0, %v524
      %v526 = vrot.slane %v455, %v525
      %v527 = vmul.f32 %v507, %v526
      %v529 = vrot.slane %v527, 2
      %v531 = vadd.f32 %v522, %v529
      %v533 = vlaneseq
      %v534 = vshrl.u32 %v533, 7
      %v535 = vsub.s32 0, %v534
      %v536 = vrot.slane %v456, %v535
      %v538 = vadd.f32 %v531, %v536
      %v539 = vmul.f32 %v538, %v538
      %v540 = vmul.f32 %v538, %v539
      %v541 = vmul.f32 %v540, 0.044715
      %v542 = vadd.f32 %v538, %v541
      %v543 = vmul.f32 %v542, 0.7978846
      %v544 = vtanh.pop %v543
      %v545 = vadd.f32 %v544, 1.0
      %v546 = vmul.f32 %v545, 0.5
      %v547 = vmul.f32 %v538, %v546
      %v548 = vmul.f32 %v482, %v461
      %v549 = vadd.f32 %v548, 0.0
      %v550 = vmul.f32 %v482, %v467
      %v552 = vrot.slane %v550, 1
      %v554 = vadd.f32 %v549, %v552
      %v555 = vmul.f32 %v482, %v476
      %v557 = vrot.slane %v555, 2
      %v559 = vadd.f32 %v554, %v557
      %v560 = vmul.f32 %v507, %v486
      %v561 = vadd.f32 %v559, %v560
      %v562 = vmul.f32 %v507, %v492
      %v564 = vrot.slane %v562, 1
      %v566 = vadd.f32 %v561, %v564
      %v567 = vmul.f32 %v507, %v501
      %v569 = vrot.slane %v567, 2
      %v571 = vadd.f32 %v566, %v569
      %s572 = scalar_lea.vmem [#allocation2], 12
      %v573 = vld [vmem:[%s572] sm:$0xf]
      %v574 = vmul.f32 %v573, %v511
      %v575 = vadd.f32 %v571, %v574
      %v576 = vmul.f32 %v573, %v517
      %v578 = vrot.slane %v576, 1
      %v580 = vadd.f32 %v575, %v578
      %v581 = vmul.f32 %v573, %v526
      %v583 = vrot.slane %v581, 2
      %v585 = vadd.f32 %v580, %v583
      %v586 = vadd.f32 %v585, %v536
      %v587 = vmul.f32 %v586, %v586
      %v588 = vmul.f32 %v586, %v587
      %v589 = vmul.f32 %v588, 0.044715
      %v590 = vadd.f32 %v586, %v589
      %v591 = vmul.f32 %v590, 0.7978846
      %v592 = vtanh.pop %v591
      %v593 = vadd.f32 %v592, 1.0
      %v594 = vmul.f32 %v593, 0.5
      %v595 = vmul.f32 %v586, %v594
      %v597 = vrot.slane %v595, 6
      %vm599 = vcmask 1041408
      %v600 = vsel %vm599, %v547, %v597
      %v601 = vpack.c.bf16 %v600, %v600
      %v602 = vld [vmem:[%s7] sm:$0xf]
      %v603 = vld [vmem:[%s7 + $0x4] sm:$0xf]
      %v604 = vld [vmem:[%s7 + $0x8] sm:$0xf]
      %v605 = vld [vmem:[%s7 + $0xc] sm:$0xf]
      %v606 = vld [vmem:[%s7 + $0x10] sm:$0xf]
      %v607 = vld [vmem:[%s7 + $0x14] sm:$0xf]
      %v608 = vld [vmem:[%s7 + $0x18] sm:$0xf]
      %v609 = vld [vmem:[%s7 + $0x1c] sm:$0xf]
      %v610 = vld [vmem:[%s7 + $0x20] sm:$0xf]
      %v611 = vld [vmem:[%s7 + $0x24] sm:$0xf]
      %v612 = vld [vmem:[%s7 + $0x28] sm:$0xf]
      %v613 = vld [vmem:[%s7 + $0x2c] sm:$0xf]
      %v614 = vld [vmem:[%s7 + $0x30] sm:$0xf]
      %v615 = vld [vmem:[%s7 + $0x34] sm:$0xf]
      %v616 = vld [vmem:[%s7 + $0x38] sm:$0xf]
      %v617 = vld [vmem:[%s7 + $0x3c] sm:$0xf]
      %v618 = vld [vmem:[%s8] sm:$0x1]
      %v620 = vlaneseq
      %v621 = vshrl.u32 %v620, 7
      %v622 = vsub.s32 0, %v621
      %v623 = vrot.slane %v618, %v622
      %v641 = vunpack.c.l.b16 %v602
      %v642 = vunpack.c.l.b16 %v603
      %v643 = vunpack.c.l.b16 %v604
      %v644 = vunpack.c.l.b16 %v605
      %v645 = vunpack.c.l.b16 %v606
      %v646 = vunpack.c.l.b16 %v607
      %v647 = vunpack.c.l.b16 %v608
      %v648 = vunpack.c.l.b16 %v609
      %v649 = vunpack.c.l.b16 %v610
      %v650 = vunpack.c.l.b16 %v611
      %v651 = vunpack.c.l.b16 %v612
      %v652 = vunpack.c.l.b16 %v613
      %v653 = vunpack.c.l.b16 %v614
      %v654 = vunpack.c.l.b16 %v615
      %v655 = vunpack.c.l.b16 %v616
      %v656 = vunpack.c.l.b16 %v617
      %v657 = vpack.c.b16 %v642, %v641
      %v658 = vpack.c.b16 %v644, %v643
      %v659 = vpack.c.b16 %v646, %v645
      %v660 = vpack.c.b16 %v648, %v647
      %v661 = vpack.c.b16 %v650, %v649
      %v662 = vpack.c.b16 %v652, %v651
      %v663 = vpack.c.b16 %v654, %v653
      %v664 = vpack.c.b16 %v656, %v655
      %673 = vmatprep.subr.bf16.mxu0 0
      %674 = vmatpush1.bf16.msra.mxu0 %v657
      %675 = vmatprep.subr.bf16.mxu0 0
      %676 = vmatpush1.bf16.msra.mxu0 %v658
      %677 = vmatprep.subr.bf16.mxu0 0
      %678 = vmatpush1.bf16.msra.mxu0 %v659
      %679 = vmatprep.subr.bf16.mxu0 0
      %680 = vmatpush1.bf16.msra.mxu0 %v660
      %681 = vmatprep.subr.bf16.mxu0 0
      %682 = vmatpush1.bf16.msra.mxu0 %v661
      %683 = vmatprep.subr.bf16.mxu0 0
      %684 = vmatpush1.bf16.msra.mxu0 %v662
      %685 = vmatprep.subr.bf16.mxu0 0
      %686 = vmatpush1.bf16.msra.mxu0 %v663
      %687 = vmatprep.subr.bf16.mxu0 0
      %688 = vmatpush1.bf16.msra.mxu0 %v664
      %689 = vmatprep.subr.bf16.mxu0 0
      %690 = vmatpush1.bf16.msra.mxu0 0
      %691 = vmatprep.subr.bf16.mxu0 0
      %692 = vmatpush1.bf16.msra.mxu0 0
      %693 = vmatprep.subr.bf16.mxu0 0
      %694 = vmatpush1.bf16.msra.mxu0 0
      %695 = vmatprep.subr.bf16.mxu0 0
      %696 = vmatpush1.bf16.msra.mxu0 0
      %697 = vmatprep.subr.bf16.mxu0 0
      %698 = vmatpush1.bf16.msra.mxu0 0
      %699 = vmatprep.subr.bf16.mxu0 0
      %700 = vmatpush1.bf16.msra.mxu0 0
      %701 = vmatprep.subr.bf16.mxu0 0
      %702 = vmatpush1.bf16.msra.mxu0 0
      %703 = vmatprep.subr.bf16.mxu0 0
      %704 = vmatpush1.bf16.msra.mxu0 0
      %705 = vmatprep.mubr.bf16.mxu0 0
      %706 = vmatmul.mubr.bf16.gmra.mrb[0].mxu0 %v601
      %v707 = vpop.f32.mrb[0].mxu0
      %v708 = vadd.f32 %v623, %v707
      %v709 = vpop.f32.mrb[0].mxu0
      %v710 = vpop.f32.mrb[0].mxu0
      %v711 = vpop.f32.mrb[0].mxu0
      %712 = vdwg.mxu0
      %v713 = vmul.f32 %v708, %v708
      %v714 = vmul.f32 %v708, %v713
      %v715 = vmul.f32 %v714, 0.044715
      %v716 = vadd.f32 %v708, %v715
      %v717 = vmul.f32 %v716, 0.7978846
      %v718 = vtanh.pop %v717
      %v719 = vadd.f32 %v718, 1.0
      %v720 = vmul.f32 %v719, 0.5
      %v721 = vmul.f32 %v708, %v720
      %v723 = vrot.slane %v330, 1
      %v725 = vadd.f32 %v721, %v723
      %v727 = vrot.slane %v725, 7
      %vm729 = vcmask 1040384
      %v730 = vsel %vm729, %v330, %v727
      %v731 = vpack.c.bf16 %v730, %v730
      %vm732 = vcmask 256000
      %vm733 = vsmask.f32 2304
      %vm734 = vmand %vm732, %vm733
      %v735 = vld [vmem:[%s327] sm:$0x7]
      %v736 = vsel %vm734, %v731, %v735
      %737 = vst [vmem:[%s327] sm:$0x7] %v736
      %p738 = scmp.lt.s32.totalorder %s20, 1
      %s739 = scalar_select %p738, %s20, 1
      %s740 = smul.addr %s739, 4
      %s741 = scalar_lea.vmem %s9, %s740
      // Predicated region
      $region57: #{_lambda_.12} parent=55 // pred_check
        %p742 = pneg %p232
      $region58: #{_lambda_.12} parent=55 // pred_check_branch
        %744 = sbr.rel (%p742) target = $region60
      $region59: #{_lambda_.12} parent=55 // pred_region
        _
      $region60: #{_lambda_.12} parent=55 // pred_fallthru
        _
    $region56: #{_lambda_.12} parent=5 // pred_fallthru
      _
    %p745 = scmp.le.s32.totalorder 2, %s15
    // Predicated region
    $region61: #{_lambda_.12} parent=5 // pred_check
      %p746 = pneg %p745
    $region62: #{_lambda_.12} parent=5 // pred_check_branch
      %748 = sbr.rel (%p746) target = $region64
    $region63: #{_lambda_.12} parent=5 // pred_region
      %s749 = ssub.s32 %s15, 2
      // Predicated region
      $region65: #{_lambda_.12} parent=63 // pred_check
        %p750 = pneg %p238
      $region66: #{_lambda_.12} parent=63 // pred_check_branch
        %752 = sbr.rel (%p750) target = $region68
      $region67: #{_lambda_.12} parent=63 // pred_region
        %p753 = scmp.lt.s32.totalorder %s21, 1
        %s754 = scalar_select %p753, %s21, 1
        %s755 = smul.addr %s754, 4
        %s756 = scalar_lea.vmem %s9, %s755
      $region68: #{_lambda_.12} parent=63 // pred_fallthru
        _
    $region64: #{_lambda_.12} parent=5 // pred_fallthru
      _
  $region6: #{_lambda_.12} parent=0 // loop_footer
    %s19 = sadd.s32 1, %s15
  $region7: #{_lambda_.12} parent=0 // loop_footer_branch
    %14 = sbr.rel target = $region3
  $region8: #{_lambda_.12} parent=0 // loop_exit
    _

</llo_original>
